<compile_context>
chip_gen: v6e
topology: v6e:2x2x1
jax: 0.10.0
libtpu: 0.0.40
codegen_flags: <defaults>
</compile_context>

<pallas_src>
import functools

import jax
import jax.numpy as jnp
from jax.experimental import pallas as pl
from jax.experimental.pallas import tpu as pltpu


HALO = 2      # 5x5 depthwise conv with padding = 2
KSIZE = 5


# ----------------------------- the fused kernel -----------------------------

def _reslayer_kernel(x_ref, w1_ref, b1_ref, dw_ref, b2_ref, w3_ref, b3_ref,
                     o_ref, y1_ref, *, H, W):
    cin = x_ref.shape[3]
    cmid = w1_ref.shape[1]

    # Zero the scratch every step (cheap VMEM stores); the halo ring is never
    # written by the interior store, so this is what provides the depthwise
    # conv's zero padding.  (Not gated on program_id==0: with megacore each core
    # owns its own scratch and its own slice of the batch grid.)
    y1_ref[...] = jnp.zeros_like(y1_ref)

    x = x_ref[0]                                            # (H, W, cin) f32

    def bias_silu(y, b_ref):
        y = y + b_ref[...]                                  # BN scale already in weights
        return y * jax.nn.sigmoid(y)                        # SiLU (EUP), f32

    # ---- layer1: 1x1 conv (bf16 MXU, f32 accum) + bias + SiLU on H*W rows only ----
    a1 = x.reshape(H * W, cin).astype(jnp.bfloat16)
    y1 = jnp.dot(a1, w1_ref[...], preferred_element_type=jnp.float32)
    y1 = bias_silu(y1, b1_ref).reshape(H, W, cmid)

    # Store into the zero-haloed scratch interior (row offset is on the untiled
    # leading dim; column slice 2:2+W is the only realigning store).
    y1_ref[HALO:HALO + H, HALO:HALO + W, :] = y1

    # ---- layer2_d: 5x5 depthwise conv (VPU) + bias + SiLU ----
    # Taps are read from the scratch ref; accumulate into per-row partials so
    # live values stay bounded (row partial + running sum + one tap).
    dw = dw_ref[...]                                        # (25, 1, cmid), BN-folded
    acc = None
    for kh in range(KSIZE):
        part = None
        for kw in range(KSIZE):
            tap = y1_ref[kh:kh + H, kw:kw + W, :] * dw[kh * KSIZE + kw]
            part = tap if part is None else part + tap
        acc = part if acc is None else acc + part
    y2 = bias_silu(acc, b2_ref)                             # (H, W, cmid) f32

    # ---- layer2_p: 1x1 conv (bf16 MXU) + bias + SiLU, residual add fused ----
    a3 = y2.reshape(H * W, cmid).astype(jnp.bfloat16)
    y3 = jnp.dot(a3, w3_ref[...], preferred_element_type=jnp.float32)
    y3 = bias_silu(y3, b3_ref).reshape(H, W, cin)

    o_ref[0] = x + y3                                       # residual in f32


# ----------------------------- wrapper -----------------------------

def reslayer_forward(params, x):
    """x: (N, H, W, Cin) f32 NHWC -> (N, H, W, Cin) f32."""
    n, h, w, cin = x.shape
    cmid = cin // 2
    assert cin % 2 == 0
    ph, pw = h + 2 * HALO, w + 2 * HALO                     # haloed scratch dims

    kernel = functools.partial(_reslayer_kernel, H=h, W=w)
    return pl.pallas_call(
        kernel,
        out_shape=jax.ShapeDtypeStruct((n, h, w, cin), jnp.float32),
        grid=(n,),
        in_specs=[
            pl.BlockSpec((1, h, w, cin), lambda i: (i, 0, 0, 0)),          # x (unpadded)
            pl.BlockSpec((cin, cmid), lambda i: (0, 0)),                   # w1*s1 (bf16)
            pl.BlockSpec((1, cmid), lambda i: (0, 0)),                     # b1
            pl.BlockSpec((KSIZE * KSIZE, 1, cmid), lambda i: (0, 0, 0)),   # dw*s2
            pl.BlockSpec((1, cmid), lambda i: (0, 0)),                     # b2
            pl.BlockSpec((cmid, cin), lambda i: (0, 0)),                   # w3*s3 (bf16)
            pl.BlockSpec((1, cin), lambda i: (0, 0)),                      # b3
        ],
        out_specs=pl.BlockSpec((1, h, w, cin), lambda i: (i, 0, 0, 0)),
        scratch_shapes=[pltpu.VMEM((ph, pw, cmid), jnp.float32)],          # zero-haloed y1
        compiler_params=pltpu.CompilerParams(
            dimension_semantics=("parallel",),      # batch blocks -> both TCs on v7x
            vmem_limit_bytes=64 * 1024 * 1024),     # v5e default scoped VMEM is 16 MiB
    )(x, params["w1_bf16"], params["b1_k"], params["dw_folded"], params["b2_k"],
      params["w3_bf16"], params["b3_k"])


# ----------------------------- parameters (deterministic) -----------------------------

def _bn_params(key, c):
    # Inference-mode BatchNorm2d (eps=0.001) as per-channel scale/bias.
    k1, k2, k3, k4 = jax.random.split(key, 4)
    eps = 1e-3
    gamma = 1.0 + 0.1 * jax.random.normal(k1, (c,), jnp.float32)
    beta = 0.1 * jax.random.normal(k2, (c,), jnp.float32)
    rmean = 0.1 * jax.random.normal(k3, (c,), jnp.float32)
    rvar = 1.0 + 0.1 * jax.random.uniform(k4, (c,), jnp.float32)
    scale = gamma / jnp.sqrt(rvar + eps)
    bias = beta - rmean * scale
    return scale, bias


def make_params(key, cin):
    cmid = cin // 2
    ks = jax.random.split(key, 6)
    w1 = jax.random.normal(ks[0], (cin, cmid), jnp.float32) / jnp.sqrt(float(cin))
    dw = jax.random.normal(ks[1], (KSIZE, KSIZE, cmid), jnp.float32) / float(KSIZE)
    w3 = jax.random.normal(ks[2], (cmid, cin), jnp.float32) / jnp.sqrt(float(cmid))
    s1, b1 = _bn_params(ks[3], cmid)
    s2, b2 = _bn_params(ks[4], cmid)
    s3, b3 = _bn_params(ks[5], cin)
    return {
        # raw params (f32 reference)
        "w1": w1, "dw": dw, "w3": w3,
        "s1": s1, "b1": b1, "s2": s2, "b2": b2, "s3": s3, "b3": b3,
        # kernel params: BN scales folded into the conv weights, biases kept.
        "w1_bf16": (w1 * s1[None, :]).astype(jnp.bfloat16),
        "dw_folded": (dw * s2[None, None, :]).reshape(KSIZE * KSIZE, 1, cmid),
        "w3_bf16": (w3 * s3[None, :]).astype(jnp.bfloat16),
        "b1_k": b1.reshape(1, cmid),
        "b2_k": b2.reshape(1, cmid),
        "b3_k": b3.reshape(1, cin),
    }


# ----------------------------- pure-JAX reference -----------------------------

def reslayer_reference(params, x):
    hp = jax.lax.Precision.HIGHEST

    def bn_silu(y, s, b):
        y = y * s + b
        return y * jax.nn.sigmoid(y)

    y = jnp.einsum("nhwc,cd->nhwd", x, params["w1"], precision=hp)
    y = bn_silu(y, params["s1"], params["b1"])
    rhs = params["dw"].reshape(KSIZE, KSIZE, 1, -1)          # HWIO, groups = cmid
    y = jax.lax.conv_general_dilated(
        y, rhs, window_strides=(1, 1), padding=((HALO, HALO), (HALO, HALO)),
        dimension_numbers=("NHWC", "HWIO", "NHWC"),
        feature_group_count=y.shape[-1], precision=hp)
    y = bn_silu(y, params["s2"], params["b2"])
    y = jnp.einsum("nhwc,cd->nhwd", y, params["w3"], precision=hp)
    y = bn_silu(y, params["s3"], params["b3"])
    return x + y


# ----------------------------- main -----------------------------

if __name__ == "__main__":
    # NHWC input (2, 16, 16, 64) == PyTorch NCHW input (2, 64, 16, 16); mid_channels = 32.
    N, H, W, CIN = 2, 16, 16, 64
    key = jax.random.PRNGKey(0)
    kx, kp = jax.random.split(key)
    x = jax.random.normal(kx, (N, H, W, CIN), jnp.float32)
    params = make_params(kp, CIN)

    fwd = jax.jit(functools.partial(reslayer_forward, params))
    out = jax.block_until_ready(fwd(x))

    assert out.shape == (N, H, W, CIN), out.shape
    assert bool(jnp.all(jnp.isfinite(out)))

    ref = reslayer_reference(params, x)
    max_err = float(jnp.max(jnp.abs(out - ref)))
    assert max_err < 0.1, f"max abs error vs f32 reference: {max_err}"

    print("KERNEL_OK")
</pallas_src>

<mosaic_0001>
module attributes {stable_mosaic.version = 11 : i64} {
  func.func @_reslayer_kernel(%arg0: i32, %arg1: memref<1x16x16x64xf32, #tpu.memory_space<vmem>>, %arg2: memref<64x32xbf16, #tpu.memory_space<vmem>>, %arg3: memref<1x32xf32, #tpu.memory_space<vmem>>, %arg4: memref<25x1x32xf32, #tpu.memory_space<vmem>>, %arg5: memref<1x32xf32, #tpu.memory_space<vmem>>, %arg6: memref<32x64xbf16, #tpu.memory_space<vmem>>, %arg7: memref<1x64xf32, #tpu.memory_space<vmem>>, %arg8: memref<1x16x16x64xf32, #tpu.memory_space<vmem>>, %arg9: memref<20x20x32xf32, #tpu.memory_space<vmem>>) attributes {dimension_semantics = [#tpu.dimension_semantics<parallel>], iteration_bounds = array<i64: 2>, scalar_prefetch = 0 : i64, scratch_operands = 1 : i64, tpu.core_type = #tpu.core_type<tc>, window_params = [{transform_indices = @transform_0, window_bounds = array<i64: 1, 16, 16, 64>}, {pipeline_mode = #tpu.pipeline_mode<synchronous>, transform_indices = @transform_1, window_bounds = array<i64: 64, 32>}, {pipeline_mode = #tpu.pipeline_mode<synchronous>, transform_indices = @transform_2, window_bounds = array<i64: 1, 32>}, {pipeline_mode = #tpu.pipeline_mode<synchronous>, transform_indices = @transform_3, window_bounds = array<i64: 25, 1, 32>}, {pipeline_mode = #tpu.pipeline_mode<synchronous>, transform_indices = @transform_4, window_bounds = array<i64: 1, 32>}, {pipeline_mode = #tpu.pipeline_mode<synchronous>, transform_indices = @transform_5, window_bounds = array<i64: 32, 64>}, {pipeline_mode = #tpu.pipeline_mode<synchronous>, transform_indices = @transform_6, window_bounds = array<i64: 1, 64>}, {transform_indices = @transform_7, window_bounds = array<i64: 1, 16, 16, 64>}]} {
    %cst = arith.constant 0.000000e+00 : f32
    %0 = vector.broadcast %cst : f32 to vector<20x20x32xf32>
    %c0 = arith.constant 0 : index
    %c0_0 = arith.constant 0 : index
    %c0_1 = arith.constant 0 : index
    %1 = vector.load %arg9[%c0, %c0_0, %c0_1] : memref<20x20x32xf32, #tpu.memory_space<vmem>>, vector<20x20x32xf32>
    tpu.vector_store %arg9[%c0, %c0_0, %c0_1], %0 {strides = array<i32>} : memref<20x20x32xf32, #tpu.memory_space<vmem>>, vector<20x20x32xf32>,
    %c0_2 = arith.constant 0 : index
    %c0_3 = arith.constant 0 : index
    %c0_4 = arith.constant 0 : index
    %c0_5 = arith.constant 0 : index
    %2 = vector.load %arg1[%c0_2, %c0_3, %c0_4, %c0_5] : memref<1x16x16x64xf32, #tpu.memory_space<vmem>>, vector<1x16x16x64xf32>
    %3 = vector.shape_cast %2 : vector<1x16x16x64xf32> to vector<16x16x64xf32>
    %4 = vector.shape_cast %3 : vector<16x16x64xf32> to vector<256x64xf32>
    %5 = arith.truncf %4 : vector<256x64xf32> to vector<256x64xbf16>
    %c0_6 = arith.constant 0 : index
    %c0_7 = arith.constant 0 : index
    %6 = vector.load %arg2[%c0_6, %c0_7] : memref<64x32xbf16, #tpu.memory_space<vmem>>, vector<64x32xbf16>
    %cst_8 = arith.constant dense<0.000000e+00> : vector<256x32xf32>
    %7 = tpu.matmul %5, %6, %cst_8 {dimension_numbers = #tpu.dot_dimension_numbers<[1], [0], [0], [1], [0, 0, 1, 1], [], []>} : vector<256x64xbf16>, vector<64x32xbf16>, vector<256x32xf32> -> vector<256x32xf32>
    %c0_9 = arith.constant 0 : index
    %c0_10 = arith.constant 0 : index
    %8 = vector.load %arg3[%c0_9, %c0_10] : memref<1x32xf32, #tpu.memory_space<vmem>>, vector<1x32xf32>
    %9 = vector.broadcast %8 : vector<1x32xf32> to vector<256x32xf32>
    %10 = arith.addf %7, %9 : vector<256x32xf32>
    %11 = arith.negf %10 : vector<256x32xf32>
    %12 = math.exp %11 : vector<256x32xf32>
    %cst_11 = arith.constant 1.000000e+00 : f32
    %13 = vector.broadcast %cst_11 : f32 to vector<256x32xf32>
    %14 = arith.addf %13, %12 : vector<256x32xf32>
    %15 = arith.divf %13, %14 : vector<256x32xf32>
    %16 = arith.mulf %10, %15 : vector<256x32xf32>
    %17 = vector.shape_cast %16 : vector<256x32xf32> to vector<16x16x32xf32>
    %c2 = arith.constant 2 : index
    %c2_12 = arith.constant 2 : index
    %c0_13 = arith.constant 0 : index
    %18 = vector.load %arg9[%c2, %c2_12, %c0_13] : memref<20x20x32xf32, #tpu.memory_space<vmem>>, vector<16x16x32xf32>
    tpu.vector_store %arg9[%c2, %c2_12, %c0_13], %17 {strides = array<i32>} : memref<20x20x32xf32, #tpu.memory_space<vmem>>, vector<16x16x32xf32>,
    %c0_14 = arith.constant 0 : index
    %c0_15 = arith.constant 0 : index
    %c0_16 = arith.constant 0 : index
    %19 = vector.load %arg4[%c0_14, %c0_15, %c0_16] : memref<25x1x32xf32, #tpu.memory_space<vmem>>, vector<25x1x32xf32>
    %c0_17 = arith.constant 0 : index
    %c0_18 = arith.constant 0 : index
    %c0_19 = arith.constant 0 : index
    %20 = vector.load %arg9[%c0_17, %c0_18, %c0_19] : memref<20x20x32xf32, #tpu.memory_space<vmem>>, vector<16x16x32xf32>
    %21 = vector.extract_strided_slice %19 {offsets = [0, 0, 0], sizes = [1, 1, 32], strides = [1, 1, 1]} : vector<25x1x32xf32> to vector<1x1x32xf32>
    %22 = vector.shape_cast %21 : vector<1x1x32xf32> to vector<1x32xf32>
    %23 = vector.shape_cast %22 : vector<1x32xf32> to vector<1x1x32xf32>
    %24 = vector.broadcast %23 : vector<1x1x32xf32> to vector<16x16x32xf32>
    %25 = arith.mulf %20, %24 : vector<16x16x32xf32>
    %c0_20 = arith.constant 0 : index
    %c1 = arith.constant 1 : index
    %c0_21 = arith.constant 0 : index
    %26 = vector.load %arg9[%c0_20, %c1, %c0_21] : memref<20x20x32xf32, #tpu.memory_space<vmem>>, vector<16x16x32xf32>
    %27 = vector.extract_strided_slice %19 {offsets = [1, 0, 0], sizes = [1, 1, 32], strides = [1, 1, 1]} : vector<25x1x32xf32> to vector<1x1x32xf32>
    %28 = vector.shape_cast %27 : vector<1x1x32xf32> to vector<1x32xf32>
    %29 = vector.shape_cast %28 : vector<1x32xf32> to vector<1x1x32xf32>
    %30 = vector.broadcast %29 : vector<1x1x32xf32> to vector<16x16x32xf32>
    %31 = arith.mulf %26, %30 : vector<16x16x32xf32>
    %32 = arith.addf %25, %31 : vector<16x16x32xf32>
    %c0_22 = arith.constant 0 : index
    %c2_23 = arith.constant 2 : index
    %c0_24 = arith.constant 0 : index
    %33 = vector.load %arg9[%c0_22, %c2_23, %c0_24] : memref<20x20x32xf32, #tpu.memory_space<vmem>>, vector<16x16x32xf32>
    %34 = vector.extract_strided_slice %19 {offsets = [2, 0, 0], sizes = [1, 1, 32], strides = [1, 1, 1]} : vector<25x1x32xf32> to vector<1x1x32xf32>
    %35 = vector.shape_cast %34 : vector<1x1x32xf32> to vector<1x32xf32>
    %36 = vector.shape_cast %35 : vector<1x32xf32> to vector<1x1x32xf32>
    %37 = vector.broadcast %36 : vector<1x1x32xf32> to vector<16x16x32xf32>
    %38 = arith.mulf %33, %37 : vector<16x16x32xf32>
    %39 = arith.addf %32, %38 : vector<16x16x32xf32>
    %c0_25 = arith.constant 0 : index
    %c3 = arith.constant 3 : index
    %c0_26 = arith.constant 0 : index
    %40 = vector.load %arg9[%c0_25, %c3, %c0_26] : memref<20x20x32xf32, #tpu.memory_space<vmem>>, vector<16x16x32xf32>
    %41 = vector.extract_strided_slice %19 {offsets = [3, 0, 0], sizes = [1, 1, 32], strides = [1, 1, 1]} : vector<25x1x32xf32> to vector<1x1x32xf32>
    %42 = vector.shape_cast %41 : vector<1x1x32xf32> to vector<1x32xf32>
    %43 = vector.shape_cast %42 : vector<1x32xf32> to vector<1x1x32xf32>
    %44 = vector.broadcast %43 : vector<1x1x32xf32> to vector<16x16x32xf32>
    %45 = arith.mulf %40, %44 : vector<16x16x32xf32>
    %46 = arith.addf %39, %45 : vector<16x16x32xf32>
    %c0_27 = arith.constant 0 : index
    %c4 = arith.constant 4 : index
    %c0_28 = arith.constant 0 : index
    %47 = vector.load %arg9[%c0_27, %c4, %c0_28] : memref<20x20x32xf32, #tpu.memory_space<vmem>>, vector<16x16x32xf32>
    %48 = vector.extract_strided_slice %19 {offsets = [4, 0, 0], sizes = [1, 1, 32], strides = [1, 1, 1]} : vector<25x1x32xf32> to vector<1x1x32xf32>
    %49 = vector.shape_cast %48 : vector<1x1x32xf32> to vector<1x32xf32>
    %50 = vector.shape_cast %49 : vector<1x32xf32> to vector<1x1x32xf32>
    %51 = vector.broadcast %50 : vector<1x1x32xf32> to vector<16x16x32xf32>
    %52 = arith.mulf %47, %51 : vector<16x16x32xf32>
    %53 = arith.addf %46, %52 : vector<16x16x32xf32>
    %c1_29 = arith.constant 1 : index
    %c0_30 = arith.constant 0 : index
    %c0_31 = arith.constant 0 : index
    %54 = vector.load %arg9[%c1_29, %c0_30, %c0_31] : memref<20x20x32xf32, #tpu.memory_space<vmem>>, vector<16x16x32xf32>
    %55 = vector.extract_strided_slice %19 {offsets = [5, 0, 0], sizes = [1, 1, 32], strides = [1, 1, 1]} : vector<25x1x32xf32> to vector<1x1x32xf32>
    %56 = vector.shape_cast %55 : vector<1x1x32xf32> to vector<1x32xf32>
    %57 = vector.shape_cast %56 : vector<1x32xf32> to vector<1x1x32xf32>
    %58 = vector.broadcast %57 : vector<1x1x32xf32> to vector<16x16x32xf32>
    %59 = arith.mulf %54, %58 : vector<16x16x32xf32>
    %c1_32 = arith.constant 1 : index
    %c1_33 = arith.constant 1 : index
    %c0_34 = arith.constant 0 : index
    %60 = vector.load %arg9[%c1_32, %c1_33, %c0_34] : memref<20x20x32xf32, #tpu.memory_space<vmem>>, vector<16x16x32xf32>
    %61 = vector.extract_strided_slice %19 {offsets = [6, 0, 0], sizes = [1, 1, 32], strides = [1, 1, 1]} : vector<25x1x32xf32> to vector<1x1x32xf32>
    %62 = vector.shape_cast %61 : vector<1x1x32xf32> to vector<1x32xf32>
    %63 = vector.shape_cast %62 : vector<1x32xf32> to vector<1x1x32xf32>
    %64 = vector.broadcast %63 : vector<1x1x32xf32> to vector<16x16x32xf32>
    %65 = arith.mulf %60, %64 : vector<16x16x32xf32>
    %66 = arith.addf %59, %65 : vector<16x16x32xf32>
    %c1_35 = arith.constant 1 : index
    %c2_36 = arith.constant 2 : index
    %c0_37 = arith.constant 0 : index
    %67 = vector.load %arg9[%c1_35, %c2_36, %c0_37] : memref<20x20x32xf32, #tpu.memory_space<vmem>>, vector<16x16x32xf32>
    %68 = vector.extract_strided_slice %19 {offsets = [7, 0, 0], sizes = [1, 1, 32], strides = [1, 1, 1]} : vector<25x1x32xf32> to vector<1x1x32xf32>
    %69 = vector.shape_cast %68 : vector<1x1x32xf32> to vector<1x32xf32>
    %70 = vector.shape_cast %69 : vector<1x32xf32> to vector<1x1x32xf32>
    %71 = vector.broadcast %70 : vector<1x1x32xf32> to vector<16x16x32xf32>
    %72 = arith.mulf %67, %71 : vector<16x16x32xf32>
    %73 = arith.addf %66, %72 : vector<16x16x32xf32>
    %c1_38 = arith.constant 1 : index
    %c3_39 = arith.constant 3 : index
    %c0_40 = arith.constant 0 : index
    %74 = vector.load %arg9[%c1_38, %c3_39, %c0_40] : memref<20x20x32xf32, #tpu.memory_space<vmem>>, vector<16x16x32xf32>
    %75 = vector.extract_strided_slice %19 {offsets = [8, 0, 0], sizes = [1, 1, 32], strides = [1, 1, 1]} : vector<25x1x32xf32> to vector<1x1x32xf32>
    %76 = vector.shape_cast %75 : vector<1x1x32xf32> to vector<1x32xf32>
    %77 = vector.shape_cast %76 : vector<1x32xf32> to vector<1x1x32xf32>
    %78 = vector.broadcast %77 : vector<1x1x32xf32> to vector<16x16x32xf32>
    %79 = arith.mulf %74, %78 : vector<16x16x32xf32>
    %80 = arith.addf %73, %79 : vector<16x16x32xf32>
    %c1_41 = arith.constant 1 : index
    %c4_42 = arith.constant 4 : index
    %c0_43 = arith.constant 0 : index
    %81 = vector.load %arg9[%c1_41, %c4_42, %c0_43] : memref<20x20x32xf32, #tpu.memory_space<vmem>>, vector<16x16x32xf32>
    %82 = vector.extract_strided_slice %19 {offsets = [9, 0, 0], sizes = [1, 1, 32], strides = [1, 1, 1]} : vector<25x1x32xf32> to vector<1x1x32xf32>
    %83 = vector.shape_cast %82 : vector<1x1x32xf32> to vector<1x32xf32>
    %84 = vector.shape_cast %83 : vector<1x32xf32> to vector<1x1x32xf32>
    %85 = vector.broadcast %84 : vector<1x1x32xf32> to vector<16x16x32xf32>
    %86 = arith.mulf %81, %85 : vector<16x16x32xf32>
    %87 = arith.addf %80, %86 : vector<16x16x32xf32>
    %88 = arith.addf %53, %87 : vector<16x16x32xf32>
    %c2_44 = arith.constant 2 : index
    %c0_45 = arith.constant 0 : index
    %c0_46 = arith.constant 0 : index
    %89 = vector.load %arg9[%c2_44, %c0_45, %c0_46] : memref<20x20x32xf32, #tpu.memory_space<vmem>>, vector<16x16x32xf32>
    %90 = vector.extract_strided_slice %19 {offsets = [10, 0, 0], sizes = [1, 1, 32], strides = [1, 1, 1]} : vector<25x1x32xf32> to vector<1x1x32xf32>
    %91 = vector.shape_cast %90 : vector<1x1x32xf32> to vector<1x32xf32>
    %92 = vector.shape_cast %91 : vector<1x32xf32> to vector<1x1x32xf32>
    %93 = vector.broadcast %92 : vector<1x1x32xf32> to vector<16x16x32xf32>
    %94 = arith.mulf %89, %93 : vector<16x16x32xf32>
    %c2_47 = arith.constant 2 : index
    %c1_48 = arith.constant 1 : index
    %c0_49 = arith.constant 0 : index
    %95 = vector.load %arg9[%c2_47, %c1_48, %c0_49] : memref<20x20x32xf32, #tpu.memory_space<vmem>>, vector<16x16x32xf32>
    %96 = vector.extract_strided_slice %19 {offsets = [11, 0, 0], sizes = [1, 1, 32], strides = [1, 1, 1]} : vector<25x1x32xf32> to vector<1x1x32xf32>
    %97 = vector.shape_cast %96 : vector<1x1x32xf32> to vector<1x32xf32>
    %98 = vector.shape_cast %97 : vector<1x32xf32> to vector<1x1x32xf32>
    %99 = vector.broadcast %98 : vector<1x1x32xf32> to vector<16x16x32xf32>
    %100 = arith.mulf %95, %99 : vector<16x16x32xf32>
    %101 = arith.addf %94, %100 : vector<16x16x32xf32>
    %c2_50 = arith.constant 2 : index
    %c2_51 = arith.constant 2 : index
    %c0_52 = arith.constant 0 : index
    %102 = vector.load %arg9[%c2_50, %c2_51, %c0_52] : memref<20x20x32xf32, #tpu.memory_space<vmem>>, vector<16x16x32xf32>
    %103 = vector.extract_strided_slice %19 {offsets = [12, 0, 0], sizes = [1, 1, 32], strides = [1, 1, 1]} : vector<25x1x32xf32> to vector<1x1x32xf32>
    %104 = vector.shape_cast %103 : vector<1x1x32xf32> to vector<1x32xf32>
    %105 = vector.shape_cast %104 : vector<1x32xf32> to vector<1x1x32xf32>
    %106 = vector.broadcast %105 : vector<1x1x32xf32> to vector<16x16x32xf32>
    %107 = arith.mulf %102, %106 : vector<16x16x32xf32>
    %108 = arith.addf %101, %107 : vector<16x16x32xf32>
    %c2_53 = arith.constant 2 : index
    %c3_54 = arith.constant 3 : index
    %c0_55 = arith.constant 0 : index
    %109 = vector.load %arg9[%c2_53, %c3_54, %c0_55] : memref<20x20x32xf32, #tpu.memory_space<vmem>>, vector<16x16x32xf32>
    %110 = vector.extract_strided_slice %19 {offsets = [13, 0, 0], sizes = [1, 1, 32], strides = [1, 1, 1]} : vector<25x1x32xf32> to vector<1x1x32xf32>
    %111 = vector.shape_cast %110 : vector<1x1x32xf32> to vector<1x32xf32>
    %112 = vector.shape_cast %111 : vector<1x32xf32> to vector<1x1x32xf32>
    %113 = vector.broadcast %112 : vector<1x1x32xf32> to vector<16x16x32xf32>
    %114 = arith.mulf %109, %113 : vector<16x16x32xf32>
    %115 = arith.addf %108, %114 : vector<16x16x32xf32>
    %c2_56 = arith.constant 2 : index
    %c4_57 = arith.constant 4 : index
    %c0_58 = arith.constant 0 : index
    %116 = vector.load %arg9[%c2_56, %c4_57, %c0_58] : memref<20x20x32xf32, #tpu.memory_space<vmem>>, vector<16x16x32xf32>
    %117 = vector.extract_strided_slice %19 {offsets = [14, 0, 0], sizes = [1, 1, 32], strides = [1, 1, 1]} : vector<25x1x32xf32> to vector<1x1x32xf32>
    %118 = vector.shape_cast %117 : vector<1x1x32xf32> to vector<1x32xf32>
    %119 = vector.shape_cast %118 : vector<1x32xf32> to vector<1x1x32xf32>
    %120 = vector.broadcast %119 : vector<1x1x32xf32> to vector<16x16x32xf32>
    %121 = arith.mulf %116, %120 : vector<16x16x32xf32>
    %122 = arith.addf %115, %121 : vector<16x16x32xf32>
    %123 = arith.addf %88, %122 : vector<16x16x32xf32>
    %c3_59 = arith.constant 3 : index
    %c0_60 = arith.constant 0 : index
    %c0_61 = arith.constant 0 : index
    %124 = vector.load %arg9[%c3_59, %c0_60, %c0_61] : memref<20x20x32xf32, #tpu.memory_space<vmem>>, vector<16x16x32xf32>
    %125 = vector.extract_strided_slice %19 {offsets = [15, 0, 0], sizes = [1, 1, 32], strides = [1, 1, 1]} : vector<25x1x32xf32> to vector<1x1x32xf32>
    %126 = vector.shape_cast %125 : vector<1x1x32xf32> to vector<1x32xf32>
    %127 = vector.shape_cast %126 : vector<1x32xf32> to vector<1x1x32xf32>
    %128 = vector.broadcast %127 : vector<1x1x32xf32> to vector<16x16x32xf32>
    %129 = arith.mulf %124, %128 : vector<16x16x32xf32>
    %c3_62 = arith.constant 3 : index
    %c1_63 = arith.constant 1 : index
    %c0_64 = arith.constant 0 : index
    %130 = vector.load %arg9[%c3_62, %c1_63, %c0_64] : memref<20x20x32xf32, #tpu.memory_space<vmem>>, vector<16x16x32xf32>
    %131 = vector.extract_strided_slice %19 {offsets = [16, 0, 0], sizes = [1, 1, 32], strides = [1, 1, 1]} : vector<25x1x32xf32> to vector<1x1x32xf32>
    %132 = vector.shape_cast %131 : vector<1x1x32xf32> to vector<1x32xf32>
    %133 = vector.shape_cast %132 : vector<1x32xf32> to vector<1x1x32xf32>
    %134 = vector.broadcast %133 : vector<1x1x32xf32> to vector<16x16x32xf32>
    %135 = arith.mulf %130, %134 : vector<16x16x32xf32>
    %136 = arith.addf %129, %135 : vector<16x16x32xf32>
    %c3_65 = arith.constant 3 : index
    %c2_66 = arith.constant 2 : index
    %c0_67 = arith.constant 0 : index
    %137 = vector.load %arg9[%c3_65, %c2_66, %c0_67] : memref<20x20x32xf32, #tpu.memory_space<vmem>>, vector<16x16x32xf32>
    %138 = vector.extract_strided_slice %19 {offsets = [17, 0, 0], sizes = [1, 1, 32], strides = [1, 1, 1]} : vector<25x1x32xf32> to vector<1x1x32xf32>
    %139 = vector.shape_cast %138 : vector<1x1x32xf32> to vector<1x32xf32>
    %140 = vector.shape_cast %139 : vector<1x32xf32> to vector<1x1x32xf32>
    %141 = vector.broadcast %140 : vector<1x1x32xf32> to vector<16x16x32xf32>
    %142 = arith.mulf %137, %141 : vector<16x16x32xf32>
    %143 = arith.addf %136, %142 : vector<16x16x32xf32>
    %c3_68 = arith.constant 3 : index
    %c3_69 = arith.constant 3 : index
    %c0_70 = arith.constant 0 : index
    %144 = vector.load %arg9[%c3_68, %c3_69, %c0_70] : memref<20x20x32xf32, #tpu.memory_space<vmem>>, vector<16x16x32xf32>
    %145 = vector.extract_strided_slice %19 {offsets = [18, 0, 0], sizes = [1, 1, 32], strides = [1, 1, 1]} : vector<25x1x32xf32> to vector<1x1x32xf32>
    %146 = vector.shape_cast %145 : vector<1x1x32xf32> to vector<1x32xf32>
    %147 = vector.shape_cast %146 : vector<1x32xf32> to vector<1x1x32xf32>
    %148 = vector.broadcast %147 : vector<1x1x32xf32> to vector<16x16x32xf32>
    %149 = arith.mulf %144, %148 : vector<16x16x32xf32>
    %150 = arith.addf %143, %149 : vector<16x16x32xf32>
    %c3_71 = arith.constant 3 : index
    %c4_72 = arith.constant 4 : index
    %c0_73 = arith.constant 0 : index
    %151 = vector.load %arg9[%c3_71, %c4_72, %c0_73] : memref<20x20x32xf32, #tpu.memory_space<vmem>>, vector<16x16x32xf32>
    %152 = vector.extract_strided_slice %19 {offsets = [19, 0, 0], sizes = [1, 1, 32], strides = [1, 1, 1]} : vector<25x1x32xf32> to vector<1x1x32xf32>
    %153 = vector.shape_cast %152 : vector<1x1x32xf32> to vector<1x32xf32>
    %154 = vector.shape_cast %153 : vector<1x32xf32> to vector<1x1x32xf32>
    %155 = vector.broadcast %154 : vector<1x1x32xf32> to vector<16x16x32xf32>
    %156 = arith.mulf %151, %155 : vector<16x16x32xf32>
    %157 = arith.addf %150, %156 : vector<16x16x32xf32>
    %158 = arith.addf %123, %157 : vector<16x16x32xf32>
    %c4_74 = arith.constant 4 : index
    %c0_75 = arith.constant 0 : index
    %c0_76 = arith.constant 0 : index
    %159 = vector.load %arg9[%c4_74, %c0_75, %c0_76] : memref<20x20x32xf32, #tpu.memory_space<vmem>>, vector<16x16x32xf32>
    %160 = vector.extract_strided_slice %19 {offsets = [20, 0, 0], sizes = [1, 1, 32], strides = [1, 1, 1]} : vector<25x1x32xf32> to vector<1x1x32xf32>
    %161 = vector.shape_cast %160 : vector<1x1x32xf32> to vector<1x32xf32>
    %162 = vector.shape_cast %161 : vector<1x32xf32> to vector<1x1x32xf32>
    %163 = vector.broadcast %162 : vector<1x1x32xf32> to vector<16x16x32xf32>
    %164 = arith.mulf %159, %163 : vector<16x16x32xf32>
    %c4_77 = arith.constant 4 : index
    %c1_78 = arith.constant 1 : index
    %c0_79 = arith.constant 0 : index
    %165 = vector.load %arg9[%c4_77, %c1_78, %c0_79] : memref<20x20x32xf32, #tpu.memory_space<vmem>>, vector<16x16x32xf32>
    %166 = vector.extract_strided_slice %19 {offsets = [21, 0, 0], sizes = [1, 1, 32], strides = [1, 1, 1]} : vector<25x1x32xf32> to vector<1x1x32xf32>
    %167 = vector.shape_cast %166 : vector<1x1x32xf32> to vector<1x32xf32>
    %168 = vector.shape_cast %167 : vector<1x32xf32> to vector<1x1x32xf32>
    %169 = vector.broadcast %168 : vector<1x1x32xf32> to vector<16x16x32xf32>
    %170 = arith.mulf %165, %169 : vector<16x16x32xf32>
    %171 = arith.addf %164, %170 : vector<16x16x32xf32>
    %c4_80 = arith.constant 4 : index
    %c2_81 = arith.constant 2 : index
    %c0_82 = arith.constant 0 : index
    %172 = vector.load %arg9[%c4_80, %c2_81, %c0_82] : memref<20x20x32xf32, #tpu.memory_space<vmem>>, vector<16x16x32xf32>
    %173 = vector.extract_strided_slice %19 {offsets = [22, 0, 0], sizes = [1, 1, 32], strides = [1, 1, 1]} : vector<25x1x32xf32> to vector<1x1x32xf32>
    %174 = vector.shape_cast %173 : vector<1x1x32xf32> to vector<1x32xf32>
    %175 = vector.shape_cast %174 : vector<1x32xf32> to vector<1x1x32xf32>
    %176 = vector.broadcast %175 : vector<1x1x32xf32> to vector<16x16x32xf32>
    %177 = arith.mulf %172, %176 : vector<16x16x32xf32>
    %178 = arith.addf %171, %177 : vector<16x16x32xf32>
    %c4_83 = arith.constant 4 : index
    %c3_84 = arith.constant 3 : index
    %c0_85 = arith.constant 0 : index
    %179 = vector.load %arg9[%c4_83, %c3_84, %c0_85] : memref<20x20x32xf32, #tpu.memory_space<vmem>>, vector<16x16x32xf32>
    %180 = vector.extract_strided_slice %19 {offsets = [23, 0, 0], sizes = [1, 1, 32], strides = [1, 1, 1]} : vector<25x1x32xf32> to vector<1x1x32xf32>
    %181 = vector.shape_cast %180 : vector<1x1x32xf32> to vector<1x32xf32>
    %182 = vector.shape_cast %181 : vector<1x32xf32> to vector<1x1x32xf32>
    %183 = vector.broadcast %182 : vector<1x1x32xf32> to vector<16x16x32xf32>
    %184 = arith.mulf %179, %183 : vector<16x16x32xf32>
    %185 = arith.addf %178, %184 : vector<16x16x32xf32>
    %c4_86 = arith.constant 4 : index
    %c4_87 = arith.constant 4 : index
    %c0_88 = arith.constant 0 : index
    %186 = vector.load %arg9[%c4_86, %c4_87, %c0_88] : memref<20x20x32xf32, #tpu.memory_space<vmem>>, vector<16x16x32xf32>
    %187 = vector.extract_strided_slice %19 {offsets = [24, 0, 0], sizes = [1, 1, 32], strides = [1, 1, 1]} : vector<25x1x32xf32> to vector<1x1x32xf32>
    %188 = vector.shape_cast %187 : vector<1x1x32xf32> to vector<1x32xf32>
    %189 = vector.shape_cast %188 : vector<1x32xf32> to vector<1x1x32xf32>
    %190 = vector.broadcast %189 : vector<1x1x32xf32> to vector<16x16x32xf32>
    %191 = arith.mulf %186, %190 : vector<16x16x32xf32>
    %192 = arith.addf %185, %191 : vector<16x16x32xf32>
    %193 = arith.addf %158, %192 : vector<16x16x32xf32>
    %c0_89 = arith.constant 0 : index
    %c0_90 = arith.constant 0 : index
    %194 = vector.load %arg5[%c0_89, %c0_90] : memref<1x32xf32, #tpu.memory_space<vmem>>, vector<1x32xf32>
    %195 = vector.shape_cast %194 : vector<1x32xf32> to vector<1x1x32xf32>
    %196 = vector.broadcast %195 : vector<1x1x32xf32> to vector<16x16x32xf32>
    %197 = arith.addf %193, %196 : vector<16x16x32xf32>
    %198 = arith.negf %197 : vector<16x16x32xf32>
    %199 = math.exp %198 : vector<16x16x32xf32>
    %cst_91 = arith.constant 1.000000e+00 : f32
    %200 = vector.broadcast %cst_91 : f32 to vector<16x16x32xf32>
    %201 = arith.addf %200, %199 : vector<16x16x32xf32>
    %202 = arith.divf %200, %201 : vector<16x16x32xf32>
    %203 = arith.mulf %197, %202 : vector<16x16x32xf32>
    %204 = vector.shape_cast %203 : vector<16x16x32xf32> to vector<256x32xf32>
    %205 = arith.truncf %204 : vector<256x32xf32> to vector<256x32xbf16>
    %c0_92 = arith.constant 0 : index
    %c0_93 = arith.constant 0 : index
    %206 = vector.load %arg6[%c0_92, %c0_93] : memref<32x64xbf16, #tpu.memory_space<vmem>>, vector<32x64xbf16>
    %cst_94 = arith.constant dense<0.000000e+00> : vector<256x64xf32>
    %207 = tpu.matmul %205, %206, %cst_94 {dimension_numbers = #tpu.dot_dimension_numbers<[1], [0], [0], [1], [0, 0, 1, 1], [], []>} : vector<256x32xbf16>, vector<32x64xbf16>, vector<256x64xf32> -> vector<256x64xf32>
    %c0_95 = arith.constant 0 : index
    %c0_96 = arith.constant 0 : index
    %208 = vector.load %arg7[%c0_95, %c0_96] : memref<1x64xf32, #tpu.memory_space<vmem>>, vector<1x64xf32>
    %209 = vector.broadcast %208 : vector<1x64xf32> to vector<256x64xf32>
    %210 = arith.addf %207, %209 : vector<256x64xf32>
    %211 = arith.negf %210 : vector<256x64xf32>
    %212 = math.exp %211 : vector<256x64xf32>
    %cst_97 = arith.constant 1.000000e+00 : f32
    %213 = vector.broadcast %cst_97 : f32 to vector<256x64xf32>
    %214 = arith.addf %213, %212 : vector<256x64xf32>
    %215 = arith.divf %213, %214 : vector<256x64xf32>
    %216 = arith.mulf %210, %215 : vector<256x64xf32>
    %217 = vector.shape_cast %216 : vector<256x64xf32> to vector<16x16x64xf32>
    %218 = arith.addf %3, %217 : vector<16x16x64xf32>
    %c0_98 = arith.constant 0 : index
    %c0_99 = arith.constant 0 : index
    %c0_100 = arith.constant 0 : index
    %c0_101 = arith.constant 0 : index
    %219 = vector.load %arg8[%c0_98, %c0_99, %c0_100, %c0_101] : memref<1x16x16x64xf32, #tpu.memory_space<vmem>>, vector<1x16x16x64xf32>
    %220 = vector.shape_cast %219 : vector<1x16x16x64xf32> to vector<16x16x64xf32>
    %221 = vector.shape_cast %218 : vector<16x16x64xf32> to vector<1x16x16x64xf32>
    tpu.vector_store %arg8[%c0_98, %c0_99, %c0_100, %c0_101], %221 {strides = array<i32>} : memref<1x16x16x64xf32, #tpu.memory_space<vmem>>, vector<1x16x16x64xf32>,
    return
  }
  func.func @transform_0(%arg0: i32) -> (i32, i32, i32, i32) {
    %c0_i32 = arith.constant 0 : i32
    %c0_i32_0 = arith.constant 0 : i32
    %c0_i32_1 = arith.constant 0 : i32
    %c0_i32_2 = arith.constant 0 : i32
    return %arg0, %c0_i32, %c0_i32_0, %c0_i32_1 : i32, i32, i32, i32
  }
  func.func @transform_1(%arg0: i32) -> (i32, i32) {
    %c0_i32 = arith.constant 0 : i32
    %c0_i32_0 = arith.constant 0 : i32
    %c0_i32_1 = arith.constant 0 : i32
    return %c0_i32, %c0_i32_0 : i32, i32
  }
  func.func @transform_2(%arg0: i32) -> (i32, i32) {
    %c0_i32 = arith.constant 0 : i32
    %c0_i32_0 = arith.constant 0 : i32
    %c0_i32_1 = arith.constant 0 : i32
    return %c0_i32, %c0_i32_0 : i32, i32
  }
  func.func @transform_3(%arg0: i32) -> (i32, i32, i32) {
    %c0_i32 = arith.constant 0 : i32
    %c0_i32_0 = arith.constant 0 : i32
    %c0_i32_1 = arith.constant 0 : i32
    %c0_i32_2 = arith.constant 0 : i32
    return %c0_i32, %c0_i32_0, %c0_i32_1 : i32, i32, i32
  }
  func.func @transform_4(%arg0: i32) -> (i32, i32) {
    %c0_i32 = arith.constant 0 : i32
    %c0_i32_0 = arith.constant 0 : i32
    %c0_i32_1 = arith.constant 0 : i32
    return %c0_i32, %c0_i32_0 : i32, i32
  }
  func.func @transform_5(%arg0: i32) -> (i32, i32) {
    %c0_i32 = arith.constant 0 : i32
    %c0_i32_0 = arith.constant 0 : i32
    %c0_i32_1 = arith.constant 0 : i32
    return %c0_i32, %c0_i32_0 : i32, i32
  }
  func.func @transform_6(%arg0: i32) -> (i32, i32) {
    %c0_i32 = arith.constant 0 : i32
    %c0_i32_0 = arith.constant 0 : i32
    %c0_i32_1 = arith.constant 0 : i32
    return %c0_i32, %c0_i32_0 : i32, i32
  }
  func.func @transform_7(%arg0: i32) -> (i32, i32, i32, i32) {
    %c0_i32 = arith.constant 0 : i32
    %c0_i32_0 = arith.constant 0 : i32
    %c0_i32_1 = arith.constant 0 : i32
    %c0_i32_2 = arith.constant 0 : i32
    return %arg0, %c0_i32, %c0_i32_0, %c0_i32_1 : i32, i32, i32, i32
  }
}

</mosaic_0001>

<llo_original>
// kernel: reslayer_forward.1
$region0: #{reslayer_forward.1}
  #allocation0 [shape = 'u32[]', space=smem, size = 0x4, offset = 0x4, fixed_abs, tag = 'smem constant byte address 0x4 - core index']
  #allocation1 [shape = 'u32[144,128]{1,0:T(1,128)}', space=vmem, size = 0x12000, scoped, tag = 'internal scratch']
  #allocation2 [shape = 'f32[20,20,32]{2,1,0:T(8,128)}', space=vmem, size = 0x3c000, scoped, tag = 'scratch operand']
  %s0 = inlined_call_operand.hbm [shape: f32[2,16,16,64], index: 0, kind: input, shape index: {}]
  %s1 = inlined_call_operand.hbm [shape: bf16[64,32], index: 1, kind: input, shape index: {}]
  %s2 = inlined_call_operand.vmem [shape: f32[1,32], index: 2, kind: input, shape index: {}]
  %s3 = inlined_call_operand.hbm [shape: f32[25,1,32], index: 3, kind: input, shape index: {}]
  %s4 = inlined_call_operand.vmem [shape: f32[1,32], index: 4, kind: input, shape index: {}]
  %s5 = inlined_call_operand.hbm [shape: bf16[32,64], index: 5, kind: input, shape index: {}]
  %s6 = inlined_call_operand.vmem [shape: f32[1,64], index: 6, kind: input, shape index: {}]
  %s7 = inlined_call_operand.hbm [shape: f32[2,16,16,64], index: 7, kind: output, shape index: {}]
  %s8 = sld [smem:[#allocation0]]
  $region77: #{reslayer_forward.1} parent=0
    _
  %s10 = ssub.s32 1, %s8
  %s11 = scalar_select 0, %s10, %s8
  $region1: #{reslayer_forward.1} parent=0
    #allocation3 [shape = 'u8[262144]{0}', space=vmem, size = 0x40000, scoped, tag = 'input window, operand 0']
    #allocation4 [shape = 's32[2]{0}', space=sflag, size = 0x8, scoped, tag = 'scoped memory for reslayer_forward.1']
    #allocation5 [shape = 's32[2]{0}', space=sflag, size = 0x8, scoped, tag = 'scoped memory for reslayer_forward.1']
    #allocation6 [shape = 'u8[16384]{0}', space=vmem, size = 0x4000, scoped, tag = 'input window, operand 1, single buffered']
    #allocation7 [shape = 's32[1]{0}', space=sflag, size = 0x4, scoped, tag = 'scoped memory for reslayer_forward.1']
    #allocation8 [shape = 'u8[12800]{0}', space=vmem, size = 0x3400, scoped, tag = 'input window, operand 3, single buffered']
    #allocation9 [shape = 'u8[8192]{0}', space=vmem, size = 0x2000, scoped, tag = 'input window, operand 5, single buffered']
    #allocation10 [shape = 's32[1]{0}', space=sflag, size = 0x4, scoped, tag = 'scoped memory for reslayer_forward.1']
    #allocation11 [shape = 'u8[262144]{0}', space=vmem, size = 0x40000, scoped, tag = 'output window, operand 0']
    %12 = vsyncpa [#allocation4], 0
    %s13 = scalar_lea.sflag [#allocation4], 1
    %14 = vsyncpa %s13, 0
    %15 = vsyncpa [#allocation7], 0
    %16 = vsyncpa [#allocation10], 0
    %17 = vsyncpa [#allocation5], 0
    %s18 = scalar_lea.sflag [#allocation5], 1
    %19 = vsyncpa %s18, 0
    loop: start=0, step=1, limit=4
    $region2: #{reslayer_forward.1} parent=1 // loop_pre_header
      _
    $region3: #{reslayer_forward.1} parent=1 // loop_header
      %s21 = sphi 0, %s25
      %p22 = scmp.ge.s32.totalorder %s21, 4
      %s31 = sphi 0, %s33
      %s34 = sphi 0, %s31
      %s35 = sphi 0, %s34
      %s51 = sphi 0, %s35
      %s55 = sphi 0, %s55
      %s57 = sphi 0, %s55
      %s58 = sphi 0, %s57
      %s72 = sphi 0, %s58
      %s76 = sphi 0, %s76
      %s78 = sphi 0, %s76
      %s79 = sphi 0, %s78
      %s93 = sphi 0, %s79
      %s97 = sphi 0, %s97
      %s99 = sphi 0, %s97
      %s100 = sphi 0, %s99
      %s114 = sphi 0, %s100
      %s118 = sphi 0, %s118
      %s120 = sphi 0, %s118
      %s121 = sphi 0, %s120
      %s135 = sphi 0, %s121
      %s139 = sphi 0, %s139
      %s141 = sphi 0, %s139
      %s142 = sphi 0, %s141
      %s156 = sphi 0, %s142
      %s160 = sphi 0, %s160
      %s162 = sphi 0, %s160
      %s163 = sphi 0, %s162
      %s177 = sphi 0, %s163
      %s183 = sphi 0, %s185
      %s186 = sphi 0, %s183
      %s187 = sphi 0, %s186
      %s203 = sphi 0, %s187
    $region4: #{reslayer_forward.1} parent=1 // loop_header_branch
      %24 = sbr.rel (%p22) target = $region8
    $region5: #{reslayer_forward.1} parent=1 // loop_body
      %s26 = ssub.s32 %s21, 1
      %s27 = ssub.s32 %s21, 2
      %s28 = sadd.s32 %s21, 1
      %s29 = ssub.s32 %s21, %s28
      %p30 = scmp.eq.s32.totalorder %s29, 0
      %s32 = sadd.s32 %s31, 1
      %s33 = scalar_select %p30, %s31, %s32
      %p36 = pneg %p30
      %p37 = scmp.eq.s32.totalorder %s21, 1
      %p38 = por %p36, %p37
      %p39 = scmp.ne.s32.totalorder %s31, %s34
      %p40 = scmp.eq.s32.totalorder %s21, 0
      %p41 = por %p39, %p40
      %p42 = scmp.ne.s32.totalorder %s31, %s34
      %p43 = scmp.eq.s32.totalorder %s26, 1
      %p44 = por %p42, %p43
      %p45 = scmp.ne.s32.totalorder %s34, %s35
      %p46 = scmp.eq.s32.totalorder %s26, 0
      %p47 = por %p45, %p46
      %p48 = scmp.ne.s32.totalorder %s34, %s35
      %p49 = scmp.eq.s32.totalorder %s27, 1
      %p50 = por %p48, %p49
      %p52 = scmp.ne.s32.totalorder %s35, %s51
      %p53 = scmp.eq.s32.totalorder %s27, 0
      %p54 = por %p52, %p53
      %s56 = sadd.s32 %s55, 1
      %p59 = scmp.eq.s32.totalorder %s21, 1
      %p60 = scmp.ne.s32.totalorder %s55, %s57
      %p61 = scmp.eq.s32.totalorder %s21, 0
      %p62 = por %p60, %p61
      %p63 = scmp.ne.s32.totalorder %s55, %s57
      %p64 = scmp.eq.s32.totalorder %s26, 1
      %p65 = por %p63, %p64
      %p66 = scmp.ne.s32.totalorder %s57, %s58
      %p67 = scmp.eq.s32.totalorder %s26, 0
      %p68 = por %p66, %p67
      %p69 = scmp.ne.s32.totalorder %s57, %s58
      %p70 = scmp.eq.s32.totalorder %s27, 1
      %p71 = por %p69, %p70
      %p73 = scmp.ne.s32.totalorder %s58, %s72
      %p74 = scmp.eq.s32.totalorder %s27, 0
      %p75 = por %p73, %p74
      %s77 = sadd.s32 %s76, 1
      %p80 = scmp.eq.s32.totalorder %s21, 1
      %p81 = scmp.ne.s32.totalorder %s76, %s78
      %p82 = scmp.eq.s32.totalorder %s21, 0
      %p83 = por %p81, %p82
      %p84 = scmp.ne.s32.totalorder %s76, %s78
      %p85 = scmp.eq.s32.totalorder %s26, 1
      %p86 = por %p84, %p85
      %p87 = scmp.ne.s32.totalorder %s78, %s79
      %p88 = scmp.eq.s32.totalorder %s26, 0
      %p89 = por %p87, %p88
      %p90 = scmp.ne.s32.totalorder %s78, %s79
      %p91 = scmp.eq.s32.totalorder %s27, 1
      %p92 = por %p90, %p91
      %p94 = scmp.ne.s32.totalorder %s79, %s93
      %p95 = scmp.eq.s32.totalorder %s27, 0
      %p96 = por %p94, %p95
      %s98 = sadd.s32 %s97, 1
      %p101 = scmp.eq.s32.totalorder %s21, 1
      %p102 = scmp.ne.s32.totalorder %s97, %s99
      %p103 = scmp.eq.s32.totalorder %s21, 0
      %p104 = por %p102, %p103
      %p105 = scmp.ne.s32.totalorder %s97, %s99
      %p106 = scmp.eq.s32.totalorder %s26, 1
      %p107 = por %p105, %p106
      %p108 = scmp.ne.s32.totalorder %s99, %s100
      %p109 = scmp.eq.s32.totalorder %s26, 0
      %p110 = por %p108, %p109
      %p111 = scmp.ne.s32.totalorder %s99, %s100
      %p112 = scmp.eq.s32.totalorder %s27, 1
      %p113 = por %p111, %p112
      %p115 = scmp.ne.s32.totalorder %s100, %s114
      %p116 = scmp.eq.s32.totalorder %s27, 0
      %p117 = por %p115, %p116
      %s119 = sadd.s32 %s118, 1
      %p122 = scmp.eq.s32.totalorder %s21, 1
      %p123 = scmp.ne.s32.totalorder %s118, %s120
      %p124 = scmp.eq.s32.totalorder %s21, 0
      %p125 = por %p123, %p124
      %p126 = scmp.ne.s32.totalorder %s118, %s120
      %p127 = scmp.eq.s32.totalorder %s26, 1
      %p128 = por %p126, %p127
      %p129 = scmp.ne.s32.totalorder %s120, %s121
      %p130 = scmp.eq.s32.totalorder %s26, 0
      %p131 = por %p129, %p130
      %p132 = scmp.ne.s32.totalorder %s120, %s121
      %p133 = scmp.eq.s32.totalorder %s27, 1
      %p134 = por %p132, %p133
      %p136 = scmp.ne.s32.totalorder %s121, %s135
      %p137 = scmp.eq.s32.totalorder %s27, 0
      %p138 = por %p136, %p137
      %s140 = sadd.s32 %s139, 1
      %p143 = scmp.eq.s32.totalorder %s21, 1
      %p144 = scmp.ne.s32.totalorder %s139, %s141
      %p145 = scmp.eq.s32.totalorder %s21, 0
      %p146 = por %p144, %p145
      %p147 = scmp.ne.s32.totalorder %s139, %s141
      %p148 = scmp.eq.s32.totalorder %s26, 1
      %p149 = por %p147, %p148
      %p150 = scmp.ne.s32.totalorder %s141, %s142
      %p151 = scmp.eq.s32.totalorder %s26, 0
      %p152 = por %p150, %p151
      %p153 = scmp.ne.s32.totalorder %s141, %s142
      %p154 = scmp.eq.s32.totalorder %s27, 1
      %p155 = por %p153, %p154
      %p157 = scmp.ne.s32.totalorder %s142, %s156
      %p158 = scmp.eq.s32.totalorder %s27, 0
      %p159 = por %p157, %p158
      %s161 = sadd.s32 %s160, 1
      %p164 = scmp.eq.s32.totalorder %s21, 1
      %p165 = scmp.ne.s32.totalorder %s160, %s162
      %p166 = scmp.eq.s32.totalorder %s21, 0
      %p167 = por %p165, %p166
      %p168 = scmp.ne.s32.totalorder %s160, %s162
      %p169 = scmp.eq.s32.totalorder %s26, 1
      %p170 = por %p168, %p169
      %p171 = scmp.ne.s32.totalorder %s162, %s163
      %p172 = scmp.eq.s32.totalorder %s26, 0
      %p173 = por %p171, %p172
      %p174 = scmp.ne.s32.totalorder %s162, %s163
      %p175 = scmp.eq.s32.totalorder %s27, 1
      %p176 = por %p174, %p175
      %p178 = scmp.ne.s32.totalorder %s163, %s177
      %p179 = scmp.eq.s32.totalorder %s27, 0
      %p180 = por %p178, %p179
      %s181 = ssub.s32 %s21, %s28
      %p182 = scmp.eq.s32.totalorder %s181, 0
      %s184 = sadd.s32 %s183, 1
      %s185 = scalar_select %p182, %s183, %s184
      %p188 = pneg %p182
      %p189 = scmp.eq.s32.totalorder %s21, 1
      %p190 = por %p188, %p189
      %p191 = scmp.ne.s32.totalorder %s183, %s186
      %p192 = scmp.eq.s32.totalorder %s21, 0
      %p193 = por %p191, %p192
      %p194 = scmp.ne.s32.totalorder %s183, %s186
      %p195 = scmp.eq.s32.totalorder %s26, 1
      %p196 = por %p194, %p195
      %p197 = scmp.ne.s32.totalorder %s186, %s187
      %p198 = scmp.eq.s32.totalorder %s26, 0
      %p199 = por %p197, %p198
      %p200 = scmp.ne.s32.totalorder %s186, %s187
      %p201 = scmp.eq.s32.totalorder %s27, 1
      %p202 = por %p200, %p201
      %p204 = scmp.ne.s32.totalorder %s187, %s203
      %p205 = scmp.eq.s32.totalorder %s27, 0
      %p206 = por %p204, %p205
      %p207 = scmp.le.s32.totalorder 1, %s21
      %p208 = scmp.lt.s32.totalorder %s21, 3
      %p209 = pnand %p207, %p208
      %p210 = pneg %p209
      // Predicated region
      $region9: #{reslayer_forward.1} parent=5 // pred_check
        _
      $region10: #{reslayer_forward.1} parent=5 // pred_check_branch
        %212 = sbr.rel (%p209) target = $region12
      $region11: #{reslayer_forward.1} parent=5 // pred_region
        %s213 = ssub.s32 %s21, 1
        // Predicated region
        $region13: #{reslayer_forward.1} parent=11 // pred_check
          %p214 = pneg %p68
        $region14: #{reslayer_forward.1} parent=11 // pred_check_branch
          %216 = sbr.rel (%p214) target = $region16
        $region15: #{reslayer_forward.1} parent=11 // pred_region
          %s218 = ssub.s32 512, 512
          %219 = vsyncadd [#allocation7], %s218
          %s220 = sshll.u32 [#allocation6], 4
          %s221 = int_to_ptr.vmem [resolvable:$true] %s220
          %226 = dma.hbm_to_vmem [thread:$0]  %s1, 512, %s221, [#allocation7], 64, 64, 4
        $region16: #{reslayer_forward.1} parent=11 // pred_fallthru
          _
        // Predicated region
        $region17: #{reslayer_forward.1} parent=11 // pred_check
          %p227 = pneg %p89
        $region18: #{reslayer_forward.1} parent=11 // pred_check_branch
          %229 = sbr.rel (%p227) target = $region20
        $region19: #{reslayer_forward.1} parent=11 // pred_region
          _
        $region20: #{reslayer_forward.1} parent=11 // pred_fallthru
          _
        // Predicated region
        $region21: #{reslayer_forward.1} parent=11 // pred_check
          %p230 = pneg %p110
        $region22: #{reslayer_forward.1} parent=11 // pred_check_branch
          %232 = sbr.rel (%p230) target = $region24
        $region23: #{reslayer_forward.1} parent=11 // pred_region
          %s234 = ssub.s32 400, 400
          %235 = vsyncadd [#allocation7], %s234
          %s236 = sshll.u32 [#allocation8], 4
          %s237 = int_to_ptr.vmem [resolvable:$true] %s236
          %242 = dma.hbm_to_vmem [thread:$0]  %s3, 400, %s237, [#allocation7], 16, 16, 1
        $region24: #{reslayer_forward.1} parent=11 // pred_fallthru
          _
        // Predicated region
        $region25: #{reslayer_forward.1} parent=11 // pred_check
          %p243 = pneg %p131
        $region26: #{reslayer_forward.1} parent=11 // pred_check_branch
          %245 = sbr.rel (%p243) target = $region28
        $region27: #{reslayer_forward.1} parent=11 // pred_region
          _
        $region28: #{reslayer_forward.1} parent=11 // pred_fallthru
          _
        // Predicated region
        $region29: #{reslayer_forward.1} parent=11 // pred_check
          %p246 = pneg %p152
        $region30: #{reslayer_forward.1} parent=11 // pred_check_branch
          %248 = sbr.rel (%p246) target = $region32
        $region31: #{reslayer_forward.1} parent=11 // pred_region
          %s250 = ssub.s32 256, 256
          %251 = vsyncadd [#allocation10], %s250
          %s252 = sshll.u32 [#allocation9], 4
          %s253 = int_to_ptr.vmem [resolvable:$true] %s252
          %258 = dma.hbm_to_vmem [thread:$0]  %s5, 256, %s253, [#allocation10], 64, 64, 4
        $region32: #{reslayer_forward.1} parent=11 // pred_fallthru
          _
        // Predicated region
        $region33: #{reslayer_forward.1} parent=11 // pred_check
          %p259 = pneg %p173
        $region34: #{reslayer_forward.1} parent=11 // pred_check_branch
          %261 = sbr.rel (%p259) target = $region36
        $region35: #{reslayer_forward.1} parent=11 // pred_region
          _
        $region36: #{reslayer_forward.1} parent=11 // pred_fallthru
          _
      $region12: #{reslayer_forward.1} parent=5 // pred_fallthru
        _
      %p262 = scmp.lt.s32.totalorder %s21, 2
      // Predicated region
      $region37: #{reslayer_forward.1} parent=5 // pred_check
        %p263 = pneg %p262
      $region38: #{reslayer_forward.1} parent=5 // pred_check_branch
        %265 = sbr.rel (%p263) target = $region40
      $region39: #{reslayer_forward.1} parent=5 // pred_region
        // Predicated region
        $region41: #{reslayer_forward.1} parent=39 // pred_check
          %p266 = pneg %p41
        $region42: #{reslayer_forward.1} parent=39 // pred_check_branch
          %268 = sbr.rel (%p266) target = $region44
        $region43: #{reslayer_forward.1} parent=39 // pred_region
          %s269 = sand.u32 %s31, 1
          %s270 = scalar_lea.sflag [#allocation4], %s269
          %s271 = sand.u32 %s31, 1
          %s272 = smul.addr %s271, 256
          %s273 = scalar_lea.vmem [#allocation3], %s272
          %s275 = ssub.s32 4096, 4096
          %276 = vsyncadd %s270, %s275
          %s277 = smul.addr %s21, 32
          %s278 = smul.addr %s277, 128
          %s279 = scalar_lea.hbm %s0, %s278
          %s280 = sshll.u32 %s273, 4
          %s281 = int_to_ptr.vmem [resolvable:$true] %s280
          %286 = dma.hbm_to_vmem [thread:$0]  %s279, 4096, %s281, %s270, 128, 128, 8
        $region44: #{reslayer_forward.1} parent=39 // pred_fallthru
          _
      $region40: #{reslayer_forward.1} parent=5 // pred_fallthru
        _
      %p287 = scmp.le.s32.totalorder 1, %s21
      %p288 = scmp.lt.s32.totalorder %s21, 3
      %p289 = pnand %p287, %p288
      %p290 = pneg %p289
      // Predicated region
      $region45: #{reslayer_forward.1} parent=5 // pred_check
        _
      $region46: #{reslayer_forward.1} parent=5 // pred_check_branch
        %292 = sbr.rel (%p289) target = $region48
      $region47: #{reslayer_forward.1} parent=5 // pred_region
        %s293 = ssub.s32 %s21, 1
        %s294 = sand.u32 %s34, 1
        %s295 = scalar_lea.sflag [#allocation4], %s294
        %s296 = sand.u32 %s34, 1
        %s297 = smul.addr %s296, 256
        %s298 = scalar_lea.vmem [#allocation3], %s297
        // Predicated region
        $region49: #{reslayer_forward.1} parent=47 // pred_check
          %p299 = pneg %p47
        $region50: #{reslayer_forward.1} parent=47 // pred_check_branch
          %301 = sbr.rel (%p299) target = $region52
        $region51: #{reslayer_forward.1} parent=47 // pred_region
          %302 = dma.done %s295, 4096
        $region52: #{reslayer_forward.1} parent=47 // pred_fallthru
          _
        // Predicated region
        $region53: #{reslayer_forward.1} parent=47 // pred_check
          %p303 = pneg %p68
        $region54: #{reslayer_forward.1} parent=47 // pred_check_branch
          %305 = sbr.rel (%p303) target = $region56
        $region55: #{reslayer_forward.1} parent=47 // pred_region
          %306 = dma.done [#allocation7], 512
        $region56: #{reslayer_forward.1} parent=47 // pred_fallthru
          _
        // Predicated region
        $region57: #{reslayer_forward.1} parent=47 // pred_check
          %p307 = pneg %p110
        $region58: #{reslayer_forward.1} parent=47 // pred_check_branch
          %309 = sbr.rel (%p307) target = $region60
        $region59: #{reslayer_forward.1} parent=47 // pred_region
          %310 = dma.done [#allocation7], 400
        $region60: #{reslayer_forward.1} parent=47 // pred_fallthru
          _
        // Predicated region
        $region61: #{reslayer_forward.1} parent=47 // pred_check
          %p311 = pneg %p152
        $region62: #{reslayer_forward.1} parent=47 // pred_check_branch
          %313 = sbr.rel (%p311) target = $region64
        $region63: #{reslayer_forward.1} parent=47 // pred_region
          %314 = dma.done [#allocation10], 256
        $region64: #{reslayer_forward.1} parent=47 // pred_fallthru
          _
        %s315 = sand.u32 %s34, 1
        %s316 = scalar_lea.sflag [#allocation4], %s315
        %s317 = sand.u32 %s34, 1
        %s318 = smul.addr %s317, 256
        %s319 = scalar_lea.vmem [#allocation3], %s318
        %p320 = pneg %p47
        %p321 = pneg %p44
        %p322 = pneg %p68
        %p323 = pneg %p65
        %p324 = pneg %p89
        %p325 = pneg %p86
        %p326 = pneg %p110
        %p327 = pneg %p107
        %p328 = pneg %p131
        %p329 = pneg %p128
        %p330 = pneg %p152
        %p331 = pneg %p149
        %p332 = pneg %p173
        %p333 = pneg %p170
        %p334 = pneg %p199
        %p335 = pneg %p196
        %s336 = sand.u32 %s186, 1
        %s337 = scalar_lea.sflag [#allocation5], %s336
        %s338 = sand.u32 %s186, 1
        %s339 = smul.addr %s338, 256
        %s340 = scalar_lea.vmem [#allocation11], %s339
        %vm342 = vcmask 261120
        %343 = vst.msk [vmem:[#allocation2] sm:$0xff] %vm342, 0.0
        %344 = vst.msk [vmem:[#allocation2 + $0x8] sm:$0xff] %vm342, 0.0
        %vm345 = vcmask 257024
        %346 = vst.msk [vmem:[#allocation2 + $0x10] sm:$0xf] %vm345, 0.0
        %347 = vst.msk [vmem:[#allocation2 + $0x18] sm:$0xff] %vm342, 0.0
        %348 = vst.msk [vmem:[#allocation2 + $0x20] sm:$0xff] %vm342, 0.0
        %349 = vst.msk [vmem:[#allocation2 + $0x28] sm:$0xf] %vm345, 0.0
        %350 = vst.msk [vmem:[#allocation2 + $0x30] sm:$0xff] %vm342, 0.0
        %351 = vst.msk [vmem:[#allocation2 + $0x38] sm:$0xff] %vm342, 0.0
        %352 = vst.msk [vmem:[#allocation2 + $0x40] sm:$0xf] %vm345, 0.0
        %353 = vst.msk [vmem:[#allocation2 + $0x48] sm:$0xff] %vm342, 0.0
        %354 = vst.msk [vmem:[#allocation2 + $0x50] sm:$0xff] %vm342, 0.0
        %355 = vst.msk [vmem:[#allocation2 + $0x58] sm:$0xf] %vm345, 0.0
        %356 = vst.msk [vmem:[#allocation2 + $0x60] sm:$0xff] %vm342, 0.0
        %357 = vst.msk [vmem:[#allocation2 + $0x68] sm:$0xff] %vm342, 0.0
        %358 = vst.msk [vmem:[#allocation2 + $0x70] sm:$0xf] %vm345, 0.0
        %359 = vst.msk [vmem:[#allocation2 + $0x78] sm:$0xff] %vm342, 0.0
        %360 = vst.msk [vmem:[#allocation2 + $0x80] sm:$0xff] %vm342, 0.0
        %361 = vst.msk [vmem:[#allocation2 + $0x88] sm:$0xf] %vm345, 0.0
        %362 = vst.msk [vmem:[#allocation2 + $0x90] sm:$0xff] %vm342, 0.0
        %363 = vst.msk [vmem:[#allocation2 + $0x98] sm:$0xff] %vm342, 0.0
        %364 = vst.msk [vmem:[#allocation2 + $0xa0] sm:$0xf] %vm345, 0.0
        %365 = vst.msk [vmem:[#allocation2 + $0xa8] sm:$0xff] %vm342, 0.0
        %366 = vst.msk [vmem:[#allocation2 + $0xb0] sm:$0xff] %vm342, 0.0
        %367 = vst.msk [vmem:[#allocation2 + $0xb8] sm:$0xf] %vm345, 0.0
        %368 = vst.msk [vmem:[#allocation2 + $0xc0] sm:$0xff] %vm342, 0.0
        %369 = vst.msk [vmem:[#allocation2 + $0xc8] sm:$0xff] %vm342, 0.0
        %370 = vst.msk [vmem:[#allocation2 + $0xd0] sm:$0xf] %vm345, 0.0
        %371 = vst.msk [vmem:[#allocation2 + $0xd8] sm:$0xff] %vm342, 0.0
        %372 = vst.msk [vmem:[#allocation2 + $0xe0] sm:$0xff] %vm342, 0.0
        %373 = vst.msk [vmem:[#allocation2 + $0xe8] sm:$0xf] %vm345, 0.0
        %374 = vst.msk [vmem:[#allocation2 + $0xf0] sm:$0xff] %vm342, 0.0
        %375 = vst.msk [vmem:[#allocation2 + $0xf8] sm:$0xff] %vm342, 0.0
        %376 = vst.msk [vmem:[#allocation2 + $0x100] sm:$0xf] %vm345, 0.0
        %377 = vst.msk [vmem:[#allocation2 + $0x108] sm:$0xff] %vm342, 0.0
        %378 = vst.msk [vmem:[#allocation2 + $0x110] sm:$0xff] %vm342, 0.0
        %379 = vst.msk [vmem:[#allocation2 + $0x118] sm:$0xf] %vm345, 0.0
        %380 = vst.msk [vmem:[#allocation2 + $0x120] sm:$0xff] %vm342, 0.0
        %381 = vst.msk [vmem:[#allocation2 + $0x128] sm:$0xff] %vm342, 0.0
        %382 = vst.msk [vmem:[#allocation2 + $0x130] sm:$0xf] %vm345, 0.0
        %383 = vst.msk [vmem:[#allocation2 + $0x138] sm:$0xff] %vm342, 0.0
        %384 = vst.msk [vmem:[#allocation2 + $0x140] sm:$0xff] %vm342, 0.0
        %385 = vst.msk [vmem:[#allocation2 + $0x148] sm:$0xf] %vm345, 0.0
        %386 = vst.msk [vmem:[#allocation2 + $0x150] sm:$0xff] %vm342, 0.0
        %387 = vst.msk [vmem:[#allocation2 + $0x158] sm:$0xff] %vm342, 0.0
        %388 = vst.msk [vmem:[#allocation2 + $0x160] sm:$0xf] %vm345, 0.0
        %389 = vst.msk [vmem:[#allocation2 + $0x168] sm:$0xff] %vm342, 0.0
        %390 = vst.msk [vmem:[#allocation2 + $0x170] sm:$0xff] %vm342, 0.0
        %391 = vst.msk [vmem:[#allocation2 + $0x178] sm:$0xf] %vm345, 0.0
        %392 = vst.msk [vmem:[#allocation2 + $0x180] sm:$0xff] %vm342, 0.0
        %393 = vst.msk [vmem:[#allocation2 + $0x188] sm:$0xff] %vm342, 0.0
        %394 = vst.msk [vmem:[#allocation2 + $0x190] sm:$0xf] %vm345, 0.0
        %395 = vst.msk [vmem:[#allocation2 + $0x198] sm:$0xff] %vm342, 0.0
        %396 = vst.msk [vmem:[#allocation2 + $0x1a0] sm:$0xff] %vm342, 0.0
        %397 = vst.msk [vmem:[#allocation2 + $0x1a8] sm:$0xf] %vm345, 0.0
        %398 = vst.msk [vmem:[#allocation2 + $0x1b0] sm:$0xff] %vm342, 0.0
        %399 = vst.msk [vmem:[#allocation2 + $0x1b8] sm:$0xff] %vm342, 0.0
        %400 = vst.msk [vmem:[#allocation2 + $0x1c0] sm:$0xf] %vm345, 0.0
        %401 = vst.msk [vmem:[#allocation2 + $0x1c8] sm:$0xff] %vm342, 0.0
        %402 = vst.msk [vmem:[#allocation2 + $0x1d0] sm:$0xff] %vm342, 0.0
        %403 = vst.msk [vmem:[#allocation2 + $0x1d8] sm:$0xf] %vm345, 0.0
        %v404 = vld [vmem:[%s298] sm:$0xff]
        %v405 = vld [vmem:[%s298 + $0x8] sm:$0xff]
        %v406 = vld [vmem:[%s298 + $0x10] sm:$0xff]
        %v407 = vld [vmem:[%s298 + $0x18] sm:$0xff]
        %v408 = vld [vmem:[%s298 + $0x20] sm:$0xff]
        %v409 = vld [vmem:[%s298 + $0x28] sm:$0xff]
        %v410 = vld [vmem:[%s298 + $0x30] sm:$0xff]
        %v411 = vld [vmem:[%s298 + $0x38] sm:$0xff]
        %v412 = vld [vmem:[%s298 + $0x40] sm:$0xff]
        %v413 = vld [vmem:[%s298 + $0x48] sm:$0xff]
        %v414 = vld [vmem:[%s298 + $0x50] sm:$0xff]
        %v415 = vld [vmem:[%s298 + $0x58] sm:$0xff]
        %v416 = vld [vmem:[%s298 + $0x60] sm:$0xff]
        %v417 = vld [vmem:[%s298 + $0x68] sm:$0xff]
        %v418 = vld [vmem:[%s298 + $0x70] sm:$0xff]
        %v419 = vld [vmem:[%s298 + $0x78] sm:$0xff]
        %v420 = vld [vmem:[%s298 + $0x80] sm:$0xff]
        %v421 = vld [vmem:[%s298 + $0x88] sm:$0xff]
        %v422 = vld [vmem:[%s298 + $0x90] sm:$0xff]
        %v423 = vld [vmem:[%s298 + $0x98] sm:$0xff]
        %v424 = vld [vmem:[%s298 + $0xa0] sm:$0xff]
        %v425 = vld [vmem:[%s298 + $0xa8] sm:$0xff]
        %v426 = vld [vmem:[%s298 + $0xb0] sm:$0xff]
        %v427 = vld [vmem:[%s298 + $0xb8] sm:$0xff]
        %v428 = vld [vmem:[%s298 + $0xc0] sm:$0xff]
        %v429 = vld [vmem:[%s298 + $0xc8] sm:$0xff]
        %v430 = vld [vmem:[%s298 + $0xd0] sm:$0xff]
        %v431 = vld [vmem:[%s298 + $0xd8] sm:$0xff]
        %v432 = vld [vmem:[%s298 + $0xe0] sm:$0xff]
        %v433 = vld [vmem:[%s298 + $0xe8] sm:$0xff]
        %v434 = vld [vmem:[%s298 + $0xf0] sm:$0xff]
        %v435 = vld [vmem:[%s298 + $0xf8] sm:$0xff]
        %v436 = vpack.c.bf16 %v405, %v404
        %v437 = vpack.c.bf16 %v407, %v406
        %v438 = vpack.c.bf16 %v409, %v408
        %v439 = vpack.c.bf16 %v411, %v410
        %v440 = vpack.c.bf16 %v413, %v412
        %v441 = vpack.c.bf16 %v415, %v414
        %v442 = vpack.c.bf16 %v417, %v416
        %v443 = vpack.c.bf16 %v419, %v418
        %v444 = vpack.c.bf16 %v421, %v420
        %v445 = vpack.c.bf16 %v423, %v422
        %v446 = vpack.c.bf16 %v425, %v424
        %v447 = vpack.c.bf16 %v427, %v426
        %v448 = vpack.c.bf16 %v429, %v428
        %v449 = vpack.c.bf16 %v431, %v430
        %v450 = vpack.c.bf16 %v433, %v432
        %v451 = vpack.c.bf16 %v435, %v434
        %v452 = vld [vmem:[#allocation6] sm:$0xf]
        %v453 = vld [vmem:[#allocation6 + $0x4] sm:$0xf]
        %v454 = vld [vmem:[#allocation6 + $0x8] sm:$0xf]
        %v455 = vld [vmem:[#allocation6 + $0xc] sm:$0xf]
        %v456 = vld [vmem:[#allocation6 + $0x10] sm:$0xf]
        %v457 = vld [vmem:[#allocation6 + $0x14] sm:$0xf]
        %v458 = vld [vmem:[#allocation6 + $0x18] sm:$0xf]
        %v459 = vld [vmem:[#allocation6 + $0x1c] sm:$0xf]
        %v460 = vld [vmem:[%s2] sm:$0x1]
        %v462 = vlaneseq
        %v463 = vshrl.u32 %v462, 7
        %v464 = vsub.s32 0, %v463
        %v465 = vrot.slane %v460, %v464
        %v475 = vunpack.c.l.b16 %v452
        %v476 = vunpack.c.l.b16 %v453
        %v477 = vunpack.c.l.b16 %v454
        %v478 = vunpack.c.l.b16 %v455
        %v479 = vunpack.c.l.b16 %v456
        %v480 = vunpack.c.l.b16 %v457
        %v481 = vunpack.c.l.b16 %v458
        %v482 = vunpack.c.l.b16 %v459
        %v483 = vpack.c.b16 %v476, %v475
        %v484 = vpack.c.b16 %v478, %v477
        %v485 = vpack.c.b16 %v480, %v479
        %v486 = vpack.c.b16 %v482, %v481
        %vm491 = vcmask 523264
        %v493 = vsel %vm491, %v436, 0
        %v496 = vsel %vm491, %v437, 0
        %v499 = vsel %vm491, %v438, 0
        %v502 = vsel %vm491, %v439, 0
        %v505 = vsel %vm491, %v440, 0
        %v508 = vsel %vm491, %v441, 0
        %v511 = vsel %vm491, %v442, 0
        %v514 = vsel %vm491, %v443, 0
        %v517 = vsel %vm491, %v444, 0
        %v520 = vsel %vm491, %v445, 0
        %v523 = vsel %vm491, %v446, 0
        %v526 = vsel %vm491, %v447, 0
        %v529 = vsel %vm491, %v448, 0
        %v532 = vsel %vm491, %v449, 0
        %v535 = vsel %vm491, %v450, 0
        %v538 = vsel %vm491, %v451, 0
        %540 = vmatprep.subr.bf16.mxu0 0
        %541 = vmatpush1.bf16.msra.mxu0 0
        %542 = vmatprep.subr.bf16.mxu0 0
        %543 = vmatpush1.bf16.msra.mxu0 0
        %544 = vmatprep.subr.bf16.mxu0 0
        %545 = vmatpush1.bf16.msra.mxu0 0
        %546 = vmatprep.subr.bf16.mxu0 0
        %547 = vmatpush1.bf16.msra.mxu0 0
        %548 = vmatprep.subr.bf16.mxu0 0
        %549 = vmatpush1.bf16.msra.mxu0 %v486
        %550 = vmatprep.subr.bf16.mxu0 0
        %551 = vmatpush1.bf16.msra.mxu0 %v485
        %552 = vmatprep.subr.bf16.mxu0 0
        %553 = vmatpush1.bf16.msra.mxu0 %v484
        %554 = vmatprep.subr.bf16.mxu0 0
        %555 = vmatpush1.bf16.msra.mxu0 %v483
        %556 = vmatprep.subr.bf16.mxu0 0
        %557 = vmatpush2.bf16.msra.mxu0 0
        %558 = vmatprep.subr.bf16.mxu0 0
        %559 = vmatpush2.bf16.msra.mxu0 0
        %560 = vmatprep.subr.bf16.mxu0 0
        %561 = vmatpush2.bf16.msra.mxu0 0
        %562 = vmatprep.subr.bf16.mxu0 0
        %563 = vmatpush2.bf16.msra.mxu0 0
        %564 = vmatprep.subr.bf16.mxu0 0
        %565 = vmatpush2.bf16.msra.mxu0 0
        %566 = vmatprep.subr.bf16.mxu0 0
        %567 = vmatpush2.bf16.msra.mxu0 0
        %568 = vmatprep.subr.bf16.mxu0 0
        %569 = vmatpush2.bf16.msra.mxu0 0
        %570 = vmatprep.subr.bf16.mxu0 0
        %571 = vmatpush2.bf16.msra.mxu0 0
        %572 = vmatprep.mubr.bf16.mxu0 0
        %573 = vmatmul.mubr.bf16.gmra.mxu0 %v493
        %v574 = vpop.f32.mrf.mxu0
        %v575 = vadd.f32 %v465, %v574
        %v576 = vpop.f32.mrf.mxu0
        %v577 = vpop.f32.mrf.mxu0
        %v578 = vadd.f32 %v465, %v577
        %v579 = vpop.f32.mrf.mxu0
        %580 = vmatprep.mubr.bf16.mxu0 0
        %581 = vmatmul.mubr.bf16.gmra.mxu0 %v496
        %v582 = vpop.f32.mrf.mxu0
        %v583 = vadd.f32 %v465, %v582
        %v584 = vpop.f32.mrf.mxu0
        %v585 = vpop.f32.mrf.mxu0
        %v586 = vadd.f32 %v465, %v585
        %v587 = vpop.f32.mrf.mxu0
        %588 = vmatprep.mubr.bf16.mxu0 0
        %589 = vmatmul.mubr.bf16.gmra.mxu0 %v499
        %v590 = vpop.f32.mrf.mxu0
        %v591 = vadd.f32 %v465, %v590
        %v592 = vpop.f32.mrf.mxu0
        %v593 = vpop.f32.mrf.mxu0
        %v594 = vadd.f32 %v465, %v593
        %v595 = vpop.f32.mrf.mxu0
        %596 = vmatprep.mubr.bf16.mxu0 0
        %597 = vmatmul.mubr.bf16.gmra.mxu0 %v502
        %v598 = vpop.f32.mrf.mxu0
        %v599 = vadd.f32 %v465, %v598
        %v600 = vpop.f32.mrf.mxu0
        %v601 = vpop.f32.mrf.mxu0
        %v602 = vadd.f32 %v465, %v601
        %v603 = vpop.f32.mrf.mxu0
        %604 = vmatprep.mubr.bf16.mxu0 0
        %605 = vmatmul.mubr.bf16.gmra.mxu0 %v505
        %v606 = vpop.f32.mrf.mxu0
        %v607 = vadd.f32 %v465, %v606
        %v608 = vpop.f32.mrf.mxu0
        %v609 = vpop.f32.mrf.mxu0
        %v610 = vadd.f32 %v465, %v609
        %v611 = vpop.f32.mrf.mxu0
        %612 = vmatprep.mubr.bf16.mxu0 0
        %613 = vmatmul.mubr.bf16.gmra.mxu0 %v508
        %v614 = vpop.f32.mrf.mxu0
        %v615 = vadd.f32 %v465, %v614
        %v616 = vpop.f32.mrf.mxu0
        %v617 = vpop.f32.mrf.mxu0
        %v618 = vadd.f32 %v465, %v617
        %v619 = vpop.f32.mrf.mxu0
        %620 = vmatprep.mubr.bf16.mxu0 0
        %621 = vmatmul.mubr.bf16.gmra.mxu0 %v511
        %v622 = vpop.f32.mrf.mxu0
        %v623 = vadd.f32 %v465, %v622
        %v624 = vpop.f32.mrf.mxu0
        %v625 = vpop.f32.mrf.mxu0
        %v626 = vadd.f32 %v465, %v625
        %v627 = vpop.f32.mrf.mxu0
        %628 = vmatprep.mubr.bf16.mxu0 0
        %629 = vmatmul.mubr.bf16.gmra.mxu0 %v514
        %v630 = vpop.f32.mrf.mxu0
        %v631 = vadd.f32 %v465, %v630
        %v632 = vpop.f32.mrf.mxu0
        %v633 = vpop.f32.mrf.mxu0
        %v634 = vadd.f32 %v465, %v633
        %v635 = vpop.f32.mrf.mxu0
        %636 = vmatprep.mubr.bf16.mxu0 0
        %637 = vmatmul.mubr.bf16.gmra.mxu0 %v517
        %v638 = vpop.f32.mrf.mxu0
        %v639 = vadd.f32 %v465, %v638
        %v640 = vpop.f32.mrf.mxu0
        %v641 = vpop.f32.mrf.mxu0
        %v642 = vadd.f32 %v465, %v641
        %v643 = vpop.f32.mrf.mxu0
        %644 = vmatprep.mubr.bf16.mxu0 0
        %645 = vmatmul.mubr.bf16.gmra.mxu0 %v520
        %v646 = vpop.f32.mrf.mxu0
        %v647 = vadd.f32 %v465, %v646
        %v648 = vpop.f32.mrf.mxu0
        %v649 = vpop.f32.mrf.mxu0
        %v650 = vadd.f32 %v465, %v649
        %v651 = vpop.f32.mrf.mxu0
        %652 = vmatprep.mubr.bf16.mxu0 0
        %653 = vmatmul.mubr.bf16.gmra.mxu0 %v523
        %v654 = vpop.f32.mrf.mxu0
        %v655 = vadd.f32 %v465, %v654
        %v656 = vpop.f32.mrf.mxu0
        %v657 = vpop.f32.mrf.mxu0
        %v658 = vadd.f32 %v465, %v657
        %v659 = vpop.f32.mrf.mxu0
        %660 = vmatprep.mubr.bf16.mxu0 0
        %661 = vmatmul.mubr.bf16.gmra.mxu0 %v526
        %v662 = vpop.f32.mrf.mxu0
        %v663 = vadd.f32 %v465, %v662
        %v664 = vpop.f32.mrf.mxu0
        %v665 = vpop.f32.mrf.mxu0
        %v666 = vadd.f32 %v465, %v665
        %v667 = vpop.f32.mrf.mxu0
        %668 = vmatprep.mubr.bf16.mxu0 0
        %669 = vmatmul.mubr.bf16.gmra.mxu0 %v529
        %v670 = vpop.f32.mrf.mxu0
        %v671 = vadd.f32 %v465, %v670
        %v672 = vpop.f32.mrf.mxu0
        %v673 = vpop.f32.mrf.mxu0
        %v674 = vadd.f32 %v465, %v673
        %v675 = vpop.f32.mrf.mxu0
        %676 = vmatprep.mubr.bf16.mxu0 0
        %677 = vmatmul.mubr.bf16.gmra.mxu0 %v532
        %v678 = vpop.f32.mrf.mxu0
        %v679 = vadd.f32 %v465, %v678
        %v680 = vpop.f32.mrf.mxu0
        %v681 = vpop.f32.mrf.mxu0
        %v682 = vadd.f32 %v465, %v681
        %v683 = vpop.f32.mrf.mxu0
        %684 = vmatprep.mubr.bf16.mxu0 0
        %685 = vmatmul.mubr.bf16.gmra.mxu0 %v535
        %v686 = vpop.f32.mrf.mxu0
        %v687 = vadd.f32 %v465, %v686
        %v688 = vpop.f32.mrf.mxu0
        %v689 = vpop.f32.mrf.mxu0
        %v690 = vadd.f32 %v465, %v689
        %v691 = vpop.f32.mrf.mxu0
        %692 = vmatprep.mubr.bf16.mxu0 0
        %693 = vmatmul.mubr.bf16.gmra.mxu0 %v538
        %v694 = vpop.f32.mrf.mxu0
        %v695 = vadd.f32 %v465, %v694
        %v696 = vpop.f32.mrf.mxu0
        %v697 = vpop.f32.mrf.mxu0
        %v698 = vadd.f32 %v465, %v697
        %v699 = vpop.f32.mrf.mxu0
        %700 = vdwg.mxu0
        %v701 = vxor.u32 %v575, 2147483648
        %v702 = vxor.u32 %v578, 2147483648
        %v703 = vxor.u32 %v583, 2147483648
        %v704 = vxor.u32 %v586, 2147483648
        %v705 = vxor.u32 %v591, 2147483648
        %v706 = vxor.u32 %v594, 2147483648
        %v707 = vxor.u32 %v599, 2147483648
        %v708 = vxor.u32 %v602, 2147483648
        %v709 = vxor.u32 %v607, 2147483648
        %v710 = vxor.u32 %v610, 2147483648
        %v711 = vxor.u32 %v615, 2147483648
        %v712 = vxor.u32 %v618, 2147483648
        %v713 = vxor.u32 %v623, 2147483648
        %v714 = vxor.u32 %v626, 2147483648
        %v715 = vxor.u32 %v631, 2147483648
        %v716 = vxor.u32 %v634, 2147483648
        %v717 = vxor.u32 %v639, 2147483648
        %v718 = vxor.u32 %v642, 2147483648
        %v719 = vxor.u32 %v647, 2147483648
        %v720 = vxor.u32 %v650, 2147483648
        %v721 = vxor.u32 %v655, 2147483648
        %v722 = vxor.u32 %v658, 2147483648
        %v723 = vxor.u32 %v663, 2147483648
        %v724 = vxor.u32 %v666, 2147483648
        %v725 = vxor.u32 %v671, 2147483648
        %v726 = vxor.u32 %v674, 2147483648
        %v727 = vxor.u32 %v679, 2147483648
        %v728 = vxor.u32 %v682, 2147483648
        %v729 = vxor.u32 %v687, 2147483648
        %v730 = vxor.u32 %v690, 2147483648
        %v731 = vxor.u32 %v695, 2147483648
        %v732 = vxor.u32 %v698, 2147483648
        %v733 = vmul.f32 %v701, 1.442695
        %v734 = vpow.pop %v733
        %v735 = vmul.f32 %v702, 1.442695
        %v736 = vpow.pop %v735
        %v737 = vmul.f32 %v703, 1.442695
        %v738 = vpow.pop %v737
        %v739 = vmul.f32 %v704, 1.442695
        %v740 = vpow.pop %v739
        %v741 = vmul.f32 %v705, 1.442695
        %v742 = vpow.pop %v741
        %v743 = vmul.f32 %v706, 1.442695
        %v744 = vpow.pop %v743
        %v745 = vmul.f32 %v707, 1.442695
        %v746 = vpow.pop %v745
        %v747 = vmul.f32 %v708, 1.442695
        %v748 = vpow.pop %v747
        %v749 = vmul.f32 %v709, 1.442695
        %v750 = vpow.pop %v749
        %v751 = vmul.f32 %v710, 1.442695
        %v752 = vpow.pop %v751
        %v753 = vmul.f32 %v711, 1.442695
        %v754 = vpow.pop %v753
        %v755 = vmul.f32 %v712, 1.442695
        %v756 = vpow.pop %v755
        %v757 = vmul.f32 %v713, 1.442695
        %v758 = vpow.pop %v757
        %v759 = vmul.f32 %v714, 1.442695
        %v760 = vpow.pop %v759
        %v761 = vmul.f32 %v715, 1.442695
        %v762 = vpow.pop %v761
        %v763 = vmul.f32 %v716, 1.442695
        %v764 = vpow.pop %v763
        %v765 = vmul.f32 %v717, 1.442695
        %v766 = vpow.pop %v765
        %v767 = vmul.f32 %v718, 1.442695
        %v768 = vpow.pop %v767
        %v769 = vmul.f32 %v719, 1.442695
        %v770 = vpow.pop %v769
        %v771 = vmul.f32 %v720, 1.442695
        %v772 = vpow.pop %v771
        %v773 = vmul.f32 %v721, 1.442695
        %v774 = vpow.pop %v773
        %v775 = vmul.f32 %v722, 1.442695
        %v776 = vpow.pop %v775
        %v777 = vmul.f32 %v723, 1.442695
        %v778 = vpow.pop %v777
        %v779 = vmul.f32 %v724, 1.442695
        %v780 = vpow.pop %v779
        %v781 = vmul.f32 %v725, 1.442695
        %v782 = vpow.pop %v781
        %v783 = vmul.f32 %v726, 1.442695
        %v784 = vpow.pop %v783
        %v785 = vmul.f32 %v727, 1.442695
        %v786 = vpow.pop %v785
        %v787 = vmul.f32 %v728, 1.442695
        %v788 = vpow.pop %v787
        %v789 = vmul.f32 %v729, 1.442695
        %v790 = vpow.pop %v789
        %v791 = vmul.f32 %v730, 1.442695
        %v792 = vpow.pop %v791
        %v793 = vmul.f32 %v731, 1.442695
        %v794 = vpow.pop %v793
        %v795 = vmul.f32 %v732, 1.442695
        %v796 = vpow.pop %v795
        %v797 = vadd.f32 %v734, 1.0
        %v798 = vadd.f32 %v736, 1.0
        %v799 = vadd.f32 %v738, 1.0
        %v800 = vadd.f32 %v740, 1.0
        %v801 = vadd.f32 %v742, 1.0
        %v802 = vadd.f32 %v744, 1.0
        %v803 = vadd.f32 %v746, 1.0
        %v804 = vadd.f32 %v748, 1.0
        %v805 = vadd.f32 %v750, 1.0
        %v806 = vadd.f32 %v752, 1.0
        %v807 = vadd.f32 %v754, 1.0
        %v808 = vadd.f32 %v756, 1.0
        %v809 = vadd.f32 %v758, 1.0
        %v810 = vadd.f32 %v760, 1.0
        %v811 = vadd.f32 %v762, 1.0
        %v812 = vadd.f32 %v764, 1.0
        %v813 = vadd.f32 %v766, 1.0
        %v814 = vadd.f32 %v768, 1.0
        %v815 = vadd.f32 %v770, 1.0
        %v816 = vadd.f32 %v772, 1.0
        %v817 = vadd.f32 %v774, 1.0
        %v818 = vadd.f32 %v776, 1.0
        %v819 = vadd.f32 %v778, 1.0
        %v820 = vadd.f32 %v780, 1.0
        %v821 = vadd.f32 %v782, 1.0
        %v822 = vadd.f32 %v784, 1.0
        %v823 = vadd.f32 %v786, 1.0
        %v824 = vadd.f32 %v788, 1.0
        %v825 = vadd.f32 %v790, 1.0
        %v826 = vadd.f32 %v792, 1.0
        %v827 = vadd.f32 %v794, 1.0
        %v828 = vadd.f32 %v796, 1.0
        %v829 = vrcp.pop %v797
        %v830 = vmul.f32 1.0, %v829
        %v831 = vrcp.pop %v798
        %v832 = vmul.f32 1.0, %v831
        %v833 = vrcp.pop %v799
        %v834 = vmul.f32 1.0, %v833
        %v835 = vrcp.pop %v800
        %v836 = vmul.f32 1.0, %v835
        %v837 = vrcp.pop %v801
        %v838 = vmul.f32 1.0, %v837
        %v839 = vrcp.pop %v802
        %v840 = vmul.f32 1.0, %v839
        %v841 = vrcp.pop %v803
        %v842 = vmul.f32 1.0, %v841
        %v843 = vrcp.pop %v804
        %v844 = vmul.f32 1.0, %v843
        %v845 = vrcp.pop %v805
        %v846 = vmul.f32 1.0, %v845
        %v847 = vrcp.pop %v806
        %v848 = vmul.f32 1.0, %v847
        %v849 = vrcp.pop %v807
        %v850 = vmul.f32 1.0, %v849
        %v851 = vrcp.pop %v808
        %v852 = vmul.f32 1.0, %v851
        %v853 = vrcp.pop %v809
        %v854 = vmul.f32 1.0, %v853
        %v855 = vrcp.pop %v810
        %v856 = vmul.f32 1.0, %v855
        %v857 = vrcp.pop %v811
        %v858 = vmul.f32 1.0, %v857
        %v859 = vrcp.pop %v812
        %v860 = vmul.f32 1.0, %v859
        %v861 = vrcp.pop %v813
        %v862 = vmul.f32 1.0, %v861
        %v863 = vrcp.pop %v814
        %v864 = vmul.f32 1.0, %v863
        %v865 = vrcp.pop %v815
        %v866 = vmul.f32 1.0, %v865
        %v867 = vrcp.pop %v816
        %v868 = vmul.f32 1.0, %v867
        %v869 = vrcp.pop %v817
        %v870 = vmul.f32 1.0, %v869
        %v871 = vrcp.pop %v818
        %v872 = vmul.f32 1.0, %v871
        %v873 = vrcp.pop %v819
        %v874 = vmul.f32 1.0, %v873
        %v875 = vrcp.pop %v820
        %v876 = vmul.f32 1.0, %v875
        %v877 = vrcp.pop %v821
        %v878 = vmul.f32 1.0, %v877
        %v879 = vrcp.pop %v822
        %v880 = vmul.f32 1.0, %v879
        %v881 = vrcp.pop %v823
        %v882 = vmul.f32 1.0, %v881
        %v883 = vrcp.pop %v824
        %v884 = vmul.f32 1.0, %v883
        %v885 = vrcp.pop %v825
        %v886 = vmul.f32 1.0, %v885
        %v887 = vrcp.pop %v826
        %v888 = vmul.f32 1.0, %v887
        %v889 = vrcp.pop %v827
        %v890 = vmul.f32 1.0, %v889
        %v891 = vrcp.pop %v828
        %v892 = vmul.f32 1.0, %v891
        %v893 = vmul.f32 %v575, %v830
        %v894 = vmul.f32 %v578, %v832
        %v895 = vmul.f32 %v583, %v834
        %v896 = vmul.f32 %v586, %v836
        %v897 = vmul.f32 %v591, %v838
        %v898 = vmul.f32 %v594, %v840
        %v899 = vmul.f32 %v599, %v842
        %v900 = vmul.f32 %v602, %v844
        %v901 = vmul.f32 %v607, %v846
        %v902 = vmul.f32 %v610, %v848
        %v903 = vmul.f32 %v615, %v850
        %v904 = vmul.f32 %v618, %v852
        %v905 = vmul.f32 %v623, %v854
        %v906 = vmul.f32 %v626, %v856
        %v907 = vmul.f32 %v631, %v858
        %v908 = vmul.f32 %v634, %v860
        %v909 = vmul.f32 %v639, %v862
        %v910 = vmul.f32 %v642, %v864
        %v911 = vmul.f32 %v647, %v866
        %v912 = vmul.f32 %v650, %v868
        %v913 = vmul.f32 %v655, %v870
        %v914 = vmul.f32 %v658, %v872
        %v915 = vmul.f32 %v663, %v874
        %v916 = vmul.f32 %v666, %v876
        %v917 = vmul.f32 %v671, %v878
        %v918 = vmul.f32 %v674, %v880
        %v919 = vmul.f32 %v679, %v882
        %v920 = vmul.f32 %v682, %v884
        %v921 = vmul.f32 %v687, %v886
        %v922 = vmul.f32 %v690, %v888
        %v923 = vmul.f32 %v695, %v890
        %v924 = vmul.f32 %v698, %v892
        %s925 = scalar_lea.vmem [#allocation2], 48
        %926 = vst.msk [vmem:[%s925 + $0x2] sm:$0xff] %vm342, %v893
        %927 = vst.msk [vmem:[%s925 + $0xa] sm:$0xff] %vm342, %v894
        %928 = vst.msk [vmem:[%s925 + $0x1a] sm:$0xff] %vm342, %v895
        %929 = vst.msk [vmem:[%s925 + $0x22] sm:$0xff] %vm342, %v896
        %930 = vst.msk [vmem:[%s925 + $0x32] sm:$0xff] %vm342, %v897
        %931 = vst.msk [vmem:[%s925 + $0x3a] sm:$0xff] %vm342, %v898
        %932 = vst.msk [vmem:[%s925 + $0x4a] sm:$0xff] %vm342, %v899
        %933 = vst.msk [vmem:[%s925 + $0x52] sm:$0xff] %vm342, %v900
        %934 = vst.msk [vmem:[%s925 + $0x62] sm:$0xff] %vm342, %v901
        %935 = vst.msk [vmem:[%s925 + $0x6a] sm:$0xff] %vm342, %v902
        %936 = vst.msk [vmem:[%s925 + $0x7a] sm:$0xff] %vm342, %v903
        %937 = vst.msk [vmem:[%s925 + $0x82] sm:$0xff] %vm342, %v904
        %938 = vst.msk [vmem:[%s925 + $0x92] sm:$0xff] %vm342, %v905
        %939 = vst.msk [vmem:[%s925 + $0x9a] sm:$0xff] %vm342, %v906
        %940 = vst.msk [vmem:[%s925 + $0xaa] sm:$0xff] %vm342, %v907
        %941 = vst.msk [vmem:[%s925 + $0xb2] sm:$0xff] %vm342, %v908
        %942 = vst.msk [vmem:[%s925 + $0xc2] sm:$0xff] %vm342, %v909
        %943 = vst.msk [vmem:[%s925 + $0xca] sm:$0xff] %vm342, %v910
        %944 = vst.msk [vmem:[%s925 + $0xda] sm:$0xff] %vm342, %v911
        %945 = vst.msk [vmem:[%s925 + $0xe2] sm:$0xff] %vm342, %v912
        %946 = vst.msk [vmem:[%s925 + $0xf2] sm:$0xff] %vm342, %v913
        %947 = vst.msk [vmem:[%s925 + $0xfa] sm:$0xff] %vm342, %v914
        %948 = vst.msk [vmem:[%s925 + $0x10a] sm:$0xff] %vm342, %v915
        %949 = vst.msk [vmem:[%s925 + $0x112] sm:$0xff] %vm342, %v916
        %950 = vst.msk [vmem:[%s925 + $0x122] sm:$0xff] %vm342, %v917
        %951 = vst.msk [vmem:[%s925 + $0x12a] sm:$0xff] %vm342, %v918
        %952 = vst.msk [vmem:[%s925 + $0x13a] sm:$0xff] %vm342, %v919
        %953 = vst.msk [vmem:[%s925 + $0x142] sm:$0xff] %vm342, %v920
        %954 = vst.msk [vmem:[%s925 + $0x152] sm:$0xff] %vm342, %v921
        %955 = vst.msk [vmem:[%s925 + $0x15a] sm:$0xff] %vm342, %v922
        %956 = vst.msk [vmem:[%s925 + $0x16a] sm:$0xff] %vm342, %v923
        %957 = vst.msk [vmem:[%s925 + $0x172] sm:$0xff] %vm342, %v924
        %v958 = vld [vmem:[#allocation8] sm:$0x1]
        %v959 = vld [vmem:[#allocation8 + $0x1] sm:$0x1]
        %v960 = vld [vmem:[#allocation8 + $0x2] sm:$0x1]
        %v961 = vld [vmem:[#allocation8 + $0x3] sm:$0x1]
        %v962 = vld [vmem:[#allocation8 + $0x4] sm:$0x1]
        %v963 = vld [vmem:[#allocation8 + $0x5] sm:$0x1]
        %v964 = vld [vmem:[#allocation8 + $0x6] sm:$0x1]
        %v965 = vld [vmem:[#allocation8 + $0x7] sm:$0x1]
        %v966 = vld [vmem:[#allocation8 + $0x8] sm:$0x1]
        %v967 = vld [vmem:[#allocation8 + $0x9] sm:$0x1]
        %v968 = vld [vmem:[#allocation8 + $0xa] sm:$0x1]
        %v969 = vld [vmem:[#allocation8 + $0xb] sm:$0x1]
        %v970 = vld [vmem:[#allocation8 + $0xc] sm:$0x1]
        %v971 = vld [vmem:[#allocation8 + $0xd] sm:$0x1]
        %v972 = vld [vmem:[#allocation8 + $0xe] sm:$0x1]
        %v973 = vld [vmem:[#allocation8 + $0xf] sm:$0x1]
        %v974 = vld [vmem:[#allocation8 + $0x10] sm:$0x1]
        %v975 = vld [vmem:[#allocation8 + $0x11] sm:$0x1]
        %v976 = vld [vmem:[#allocation8 + $0x12] sm:$0x1]
        %v977 = vld [vmem:[#allocation8 + $0x13] sm:$0x1]
        %v978 = vld [vmem:[#allocation8 + $0x14] sm:$0x1]
        %v979 = vld [vmem:[#allocation8 + $0x15] sm:$0x1]
        %v980 = vld [vmem:[#allocation8 + $0x16] sm:$0x1]
        %v981 = vld [vmem:[#allocation8 + $0x17] sm:$0x1]
        %v982 = vld [vmem:[#allocation8 + $0x18] sm:$0x1]
        %v983 = vld [vmem:[#allocation2] sm:$0xff]
        %v984 = vld [vmem:[#allocation2 + $0x8] sm:$0xff]
        %v985 = vld [vmem:[#allocation2 + $0x18] sm:$0xff]
        %v986 = vld [vmem:[#allocation2 + $0x20] sm:$0xff]
        %v987 = vld [vmem:[#allocation2 + $0x30] sm:$0xff]
        %v988 = vld [vmem:[#allocation2 + $0x38] sm:$0xff]
        %v989 = vld [vmem:[#allocation2 + $0x48] sm:$0xff]
        %v990 = vld [vmem:[#allocation2 + $0x50] sm:$0xff]
        %v991 = vld [vmem:[#allocation2 + $0x60] sm:$0xff]
        %v992 = vld [vmem:[#allocation2 + $0x68] sm:$0xff]
        %v993 = vld [vmem:[#allocation2 + $0x78] sm:$0xff]
        %v994 = vld [vmem:[#allocation2 + $0x80] sm:$0xff]
        %v995 = vld [vmem:[#allocation2 + $0x90] sm:$0xff]
        %v996 = vld [vmem:[#allocation2 + $0x98] sm:$0xff]
        %v997 = vld [vmem:[#allocation2 + $0xa8] sm:$0xff]
        %v998 = vld [vmem:[#allocation2 + $0xb0] sm:$0xff]
        %v999 = vld [vmem:[#allocation2 + $0xc0] sm:$0xff]
        %v1000 = vld [vmem:[#allocation2 + $0xc8] sm:$0xff]
        %v1001 = vld [vmem:[#allocation2 + $0xd8] sm:$0xff]
        %v1002 = vld [vmem:[#allocation2 + $0xe0] sm:$0xff]
        %v1003 = vld [vmem:[#allocation2 + $0xf0] sm:$0xff]
        %v1004 = vld [vmem:[#allocation2 + $0xf8] sm:$0xff]
        %v1005 = vld [vmem:[#allocation2 + $0x108] sm:$0xff]
        %v1006 = vld [vmem:[#allocation2 + $0x110] sm:$0xff]
        %v1007 = vld [vmem:[#allocation2 + $0x120] sm:$0xff]
        %v1008 = vld [vmem:[#allocation2 + $0x128] sm:$0xff]
        %v1009 = vld [vmem:[#allocation2 + $0x138] sm:$0xff]
        %v1010 = vld [vmem:[#allocation2 + $0x140] sm:$0xff]
        %v1011 = vld [vmem:[#allocation2 + $0x150] sm:$0xff]
        %v1012 = vld [vmem:[#allocation2 + $0x158] sm:$0xff]
        %v1013 = vld [vmem:[#allocation2 + $0x168] sm:$0xff]
        %v1014 = vld [vmem:[#allocation2 + $0x170] sm:$0xff]
        %v1016 = vlaneseq
        %v1017 = vshrl.u32 %v1016, 7
        %v1018 = vsub.s32 0, %v1017
        %v1019 = vrot.slane %v958, %v1018
        %v1021 = vmul.f32 %v983, %v1019
        %v1022 = vmul.f32 %v984, %v1019
        %v1023 = vmul.f32 %v985, %v1019
        %v1024 = vmul.f32 %v986, %v1019
        %v1025 = vmul.f32 %v987, %v1019
        %v1026 = vmul.f32 %v988, %v1019
        %v1027 = vmul.f32 %v989, %v1019
        %v1028 = vmul.f32 %v990, %v1019
        %v1029 = vmul.f32 %v991, %v1019
        %v1030 = vmul.f32 %v992, %v1019
        %v1031 = vmul.f32 %v993, %v1019
        %v1032 = vmul.f32 %v994, %v1019
        %v1033 = vmul.f32 %v995, %v1019
        %v1034 = vmul.f32 %v996, %v1019
        %v1035 = vmul.f32 %v997, %v1019
        %v1036 = vmul.f32 %v998, %v1019
        %v1037 = vmul.f32 %v999, %v1019
        %v1038 = vmul.f32 %v1000, %v1019
        %v1039 = vmul.f32 %v1001, %v1019
        %v1040 = vmul.f32 %v1002, %v1019
        %v1041 = vmul.f32 %v1003, %v1019
        %v1042 = vmul.f32 %v1004, %v1019
        %v1043 = vmul.f32 %v1005, %v1019
        %v1044 = vmul.f32 %v1006, %v1019
        %v1045 = vmul.f32 %v1007, %v1019
        %v1046 = vmul.f32 %v1008, %v1019
        %v1047 = vmul.f32 %v1009, %v1019
        %v1048 = vmul.f32 %v1010, %v1019
        %v1049 = vmul.f32 %v1011, %v1019
        %v1050 = vmul.f32 %v1012, %v1019
        %v1051 = vmul.f32 %v1013, %v1019
        %v1052 = vmul.f32 %v1014, %v1019
        %v1053 = vld [vmem:[#allocation2 + $0x1] sm:$0xff]
        %v1054 = vld [vmem:[#allocation2 + $0x9] sm:$0xff]
        %v1055 = vld [vmem:[#allocation2 + $0x19] sm:$0xff]
        %v1056 = vld [vmem:[#allocation2 + $0x21] sm:$0xff]
        %v1057 = vld [vmem:[#allocation2 + $0x31] sm:$0xff]
        %v1058 = vld [vmem:[#allocation2 + $0x39] sm:$0xff]
        %v1059 = vld [vmem:[#allocation2 + $0x49] sm:$0xff]
        %v1060 = vld [vmem:[#allocation2 + $0x51] sm:$0xff]
        %v1061 = vld [vmem:[#allocation2 + $0x61] sm:$0xff]
        %v1062 = vld [vmem:[#allocation2 + $0x69] sm:$0xff]
        %v1063 = vld [vmem:[#allocation2 + $0x79] sm:$0xff]
        %v1064 = vld [vmem:[#allocation2 + $0x81] sm:$0xff]
        %v1065 = vld [vmem:[#allocation2 + $0x91] sm:$0xff]
        %v1066 = vld [vmem:[#allocation2 + $0x99] sm:$0xff]
        %v1067 = vld [vmem:[#allocation2 + $0xa9] sm:$0xff]
        %v1068 = vld [vmem:[#allocation2 + $0xb1] sm:$0xff]
        %v1069 = vld [vmem:[#allocation2 + $0xc1] sm:$0xff]
        %v1070 = vld [vmem:[#allocation2 + $0xc9] sm:$0xff]
        %v1071 = vld [vmem:[#allocation2 + $0xd9] sm:$0xff]
        %v1072 = vld [vmem:[#allocation2 + $0xe1] sm:$0xff]
        %v1073 = vld [vmem:[#allocation2 + $0xf1] sm:$0xff]
        %v1074 = vld [vmem:[#allocation2 + $0xf9] sm:$0xff]
        %v1075 = vld [vmem:[#allocation2 + $0x109] sm:$0xff]
        %v1076 = vld [vmem:[#allocation2 + $0x111] sm:$0xff]
        %v1077 = vld [vmem:[#allocation2 + $0x121] sm:$0xff]
        %v1078 = vld [vmem:[#allocation2 + $0x129] sm:$0xff]
        %v1079 = vld [vmem:[#allocation2 + $0x139] sm:$0xff]
        %v1080 = vld [vmem:[#allocation2 + $0x141] sm:$0xff]
        %v1081 = vld [vmem:[#allocation2 + $0x151] sm:$0xff]
        %v1082 = vld [vmem:[#allocation2 + $0x159] sm:$0xff]
        %v1083 = vld [vmem:[#allocation2 + $0x169] sm:$0xff]
        %v1084 = vld [vmem:[#allocation2 + $0x171] sm:$0xff]
        %v1086 = vlaneseq
        %v1087 = vshrl.u32 %v1086, 7
        %v1088 = vsub.s32 0, %v1087
        %v1089 = vrot.slane %v959, %v1088
        %v1091 = vmul.f32 %v1053, %v1089
        %v1092 = vmul.f32 %v1054, %v1089
        %v1093 = vmul.f32 %v1055, %v1089
        %v1094 = vmul.f32 %v1056, %v1089
        %v1095 = vmul.f32 %v1057, %v1089
        %v1096 = vmul.f32 %v1058, %v1089
        %v1097 = vmul.f32 %v1059, %v1089
        %v1098 = vmul.f32 %v1060, %v1089
        %v1099 = vmul.f32 %v1061, %v1089
        %v1100 = vmul.f32 %v1062, %v1089
        %v1101 = vmul.f32 %v1063, %v1089
        %v1102 = vmul.f32 %v1064, %v1089
        %v1103 = vmul.f32 %v1065, %v1089
        %v1104 = vmul.f32 %v1066, %v1089
        %v1105 = vmul.f32 %v1067, %v1089
        %v1106 = vmul.f32 %v1068, %v1089
        %v1107 = vmul.f32 %v1069, %v1089
        %v1108 = vmul.f32 %v1070, %v1089
        %v1109 = vmul.f32 %v1071, %v1089
        %v1110 = vmul.f32 %v1072, %v1089
        %v1111 = vmul.f32 %v1073, %v1089
        %v1112 = vmul.f32 %v1074, %v1089
        %v1113 = vmul.f32 %v1075, %v1089
        %v1114 = vmul.f32 %v1076, %v1089
        %v1115 = vmul.f32 %v1077, %v1089
        %v1116 = vmul.f32 %v1078, %v1089
        %v1117 = vmul.f32 %v1079, %v1089
        %v1118 = vmul.f32 %v1080, %v1089
        %v1119 = vmul.f32 %v1081, %v1089
        %v1120 = vmul.f32 %v1082, %v1089
        %v1121 = vmul.f32 %v1083, %v1089
        %v1122 = vmul.f32 %v1084, %v1089
        %v1123 = vadd.f32 %v1021, %v1091
        %v1124 = vadd.f32 %v1022, %v1092
        %v1125 = vadd.f32 %v1023, %v1093
        %v1126 = vadd.f32 %v1024, %v1094
        %v1127 = vadd.f32 %v1025, %v1095
        %v1128 = vadd.f32 %v1026, %v1096
        %v1129 = vadd.f32 %v1027, %v1097
        %v1130 = vadd.f32 %v1028, %v1098
        %v1131 = vadd.f32 %v1029, %v1099
        %v1132 = vadd.f32 %v1030, %v1100
        %v1133 = vadd.f32 %v1031, %v1101
        %v1134 = vadd.f32 %v1032, %v1102
        %v1135 = vadd.f32 %v1033, %v1103
        %v1136 = vadd.f32 %v1034, %v1104
        %v1137 = vadd.f32 %v1035, %v1105
        %v1138 = vadd.f32 %v1036, %v1106
        %v1139 = vadd.f32 %v1037, %v1107
        %v1140 = vadd.f32 %v1038, %v1108
        %v1141 = vadd.f32 %v1039, %v1109
        %v1142 = vadd.f32 %v1040, %v1110
        %v1143 = vadd.f32 %v1041, %v1111
        %v1144 = vadd.f32 %v1042, %v1112
        %v1145 = vadd.f32 %v1043, %v1113
        %v1146 = vadd.f32 %v1044, %v1114
        %v1147 = vadd.f32 %v1045, %v1115
        %v1148 = vadd.f32 %v1046, %v1116
        %v1149 = vadd.f32 %v1047, %v1117
        %v1150 = vadd.f32 %v1048, %v1118
        %v1151 = vadd.f32 %v1049, %v1119
        %v1152 = vadd.f32 %v1050, %v1120
        %v1153 = vadd.f32 %v1051, %v1121
        %v1154 = vadd.f32 %v1052, %v1122
        %v1155 = vld [vmem:[#allocation2 + $0x2] sm:$0xff]
        %v1156 = vld [vmem:[#allocation2 + $0xa] sm:$0xff]
        %v1157 = vld [vmem:[#allocation2 + $0x1a] sm:$0xff]
        %v1158 = vld [vmem:[#allocation2 + $0x22] sm:$0xff]
        %v1159 = vld [vmem:[#allocation2 + $0x32] sm:$0xff]
        %v1160 = vld [vmem:[#allocation2 + $0x3a] sm:$0xff]
        %v1161 = vld [vmem:[#allocation2 + $0x4a] sm:$0xff]
        %v1162 = vld [vmem:[#allocation2 + $0x52] sm:$0xff]
        %v1163 = vld [vmem:[#allocation2 + $0x62] sm:$0xff]
        %v1164 = vld [vmem:[#allocation2 + $0x6a] sm:$0xff]
        %v1165 = vld [vmem:[#allocation2 + $0x7a] sm:$0xff]
        %v1166 = vld [vmem:[#allocation2 + $0x82] sm:$0xff]
        %v1167 = vld [vmem:[#allocation2 + $0x92] sm:$0xff]
        %v1168 = vld [vmem:[#allocation2 + $0x9a] sm:$0xff]
        %v1169 = vld [vmem:[#allocation2 + $0xaa] sm:$0xff]
        %v1170 = vld [vmem:[#allocation2 + $0xb2] sm:$0xff]
        %v1171 = vld [vmem:[#allocation2 + $0xc2] sm:$0xff]
        %v1172 = vld [vmem:[#allocation2 + $0xca] sm:$0xff]
        %v1173 = vld [vmem:[#allocation2 + $0xda] sm:$0xff]
        %v1174 = vld [vmem:[#allocation2 + $0xe2] sm:$0xff]
        %v1175 = vld [vmem:[#allocation2 + $0xf2] sm:$0xff]
        %v1176 = vld [vmem:[#allocation2 + $0xfa] sm:$0xff]
        %v1177 = vld [vmem:[#allocation2 + $0x10a] sm:$0xff]
        %v1178 = vld [vmem:[#allocation2 + $0x112] sm:$0xff]
        %v1179 = vld [vmem:[#allocation2 + $0x122] sm:$0xff]
        %v1180 = vld [vmem:[#allocation2 + $0x12a] sm:$0xff]
        %v1181 = vld [vmem:[#allocation2 + $0x13a] sm:$0xff]
        %v1182 = vld [vmem:[#allocation2 + $0x142] sm:$0xff]
        %v1183 = vld [vmem:[#allocation2 + $0x152] sm:$0xff]
        %v1184 = vld [vmem:[#allocation2 + $0x15a] sm:$0xff]
        %v1185 = vld [vmem:[#allocation2 + $0x16a] sm:$0xff]
        %v1186 = vld [vmem:[#allocation2 + $0x172] sm:$0xff]
        %v1188 = vlaneseq
        %v1189 = vshrl.u32 %v1188, 7
        %v1190 = vsub.s32 0, %v1189
        %v1191 = vrot.slane %v960, %v1190
        %v1193 = vmul.f32 %v1155, %v1191
        %v1194 = vmul.f32 %v1156, %v1191
        %v1195 = vmul.f32 %v1157, %v1191
        %v1196 = vmul.f32 %v1158, %v1191
        %v1197 = vmul.f32 %v1159, %v1191
        %v1198 = vmul.f32 %v1160, %v1191
        %v1199 = vmul.f32 %v1161, %v1191
        %v1200 = vmul.f32 %v1162, %v1191
        %v1201 = vmul.f32 %v1163, %v1191
        %v1202 = vmul.f32 %v1164, %v1191
        %v1203 = vmul.f32 %v1165, %v1191
        %v1204 = vmul.f32 %v1166, %v1191
        %v1205 = vmul.f32 %v1167, %v1191
        %v1206 = vmul.f32 %v1168, %v1191
        %v1207 = vmul.f32 %v1169, %v1191
        %v1208 = vmul.f32 %v1170, %v1191
        %v1209 = vmul.f32 %v1171, %v1191
        %v1210 = vmul.f32 %v1172, %v1191
        %v1211 = vmul.f32 %v1173, %v1191
        %v1212 = vmul.f32 %v1174, %v1191
        %v1213 = vmul.f32 %v1175, %v1191
        %v1214 = vmul.f32 %v1176, %v1191
        %v1215 = vmul.f32 %v1177, %v1191
        %v1216 = vmul.f32 %v1178, %v1191
        %v1217 = vmul.f32 %v1179, %v1191
        %v1218 = vmul.f32 %v1180, %v1191
        %v1219 = vmul.f32 %v1181, %v1191
        %v1220 = vmul.f32 %v1182, %v1191
        %v1221 = vmul.f32 %v1183, %v1191
        %v1222 = vmul.f32 %v1184, %v1191
        %v1223 = vmul.f32 %v1185, %v1191
        %v1224 = vmul.f32 %v1186, %v1191
        %v1225 = vadd.f32 %v1123, %v1193
        %v1226 = vadd.f32 %v1124, %v1194
        %v1227 = vadd.f32 %v1125, %v1195
        %v1228 = vadd.f32 %v1126, %v1196
        %v1229 = vadd.f32 %v1127, %v1197
        %v1230 = vadd.f32 %v1128, %v1198
        %v1231 = vadd.f32 %v1129, %v1199
        %v1232 = vadd.f32 %v1130, %v1200
        %v1233 = vadd.f32 %v1131, %v1201
        %v1234 = vadd.f32 %v1132, %v1202
        %v1235 = vadd.f32 %v1133, %v1203
        %v1236 = vadd.f32 %v1134, %v1204
        %v1237 = vadd.f32 %v1135, %v1205
        %v1238 = vadd.f32 %v1136, %v1206
        %v1239 = vadd.f32 %v1137, %v1207
        %v1240 = vadd.f32 %v1138, %v1208
        %v1241 = vadd.f32 %v1139, %v1209
        %v1242 = vadd.f32 %v1140, %v1210
        %v1243 = vadd.f32 %v1141, %v1211
        %v1244 = vadd.f32 %v1142, %v1212
        %v1245 = vadd.f32 %v1143, %v1213
        %v1246 = vadd.f32 %v1144, %v1214
        %v1247 = vadd.f32 %v1145, %v1215
        %v1248 = vadd.f32 %v1146, %v1216
        %v1249 = vadd.f32 %v1147, %v1217
        %v1250 = vadd.f32 %v1148, %v1218
        %v1251 = vadd.f32 %v1149, %v1219
        %v1252 = vadd.f32 %v1150, %v1220
        %v1253 = vadd.f32 %v1151, %v1221
        %v1254 = vadd.f32 %v1152, %v1222
        %v1255 = vadd.f32 %v1153, %v1223
        %v1256 = vadd.f32 %v1154, %v1224
        %v1257 = vld [vmem:[#allocation2 + $0x3] sm:$0xff]
        %v1258 = vld [vmem:[#allocation2 + $0xb] sm:$0xff]
        %v1259 = vld [vmem:[#allocation2 + $0x1b] sm:$0xff]
        %v1260 = vld [vmem:[#allocation2 + $0x23] sm:$0xff]
        %v1261 = vld [vmem:[#allocation2 + $0x33] sm:$0xff]
        %v1262 = vld [vmem:[#allocation2 + $0x3b] sm:$0xff]
        %v1263 = vld [vmem:[#allocation2 + $0x4b] sm:$0xff]
        %v1264 = vld [vmem:[#allocation2 + $0x53] sm:$0xff]
        %v1265 = vld [vmem:[#allocation2 + $0x63] sm:$0xff]
        %v1266 = vld [vmem:[#allocation2 + $0x6b] sm:$0xff]
        %v1267 = vld [vmem:[#allocation2 + $0x7b] sm:$0xff]
        %v1268 = vld [vmem:[#allocation2 + $0x83] sm:$0xff]
        %v1269 = vld [vmem:[#allocation2 + $0x93] sm:$0xff]
        %v1270 = vld [vmem:[#allocation2 + $0x9b] sm:$0xff]
        %v1271 = vld [vmem:[#allocation2 + $0xab] sm:$0xff]
        %v1272 = vld [vmem:[#allocation2 + $0xb3] sm:$0xff]
        %v1273 = vld [vmem:[#allocation2 + $0xc3] sm:$0xff]
        %v1274 = vld [vmem:[#allocation2 + $0xcb] sm:$0xff]
        %v1275 = vld [vmem:[#allocation2 + $0xdb] sm:$0xff]
        %v1276 = vld [vmem:[#allocation2 + $0xe3] sm:$0xff]
        %v1277 = vld [vmem:[#allocation2 + $0xf3] sm:$0xff]
        %v1278 = vld [vmem:[#allocation2 + $0xfb] sm:$0xff]
        %v1279 = vld [vmem:[#allocation2 + $0x10b] sm:$0xff]
        %v1280 = vld [vmem:[#allocation2 + $0x113] sm:$0xff]
        %v1281 = vld [vmem:[#allocation2 + $0x123] sm:$0xff]
        %v1282 = vld [vmem:[#allocation2 + $0x12b] sm:$0xff]
        %v1283 = vld [vmem:[#allocation2 + $0x13b] sm:$0xff]
        %v1284 = vld [vmem:[#allocation2 + $0x143] sm:$0xff]
        %v1285 = vld [vmem:[#allocation2 + $0x153] sm:$0xff]
        %v1286 = vld [vmem:[#allocation2 + $0x15b] sm:$0xff]
        %v1287 = vld [vmem:[#allocation2 + $0x16b] sm:$0xff]
        %v1288 = vld [vmem:[#allocation2 + $0x173] sm:$0xff]
        %v1290 = vlaneseq
        %v1291 = vshrl.u32 %v1290, 7
        %v1292 = vsub.s32 0, %v1291
        %v1293 = vrot.slane %v961, %v1292
        %v1295 = vmul.f32 %v1257, %v1293
        %v1296 = vmul.f32 %v1258, %v1293
        %v1297 = vmul.f32 %v1259, %v1293
        %v1298 = vmul.f32 %v1260, %v1293
        %v1299 = vmul.f32 %v1261, %v1293
        %v1300 = vmul.f32 %v1262, %v1293
        %v1301 = vmul.f32 %v1263, %v1293
        %v1302 = vmul.f32 %v1264, %v1293
        %v1303 = vmul.f32 %v1265, %v1293
        %v1304 = vmul.f32 %v1266, %v1293
        %v1305 = vmul.f32 %v1267, %v1293
        %v1306 = vmul.f32 %v1268, %v1293
        %v1307 = vmul.f32 %v1269, %v1293
        %v1308 = vmul.f32 %v1270, %v1293
        %v1309 = vmul.f32 %v1271, %v1293
        %v1310 = vmul.f32 %v1272, %v1293
        %v1311 = vmul.f32 %v1273, %v1293
        %v1312 = vmul.f32 %v1274, %v1293
        %v1313 = vmul.f32 %v1275, %v1293
        %v1314 = vmul.f32 %v1276, %v1293
        %v1315 = vmul.f32 %v1277, %v1293
        %v1316 = vmul.f32 %v1278, %v1293
        %v1317 = vmul.f32 %v1279, %v1293
        %v1318 = vmul.f32 %v1280, %v1293
        %v1319 = vmul.f32 %v1281, %v1293
        %v1320 = vmul.f32 %v1282, %v1293
        %v1321 = vmul.f32 %v1283, %v1293
        %v1322 = vmul.f32 %v1284, %v1293
        %v1323 = vmul.f32 %v1285, %v1293
        %v1324 = vmul.f32 %v1286, %v1293
        %v1325 = vmul.f32 %v1287, %v1293
        %v1326 = vmul.f32 %v1288, %v1293
        %v1327 = vadd.f32 %v1225, %v1295
        %v1328 = vadd.f32 %v1226, %v1296
        %v1329 = vadd.f32 %v1227, %v1297
        %v1330 = vadd.f32 %v1228, %v1298
        %v1331 = vadd.f32 %v1229, %v1299
        %v1332 = vadd.f32 %v1230, %v1300
        %v1333 = vadd.f32 %v1231, %v1301
        %v1334 = vadd.f32 %v1232, %v1302
        %v1335 = vadd.f32 %v1233, %v1303
        %v1336 = vadd.f32 %v1234, %v1304
        %v1337 = vadd.f32 %v1235, %v1305
        %v1338 = vadd.f32 %v1236, %v1306
        %v1339 = vadd.f32 %v1237, %v1307
        %v1340 = vadd.f32 %v1238, %v1308
        %v1341 = vadd.f32 %v1239, %v1309
        %v1342 = vadd.f32 %v1240, %v1310
        %v1343 = vadd.f32 %v1241, %v1311
        %v1344 = vadd.f32 %v1242, %v1312
        %v1345 = vadd.f32 %v1243, %v1313
        %v1346 = vadd.f32 %v1244, %v1314
        %v1347 = vadd.f32 %v1245, %v1315
        %v1348 = vadd.f32 %v1246, %v1316
        %v1349 = vadd.f32 %v1247, %v1317
        %v1350 = vadd.f32 %v1248, %v1318
        %v1351 = vadd.f32 %v1249, %v1319
        %v1352 = vadd.f32 %v1250, %v1320
        %v1353 = vadd.f32 %v1251, %v1321
        %v1354 = vadd.f32 %v1252, %v1322
        %v1355 = vadd.f32 %v1253, %v1323
        %v1356 = vadd.f32 %v1254, %v1324
        %v1357 = vadd.f32 %v1255, %v1325
        %v1358 = vadd.f32 %v1256, %v1326
        %v1359 = vld [vmem:[#allocation2 + $0x4] sm:$0xff]
        %v1360 = vld [vmem:[#allocation2 + $0xc] sm:$0xff]
        %v1361 = vld [vmem:[#allocation2 + $0x1c] sm:$0xff]
        %v1362 = vld [vmem:[#allocation2 + $0x24] sm:$0xff]
        %v1363 = vld [vmem:[#allocation2 + $0x34] sm:$0xff]
        %v1364 = vld [vmem:[#allocation2 + $0x3c] sm:$0xff]
        %v1365 = vld [vmem:[#allocation2 + $0x4c] sm:$0xff]
        %v1366 = vld [vmem:[#allocation2 + $0x54] sm:$0xff]
        %v1367 = vld [vmem:[#allocation2 + $0x64] sm:$0xff]
        %v1368 = vld [vmem:[#allocation2 + $0x6c] sm:$0xff]
        %v1369 = vld [vmem:[#allocation2 + $0x7c] sm:$0xff]
        %v1370 = vld [vmem:[#allocation2 + $0x84] sm:$0xff]
        %v1371 = vld [vmem:[#allocation2 + $0x94] sm:$0xff]
        %v1372 = vld [vmem:[#allocation2 + $0x9c] sm:$0xff]
        %v1373 = vld [vmem:[#allocation2 + $0xac] sm:$0xff]
        %v1374 = vld [vmem:[#allocation2 + $0xb4] sm:$0xff]
        %v1375 = vld [vmem:[#allocation2 + $0xc4] sm:$0xff]
        %v1376 = vld [vmem:[#allocation2 + $0xcc] sm:$0xff]
        %v1377 = vld [vmem:[#allocation2 + $0xdc] sm:$0xff]
        %v1378 = vld [vmem:[#allocation2 + $0xe4] sm:$0xff]
        %v1379 = vld [vmem:[#allocation2 + $0xf4] sm:$0xff]
        %v1380 = vld [vmem:[#allocation2 + $0xfc] sm:$0xff]
        %v1381 = vld [vmem:[#allocation2 + $0x10c] sm:$0xff]
        %v1382 = vld [vmem:[#allocation2 + $0x114] sm:$0xff]
        %v1383 = vld [vmem:[#allocation2 + $0x124] sm:$0xff]
        %v1384 = vld [vmem:[#allocation2 + $0x12c] sm:$0xff]
        %v1385 = vld [vmem:[#allocation2 + $0x13c] sm:$0xff]
        %v1386 = vld [vmem:[#allocation2 + $0x144] sm:$0xff]
        %v1387 = vld [vmem:[#allocation2 + $0x154] sm:$0xff]
        %v1388 = vld [vmem:[#allocation2 + $0x15c] sm:$0xff]
        %v1389 = vld [vmem:[#allocation2 + $0x16c] sm:$0xff]
        %v1390 = vld [vmem:[#allocation2 + $0x174] sm:$0xff]
        %v1392 = vlaneseq
        %v1393 = vshrl.u32 %v1392, 7
        %v1394 = vsub.s32 0, %v1393
        %v1395 = vrot.slane %v962, %v1394
        %v1397 = vmul.f32 %v1359, %v1395
        %v1398 = vmul.f32 %v1360, %v1395
        %v1399 = vmul.f32 %v1361, %v1395
        %v1400 = vmul.f32 %v1362, %v1395
        %v1401 = vmul.f32 %v1363, %v1395
        %v1402 = vmul.f32 %v1364, %v1395
        %v1403 = vmul.f32 %v1365, %v1395
        %v1404 = vmul.f32 %v1366, %v1395
        %v1405 = vmul.f32 %v1367, %v1395
        %v1406 = vmul.f32 %v1368, %v1395
        %v1407 = vmul.f32 %v1369, %v1395
        %v1408 = vmul.f32 %v1370, %v1395
        %v1409 = vmul.f32 %v1371, %v1395
        %v1410 = vmul.f32 %v1372, %v1395
        %v1411 = vmul.f32 %v1373, %v1395
        %v1412 = vmul.f32 %v1374, %v1395
        %v1413 = vmul.f32 %v1375, %v1395
        %v1414 = vmul.f32 %v1376, %v1395
        %v1415 = vmul.f32 %v1377, %v1395
        %v1416 = vmul.f32 %v1378, %v1395
        %v1417 = vmul.f32 %v1379, %v1395
        %v1418 = vmul.f32 %v1380, %v1395
        %v1419 = vmul.f32 %v1381, %v1395
        %v1420 = vmul.f32 %v1382, %v1395
        %v1421 = vmul.f32 %v1383, %v1395
        %v1422 = vmul.f32 %v1384, %v1395
        %v1423 = vmul.f32 %v1385, %v1395
        %v1424 = vmul.f32 %v1386, %v1395
        %v1425 = vmul.f32 %v1387, %v1395
        %v1426 = vmul.f32 %v1388, %v1395
        %v1427 = vmul.f32 %v1389, %v1395
        %v1428 = vmul.f32 %v1390, %v1395
        %v1429 = vadd.f32 %v1327, %v1397
        %v1430 = vadd.f32 %v1328, %v1398
        %v1431 = vadd.f32 %v1329, %v1399
        %v1432 = vadd.f32 %v1330, %v1400
        %v1433 = vadd.f32 %v1331, %v1401
        %v1434 = vadd.f32 %v1332, %v1402
        %v1435 = vadd.f32 %v1333, %v1403
        %v1436 = vadd.f32 %v1334, %v1404
        %v1437 = vadd.f32 %v1335, %v1405
        %v1438 = vadd.f32 %v1336, %v1406
        %v1439 = vadd.f32 %v1337, %v1407
        %v1440 = vadd.f32 %v1338, %v1408
        %v1441 = vadd.f32 %v1339, %v1409
        %v1442 = vadd.f32 %v1340, %v1410
        %v1443 = vadd.f32 %v1341, %v1411
        %v1444 = vadd.f32 %v1342, %v1412
        %v1445 = vadd.f32 %v1343, %v1413
        %v1446 = vadd.f32 %v1344, %v1414
        %v1447 = vadd.f32 %v1345, %v1415
        %v1448 = vadd.f32 %v1346, %v1416
        %v1449 = vadd.f32 %v1347, %v1417
        %v1450 = vadd.f32 %v1348, %v1418
        %v1451 = vadd.f32 %v1349, %v1419
        %v1452 = vadd.f32 %v1350, %v1420
        %v1453 = vadd.f32 %v1351, %v1421
        %v1454 = vadd.f32 %v1352, %v1422
        %v1455 = vadd.f32 %v1353, %v1423
        %v1456 = vadd.f32 %v1354, %v1424
        %v1457 = vadd.f32 %v1355, %v1425
        %v1458 = vadd.f32 %v1356, %v1426
        %v1459 = vadd.f32 %v1357, %v1427
        %v1460 = vadd.f32 %v1358, %v1428
        %s1461 = scalar_lea.vmem [#allocation2], 24
        %v1462 = vld [vmem:[%s1461] sm:$0xff]
        %v1463 = vld [vmem:[%s1461 + $0x8] sm:$0xff]
        %v1464 = vld [vmem:[%s1461 + $0x18] sm:$0xff]
        %v1465 = vld [vmem:[%s1461 + $0x20] sm:$0xff]
        %v1466 = vld [vmem:[%s1461 + $0x30] sm:$0xff]
        %v1467 = vld [vmem:[%s1461 + $0x38] sm:$0xff]
        %v1468 = vld [vmem:[%s1461 + $0x48] sm:$0xff]
        %v1469 = vld [vmem:[%s1461 + $0x50] sm:$0xff]
        %v1470 = vld [vmem:[%s1461 + $0x60] sm:$0xff]
        %v1471 = vld [vmem:[%s1461 + $0x68] sm:$0xff]
        %v1472 = vld [vmem:[%s1461 + $0x78] sm:$0xff]
        %v1473 = vld [vmem:[%s1461 + $0x80] sm:$0xff]
        %v1474 = vld [vmem:[%s1461 + $0x90] sm:$0xff]
        %v1475 = vld [vmem:[%s1461 + $0x98] sm:$0xff]
        %v1476 = vld [vmem:[%s1461 + $0xa8] sm:$0xff]
        %v1477 = vld [vmem:[%s1461 + $0xb0] sm:$0xff]
        %v1478 = vld [vmem:[%s1461 + $0xc0] sm:$0xff]
        %v1479 = vld [vmem:[%s1461 + $0xc8] sm:$0xff]
        %v1480 = vld [vmem:[%s1461 + $0xd8] sm:$0xff]
        %v1481 = vld [vmem:[%s1461 + $0xe0] sm:$0xff]
        %v1482 = vld [vmem:[%s1461 + $0xf0] sm:$0xff]
        %v1483 = vld [vmem:[%s1461 + $0xf8] sm:$0xff]
        %v1484 = vld [vmem:[%s1461 + $0x108] sm:$0xff]
        %v1485 = vld [vmem:[%s1461 + $0x110] sm:$0xff]
        %v1486 = vld [vmem:[%s1461 + $0x120] sm:$0xff]
        %v1487 = vld [vmem:[%s1461 + $0x128] sm:$0xff]
        %v1488 = vld [vmem:[%s1461 + $0x138] sm:$0xff]
        %v1489 = vld [vmem:[%s1461 + $0x140] sm:$0xff]
        %v1490 = vld [vmem:[%s1461 + $0x150] sm:$0xff]
        %v1491 = vld [vmem:[%s1461 + $0x158] sm:$0xff]
        %v1492 = vld [vmem:[%s1461 + $0x168] sm:$0xff]
        %v1493 = vld [vmem:[%s1461 + $0x170] sm:$0xff]
        %v1495 = vlaneseq
        %v1496 = vshrl.u32 %v1495, 7
        %v1497 = vsub.s32 0, %v1496
        %v1498 = vrot.slane %v963, %v1497
        %v1500 = vmul.f32 %v1462, %v1498
        %v1501 = vmul.f32 %v1463, %v1498
        %v1502 = vmul.f32 %v1464, %v1498
        %v1503 = vmul.f32 %v1465, %v1498
        %v1504 = vmul.f32 %v1466, %v1498
        %v1505 = vmul.f32 %v1467, %v1498
        %v1506 = vmul.f32 %v1468, %v1498
        %v1507 = vmul.f32 %v1469, %v1498
        %v1508 = vmul.f32 %v1470, %v1498
        %v1509 = vmul.f32 %v1471, %v1498
        %v1510 = vmul.f32 %v1472, %v1498
        %v1511 = vmul.f32 %v1473, %v1498
        %v1512 = vmul.f32 %v1474, %v1498
        %v1513 = vmul.f32 %v1475, %v1498
        %v1514 = vmul.f32 %v1476, %v1498
        %v1515 = vmul.f32 %v1477, %v1498
        %v1516 = vmul.f32 %v1478, %v1498
        %v1517 = vmul.f32 %v1479, %v1498
        %v1518 = vmul.f32 %v1480, %v1498
        %v1519 = vmul.f32 %v1481, %v1498
        %v1520 = vmul.f32 %v1482, %v1498
        %v1521 = vmul.f32 %v1483, %v1498
        %v1522 = vmul.f32 %v1484, %v1498
        %v1523 = vmul.f32 %v1485, %v1498
        %v1524 = vmul.f32 %v1486, %v1498
        %v1525 = vmul.f32 %v1487, %v1498
        %v1526 = vmul.f32 %v1488, %v1498
        %v1527 = vmul.f32 %v1489, %v1498
        %v1528 = vmul.f32 %v1490, %v1498
        %v1529 = vmul.f32 %v1491, %v1498
        %v1530 = vmul.f32 %v1492, %v1498
        %v1531 = vmul.f32 %v1493, %v1498
        %v1532 = vld [vmem:[%s1461 + $0x1] sm:$0xff]
        %v1533 = vld [vmem:[%s1461 + $0x9] sm:$0xff]
        %v1534 = vld [vmem:[%s1461 + $0x19] sm:$0xff]
        %v1535 = vld [vmem:[%s1461 + $0x21] sm:$0xff]
        %v1536 = vld [vmem:[%s1461 + $0x31] sm:$0xff]
        %v1537 = vld [vmem:[%s1461 + $0x39] sm:$0xff]
        %v1538 = vld [vmem:[%s1461 + $0x49] sm:$0xff]
        %v1539 = vld [vmem:[%s1461 + $0x51] sm:$0xff]
        %v1540 = vld [vmem:[%s1461 + $0x61] sm:$0xff]
        %v1541 = vld [vmem:[%s1461 + $0x69] sm:$0xff]
        %v1542 = vld [vmem:[%s1461 + $0x79] sm:$0xff]
        %v1543 = vld [vmem:[%s1461 + $0x81] sm:$0xff]
        %v1544 = vld [vmem:[%s1461 + $0x91] sm:$0xff]
        %v1545 = vld [vmem:[%s1461 + $0x99] sm:$0xff]
        %v1546 = vld [vmem:[%s1461 + $0xa9] sm:$0xff]
        %v1547 = vld [vmem:[%s1461 + $0xb1] sm:$0xff]
        %v1548 = vld [vmem:[%s1461 + $0xc1] sm:$0xff]
        %v1549 = vld [vmem:[%s1461 + $0xc9] sm:$0xff]
        %v1550 = vld [vmem:[%s1461 + $0xd9] sm:$0xff]
        %v1551 = vld [vmem:[%s1461 + $0xe1] sm:$0xff]
        %v1552 = vld [vmem:[%s1461 + $0xf1] sm:$0xff]
        %v1553 = vld [vmem:[%s1461 + $0xf9] sm:$0xff]
        %v1554 = vld [vmem:[%s1461 + $0x109] sm:$0xff]
        %v1555 = vld [vmem:[%s1461 + $0x111] sm:$0xff]
        %v1556 = vld [vmem:[%s1461 + $0x121] sm:$0xff]
        %v1557 = vld [vmem:[%s1461 + $0x129] sm:$0xff]
        %v1558 = vld [vmem:[%s1461 + $0x139] sm:$0xff]
        %v1559 = vld [vmem:[%s1461 + $0x141] sm:$0xff]
        %v1560 = vld [vmem:[%s1461 + $0x151] sm:$0xff]
        %v1561 = vld [vmem:[%s1461 + $0x159] sm:$0xff]
        %v1562 = vld [vmem:[%s1461 + $0x169] sm:$0xff]
        %v1563 = vld [vmem:[%s1461 + $0x171] sm:$0xff]
        %v1565 = vlaneseq
        %v1566 = vshrl.u32 %v1565, 7
        %v1567 = vsub.s32 0, %v1566
        %v1568 = vrot.slane %v964, %v1567
        %v1570 = vmul.f32 %v1532, %v1568
        %v1571 = vmul.f32 %v1533, %v1568
        %v1572 = vmul.f32 %v1534, %v1568
        %v1573 = vmul.f32 %v1535, %v1568
        %v1574 = vmul.f32 %v1536, %v1568
        %v1575 = vmul.f32 %v1537, %v1568
        %v1576 = vmul.f32 %v1538, %v1568
        %v1577 = vmul.f32 %v1539, %v1568
        %v1578 = vmul.f32 %v1540, %v1568
        %v1579 = vmul.f32 %v1541, %v1568
        %v1580 = vmul.f32 %v1542, %v1568
        %v1581 = vmul.f32 %v1543, %v1568
        %v1582 = vmul.f32 %v1544, %v1568
        %v1583 = vmul.f32 %v1545, %v1568
        %v1584 = vmul.f32 %v1546, %v1568
        %v1585 = vmul.f32 %v1547, %v1568
        %v1586 = vmul.f32 %v1548, %v1568
        %v1587 = vmul.f32 %v1549, %v1568
        %v1588 = vmul.f32 %v1550, %v1568
        %v1589 = vmul.f32 %v1551, %v1568
        %v1590 = vmul.f32 %v1552, %v1568
        %v1591 = vmul.f32 %v1553, %v1568
        %v1592 = vmul.f32 %v1554, %v1568
        %v1593 = vmul.f32 %v1555, %v1568
        %v1594 = vmul.f32 %v1556, %v1568
        %v1595 = vmul.f32 %v1557, %v1568
        %v1596 = vmul.f32 %v1558, %v1568
        %v1597 = vmul.f32 %v1559, %v1568
        %v1598 = vmul.f32 %v1560, %v1568
        %v1599 = vmul.f32 %v1561, %v1568
        %v1600 = vmul.f32 %v1562, %v1568
        %v1601 = vmul.f32 %v1563, %v1568
        %v1602 = vadd.f32 %v1500, %v1570
        %v1603 = vadd.f32 %v1501, %v1571
        %v1604 = vadd.f32 %v1502, %v1572
        %v1605 = vadd.f32 %v1503, %v1573
        %v1606 = vadd.f32 %v1504, %v1574
        %v1607 = vadd.f32 %v1505, %v1575
        %v1608 = vadd.f32 %v1506, %v1576
        %v1609 = vadd.f32 %v1507, %v1577
        %v1610 = vadd.f32 %v1508, %v1578
        %v1611 = vadd.f32 %v1509, %v1579
        %v1612 = vadd.f32 %v1510, %v1580
        %v1613 = vadd.f32 %v1511, %v1581
        %v1614 = vadd.f32 %v1512, %v1582
        %v1615 = vadd.f32 %v1513, %v1583
        %v1616 = vadd.f32 %v1514, %v1584
        %v1617 = vadd.f32 %v1515, %v1585
        %v1618 = vadd.f32 %v1516, %v1586
        %v1619 = vadd.f32 %v1517, %v1587
        %v1620 = vadd.f32 %v1518, %v1588
        %v1621 = vadd.f32 %v1519, %v1589
        %v1622 = vadd.f32 %v1520, %v1590
        %v1623 = vadd.f32 %v1521, %v1591
        %v1624 = vadd.f32 %v1522, %v1592
        %v1625 = vadd.f32 %v1523, %v1593
        %v1626 = vadd.f32 %v1524, %v1594
        %v1627 = vadd.f32 %v1525, %v1595
        %v1628 = vadd.f32 %v1526, %v1596
        %v1629 = vadd.f32 %v1527, %v1597
        %v1630 = vadd.f32 %v1528, %v1598
        %v1631 = vadd.f32 %v1529, %v1599
        %v1632 = vadd.f32 %v1530, %v1600
        %v1633 = vadd.f32 %v1531, %v1601
        %v1634 = vld [vmem:[%s1461 + $0x2] sm:$0xff]
        %v1635 = vld [vmem:[%s1461 + $0xa] sm:$0xff]
        %v1636 = vld [vmem:[%s1461 + $0x1a] sm:$0xff]
        %v1637 = vld [vmem:[%s1461 + $0x22] sm:$0xff]
        %v1638 = vld [vmem:[%s1461 + $0x32] sm:$0xff]
        %v1639 = vld [vmem:[%s1461 + $0x3a] sm:$0xff]
        %v1640 = vld [vmem:[%s1461 + $0x4a] sm:$0xff]
        %v1641 = vld [vmem:[%s1461 + $0x52] sm:$0xff]
        %v1642 = vld [vmem:[%s1461 + $0x62] sm:$0xff]
        %v1643 = vld [vmem:[%s1461 + $0x6a] sm:$0xff]
        %v1644 = vld [vmem:[%s1461 + $0x7a] sm:$0xff]
        %v1645 = vld [vmem:[%s1461 + $0x82] sm:$0xff]
        %v1646 = vld [vmem:[%s1461 + $0x92] sm:$0xff]
        %v1647 = vld [vmem:[%s1461 + $0x9a] sm:$0xff]
        %v1648 = vld [vmem:[%s1461 + $0xaa] sm:$0xff]
        %v1649 = vld [vmem:[%s1461 + $0xb2] sm:$0xff]
        %v1650 = vld [vmem:[%s1461 + $0xc2] sm:$0xff]
        %v1651 = vld [vmem:[%s1461 + $0xca] sm:$0xff]
        %v1652 = vld [vmem:[%s1461 + $0xda] sm:$0xff]
        %v1653 = vld [vmem:[%s1461 + $0xe2] sm:$0xff]
        %v1654 = vld [vmem:[%s1461 + $0xf2] sm:$0xff]
        %v1655 = vld [vmem:[%s1461 + $0xfa] sm:$0xff]
        %v1656 = vld [vmem:[%s1461 + $0x10a] sm:$0xff]
        %v1657 = vld [vmem:[%s1461 + $0x112] sm:$0xff]
        %v1658 = vld [vmem:[%s1461 + $0x122] sm:$0xff]
        %v1659 = vld [vmem:[%s1461 + $0x12a] sm:$0xff]
        %v1660 = vld [vmem:[%s1461 + $0x13a] sm:$0xff]
        %v1661 = vld [vmem:[%s1461 + $0x142] sm:$0xff]
        %v1662 = vld [vmem:[%s1461 + $0x152] sm:$0xff]
        %v1663 = vld [vmem:[%s1461 + $0x15a] sm:$0xff]
        %v1664 = vld [vmem:[%s1461 + $0x16a] sm:$0xff]
        %v1665 = vld [vmem:[%s1461 + $0x172] sm:$0xff]
        %v1667 = vlaneseq
        %v1668 = vshrl.u32 %v1667, 7
        %v1669 = vsub.s32 0, %v1668
        %v1670 = vrot.slane %v965, %v1669
        %v1672 = vmul.f32 %v1634, %v1670
        %v1673 = vmul.f32 %v1635, %v1670
        %v1674 = vmul.f32 %v1636, %v1670
        %v1675 = vmul.f32 %v1637, %v1670
        %v1676 = vmul.f32 %v1638, %v1670
        %v1677 = vmul.f32 %v1639, %v1670
        %v1678 = vmul.f32 %v1640, %v1670
        %v1679 = vmul.f32 %v1641, %v1670
        %v1680 = vmul.f32 %v1642, %v1670
        %v1681 = vmul.f32 %v1643, %v1670
        %v1682 = vmul.f32 %v1644, %v1670
        %v1683 = vmul.f32 %v1645, %v1670
        %v1684 = vmul.f32 %v1646, %v1670
        %v1685 = vmul.f32 %v1647, %v1670
        %v1686 = vmul.f32 %v1648, %v1670
        %v1687 = vmul.f32 %v1649, %v1670
        %v1688 = vmul.f32 %v1650, %v1670
        %v1689 = vmul.f32 %v1651, %v1670
        %v1690 = vmul.f32 %v1652, %v1670
        %v1691 = vmul.f32 %v1653, %v1670
        %v1692 = vmul.f32 %v1654, %v1670
        %v1693 = vmul.f32 %v1655, %v1670
        %v1694 = vmul.f32 %v1656, %v1670
        %v1695 = vmul.f32 %v1657, %v1670
        %v1696 = vmul.f32 %v1658, %v1670
        %v1697 = vmul.f32 %v1659, %v1670
        %v1698 = vmul.f32 %v1660, %v1670
        %v1699 = vmul.f32 %v1661, %v1670
        %v1700 = vmul.f32 %v1662, %v1670
        %v1701 = vmul.f32 %v1663, %v1670
        %v1702 = vmul.f32 %v1664, %v1670
        %v1703 = vmul.f32 %v1665, %v1670
        %v1704 = vadd.f32 %v1602, %v1672
        %v1705 = vadd.f32 %v1603, %v1673
        %v1706 = vadd.f32 %v1604, %v1674
        %v1707 = vadd.f32 %v1605, %v1675
        %v1708 = vadd.f32 %v1606, %v1676
        %v1709 = vadd.f32 %v1607, %v1677
        %v1710 = vadd.f32 %v1608, %v1678
        %v1711 = vadd.f32 %v1609, %v1679
        %v1712 = vadd.f32 %v1610, %v1680
        %v1713 = vadd.f32 %v1611, %v1681
        %v1714 = vadd.f32 %v1612, %v1682
        %v1715 = vadd.f32 %v1613, %v1683
        %v1716 = vadd.f32 %v1614, %v1684
        %v1717 = vadd.f32 %v1615, %v1685
        %v1718 = vadd.f32 %v1616, %v1686
        %v1719 = vadd.f32 %v1617, %v1687
        %v1720 = vadd.f32 %v1618, %v1688
        %v1721 = vadd.f32 %v1619, %v1689
        %v1722 = vadd.f32 %v1620, %v1690
        %v1723 = vadd.f32 %v1621, %v1691
        %v1724 = vadd.f32 %v1622, %v1692
        %v1725 = vadd.f32 %v1623, %v1693
        %v1726 = vadd.f32 %v1624, %v1694
        %v1727 = vadd.f32 %v1625, %v1695
        %v1728 = vadd.f32 %v1626, %v1696
        %v1729 = vadd.f32 %v1627, %v1697
        %v1730 = vadd.f32 %v1628, %v1698
        %v1731 = vadd.f32 %v1629, %v1699
        %v1732 = vadd.f32 %v1630, %v1700
        %v1733 = vadd.f32 %v1631, %v1701
        %v1734 = vadd.f32 %v1632, %v1702
        %v1735 = vadd.f32 %v1633, %v1703
        %v1736 = vld [vmem:[%s1461 + $0x3] sm:$0xff]
        %v1737 = vld [vmem:[%s1461 + $0xb] sm:$0xff]
        %v1738 = vld [vmem:[%s1461 + $0x1b] sm:$0xff]
        %v1739 = vld [vmem:[%s1461 + $0x23] sm:$0xff]
        %v1740 = vld [vmem:[%s1461 + $0x33] sm:$0xff]
        %v1741 = vld [vmem:[%s1461 + $0x3b] sm:$0xff]
        %v1742 = vld [vmem:[%s1461 + $0x4b] sm:$0xff]
        %v1743 = vld [vmem:[%s1461 + $0x53] sm:$0xff]
        %v1744 = vld [vmem:[%s1461 + $0x63] sm:$0xff]
        %v1745 = vld [vmem:[%s1461 + $0x6b] sm:$0xff]
        %v1746 = vld [vmem:[%s1461 + $0x7b] sm:$0xff]
        %v1747 = vld [vmem:[%s1461 + $0x83] sm:$0xff]
        %v1748 = vld [vmem:[%s1461 + $0x93] sm:$0xff]
        %v1749 = vld [vmem:[%s1461 + $0x9b] sm:$0xff]
        %v1750 = vld [vmem:[%s1461 + $0xab] sm:$0xff]
        %v1751 = vld [vmem:[%s1461 + $0xb3] sm:$0xff]
        %v1752 = vld [vmem:[%s1461 + $0xc3] sm:$0xff]
        %v1753 = vld [vmem:[%s1461 + $0xcb] sm:$0xff]
        %v1754 = vld [vmem:[%s1461 + $0xdb] sm:$0xff]
        %v1755 = vld [vmem:[%s1461 + $0xe3] sm:$0xff]
        %v1756 = vld [vmem:[%s1461 + $0xf3] sm:$0xff]
        %v1757 = vld [vmem:[%s1461 + $0xfb] sm:$0xff]
        %v1758 = vld [vmem:[%s1461 + $0x10b] sm:$0xff]
        %v1759 = vld [vmem:[%s1461 + $0x113] sm:$0xff]
        %v1760 = vld [vmem:[%s1461 + $0x123] sm:$0xff]
        %v1761 = vld [vmem:[%s1461 + $0x12b] sm:$0xff]
        %v1762 = vld [vmem:[%s1461 + $0x13b] sm:$0xff]
        %v1763 = vld [vmem:[%s1461 + $0x143] sm:$0xff]
        %v1764 = vld [vmem:[%s1461 + $0x153] sm:$0xff]
        %v1765 = vld [vmem:[%s1461 + $0x15b] sm:$0xff]
        %v1766 = vld [vmem:[%s1461 + $0x16b] sm:$0xff]
        %v1767 = vld [vmem:[%s1461 + $0x173] sm:$0xff]
        %v1769 = vlaneseq
        %v1770 = vshrl.u32 %v1769, 7
        %v1771 = vsub.s32 0, %v1770
        %v1772 = vrot.slane %v966, %v1771
        %v1774 = vmul.f32 %v1736, %v1772
        %v1775 = vmul.f32 %v1737, %v1772
        %v1776 = vmul.f32 %v1738, %v1772
        %v1777 = vmul.f32 %v1739, %v1772
        %v1778 = vmul.f32 %v1740, %v1772
        %v1779 = vmul.f32 %v1741, %v1772
        %v1780 = vmul.f32 %v1742, %v1772
        %v1781 = vmul.f32 %v1743, %v1772
        %v1782 = vmul.f32 %v1744, %v1772
        %v1783 = vmul.f32 %v1745, %v1772
        %v1784 = vmul.f32 %v1746, %v1772
        %v1785 = vmul.f32 %v1747, %v1772
        %v1786 = vmul.f32 %v1748, %v1772
        %v1787 = vmul.f32 %v1749, %v1772
        %v1788 = vmul.f32 %v1750, %v1772
        %v1789 = vmul.f32 %v1751, %v1772
        %v1790 = vmul.f32 %v1752, %v1772
        %v1791 = vmul.f32 %v1753, %v1772
        %v1792 = vmul.f32 %v1754, %v1772
        %v1793 = vmul.f32 %v1755, %v1772
        %v1794 = vmul.f32 %v1756, %v1772
        %v1795 = vmul.f32 %v1757, %v1772
        %v1796 = vmul.f32 %v1758, %v1772
        %v1797 = vmul.f32 %v1759, %v1772
        %v1798 = vmul.f32 %v1760, %v1772
        %v1799 = vmul.f32 %v1761, %v1772
        %v1800 = vmul.f32 %v1762, %v1772
        %v1801 = vmul.f32 %v1763, %v1772
        %v1802 = vmul.f32 %v1764, %v1772
        %v1803 = vmul.f32 %v1765, %v1772
        %v1804 = vmul.f32 %v1766, %v1772
        %v1805 = vmul.f32 %v1767, %v1772
        %v1806 = vadd.f32 %v1704, %v1774
        %v1807 = vadd.f32 %v1705, %v1775
        %v1808 = vadd.f32 %v1706, %v1776
        %v1809 = vadd.f32 %v1707, %v1777
        %v1810 = vadd.f32 %v1708, %v1778
        %v1811 = vadd.f32 %v1709, %v1779
        %v1812 = vadd.f32 %v1710, %v1780
        %v1813 = vadd.f32 %v1711, %v1781
        %v1814 = vadd.f32 %v1712, %v1782
        %v1815 = vadd.f32 %v1713, %v1783
        %v1816 = vadd.f32 %v1714, %v1784
        %v1817 = vadd.f32 %v1715, %v1785
        %v1818 = vadd.f32 %v1716, %v1786
        %v1819 = vadd.f32 %v1717, %v1787
        %v1820 = vadd.f32 %v1718, %v1788
        %v1821 = vadd.f32 %v1719, %v1789
        %v1822 = vadd.f32 %v1720, %v1790
        %v1823 = vadd.f32 %v1721, %v1791
        %v1824 = vadd.f32 %v1722, %v1792
        %v1825 = vadd.f32 %v1723, %v1793
        %v1826 = vadd.f32 %v1724, %v1794
        %v1827 = vadd.f32 %v1725, %v1795
        %v1828 = vadd.f32 %v1726, %v1796
        %v1829 = vadd.f32 %v1727, %v1797
        %v1830 = vadd.f32 %v1728, %v1798
        %v1831 = vadd.f32 %v1729, %v1799
        %v1832 = vadd.f32 %v1730, %v1800
        %v1833 = vadd.f32 %v1731, %v1801
        %v1834 = vadd.f32 %v1732, %v1802
        %v1835 = vadd.f32 %v1733, %v1803
        %v1836 = vadd.f32 %v1734, %v1804
        %v1837 = vadd.f32 %v1735, %v1805
        %v1838 = vld [vmem:[%s1461 + $0x4] sm:$0xff]
        %v1839 = vld [vmem:[%s1461 + $0xc] sm:$0xff]
        %v1840 = vld [vmem:[%s1461 + $0x1c] sm:$0xff]
        %v1841 = vld [vmem:[%s1461 + $0x24] sm:$0xff]
        %v1842 = vld [vmem:[%s1461 + $0x34] sm:$0xff]
        %v1843 = vld [vmem:[%s1461 + $0x3c] sm:$0xff]
        %v1844 = vld [vmem:[%s1461 + $0x4c] sm:$0xff]
        %v1845 = vld [vmem:[%s1461 + $0x54] sm:$0xff]
        %v1846 = vld [vmem:[%s1461 + $0x64] sm:$0xff]
        %v1847 = vld [vmem:[%s1461 + $0x6c] sm:$0xff]
        %v1848 = vld [vmem:[%s1461 + $0x7c] sm:$0xff]
        %v1849 = vld [vmem:[%s1461 + $0x84] sm:$0xff]
        %v1850 = vld [vmem:[%s1461 + $0x94] sm:$0xff]
        %v1851 = vld [vmem:[%s1461 + $0x9c] sm:$0xff]
        %v1852 = vld [vmem:[%s1461 + $0xac] sm:$0xff]
        %v1853 = vld [vmem:[%s1461 + $0xb4] sm:$0xff]
        %v1854 = vld [vmem:[%s1461 + $0xc4] sm:$0xff]
        %v1855 = vld [vmem:[%s1461 + $0xcc] sm:$0xff]
        %v1856 = vld [vmem:[%s1461 + $0xdc] sm:$0xff]
        %v1857 = vld [vmem:[%s1461 + $0xe4] sm:$0xff]
        %v1858 = vld [vmem:[%s1461 + $0xf4] sm:$0xff]
        %v1859 = vld [vmem:[%s1461 + $0xfc] sm:$0xff]
        %v1860 = vld [vmem:[%s1461 + $0x10c] sm:$0xff]
        %v1861 = vld [vmem:[%s1461 + $0x114] sm:$0xff]
        %v1862 = vld [vmem:[%s1461 + $0x124] sm:$0xff]
        %v1863 = vld [vmem:[%s1461 + $0x12c] sm:$0xff]
        %v1864 = vld [vmem:[%s1461 + $0x13c] sm:$0xff]
        %v1865 = vld [vmem:[%s1461 + $0x144] sm:$0xff]
        %v1866 = vld [vmem:[%s1461 + $0x154] sm:$0xff]
        %v1867 = vld [vmem:[%s1461 + $0x15c] sm:$0xff]
        %v1868 = vld [vmem:[%s1461 + $0x16c] sm:$0xff]
        %v1869 = vld [vmem:[%s1461 + $0x174] sm:$0xff]
        %v1871 = vlaneseq
        %v1872 = vshrl.u32 %v1871, 7
        %v1873 = vsub.s32 0, %v1872
        %v1874 = vrot.slane %v967, %v1873
        %v1876 = vmul.f32 %v1838, %v1874
        %v1877 = vmul.f32 %v1839, %v1874
        %v1878 = vmul.f32 %v1840, %v1874
        %v1879 = vmul.f32 %v1841, %v1874
        %v1880 = vmul.f32 %v1842, %v1874
        %v1881 = vmul.f32 %v1843, %v1874
        %v1882 = vmul.f32 %v1844, %v1874
        %v1883 = vmul.f32 %v1845, %v1874
        %v1884 = vmul.f32 %v1846, %v1874
        %v1885 = vmul.f32 %v1847, %v1874
        %v1886 = vmul.f32 %v1848, %v1874
        %v1887 = vmul.f32 %v1849, %v1874
        %v1888 = vmul.f32 %v1850, %v1874
        %v1889 = vmul.f32 %v1851, %v1874
        %v1890 = vmul.f32 %v1852, %v1874
        %v1891 = vmul.f32 %v1853, %v1874
        %v1892 = vmul.f32 %v1854, %v1874
        %v1893 = vmul.f32 %v1855, %v1874
        %v1894 = vmul.f32 %v1856, %v1874
        %v1895 = vmul.f32 %v1857, %v1874
        %v1896 = vmul.f32 %v1858, %v1874
        %v1897 = vmul.f32 %v1859, %v1874
        %v1898 = vmul.f32 %v1860, %v1874
        %v1899 = vmul.f32 %v1861, %v1874
        %v1900 = vmul.f32 %v1862, %v1874
        %v1901 = vmul.f32 %v1863, %v1874
        %v1902 = vmul.f32 %v1864, %v1874
        %v1903 = vmul.f32 %v1865, %v1874
        %v1904 = vmul.f32 %v1866, %v1874
        %v1905 = vmul.f32 %v1867, %v1874
        %v1906 = vmul.f32 %v1868, %v1874
        %v1907 = vmul.f32 %v1869, %v1874
        %v1908 = vadd.f32 %v1806, %v1876
        %v1909 = vadd.f32 %v1807, %v1877
        %v1910 = vadd.f32 %v1808, %v1878
        %v1911 = vadd.f32 %v1809, %v1879
        %v1912 = vadd.f32 %v1810, %v1880
        %v1913 = vadd.f32 %v1811, %v1881
        %v1914 = vadd.f32 %v1812, %v1882
        %v1915 = vadd.f32 %v1813, %v1883
        %v1916 = vadd.f32 %v1814, %v1884
        %v1917 = vadd.f32 %v1815, %v1885
        %v1918 = vadd.f32 %v1816, %v1886
        %v1919 = vadd.f32 %v1817, %v1887
        %v1920 = vadd.f32 %v1818, %v1888
        %v1921 = vadd.f32 %v1819, %v1889
        %v1922 = vadd.f32 %v1820, %v1890
        %v1923 = vadd.f32 %v1821, %v1891
        %v1924 = vadd.f32 %v1822, %v1892
        %v1925 = vadd.f32 %v1823, %v1893
        %v1926 = vadd.f32 %v1824, %v1894
        %v1927 = vadd.f32 %v1825, %v1895
        %v1928 = vadd.f32 %v1826, %v1896
        %v1929 = vadd.f32 %v1827, %v1897
        %v1930 = vadd.f32 %v1828, %v1898
        %v1931 = vadd.f32 %v1829, %v1899
        %v1932 = vadd.f32 %v1830, %v1900
        %v1933 = vadd.f32 %v1831, %v1901
        %v1934 = vadd.f32 %v1832, %v1902
        %v1935 = vadd.f32 %v1833, %v1903
        %v1936 = vadd.f32 %v1834, %v1904
        %v1937 = vadd.f32 %v1835, %v1905
        %v1938 = vadd.f32 %v1836, %v1906
        %v1939 = vadd.f32 %v1837, %v1907
        %v1940 = vadd.f32 %v1429, %v1908
        %v1941 = vadd.f32 %v1430, %v1909
        %v1942 = vadd.f32 %v1431, %v1910
        %v1943 = vadd.f32 %v1432, %v1911
        %v1944 = vadd.f32 %v1433, %v1912
        %v1945 = vadd.f32 %v1434, %v1913
        %v1946 = vadd.f32 %v1435, %v1914
        %v1947 = vadd.f32 %v1436, %v1915
        %v1948 = vadd.f32 %v1437, %v1916
        %v1949 = vadd.f32 %v1438, %v1917
        %v1950 = vadd.f32 %v1439, %v1918
        %v1951 = vadd.f32 %v1440, %v1919
        %v1952 = vadd.f32 %v1441, %v1920
        %v1953 = vadd.f32 %v1442, %v1921
        %v1954 = vadd.f32 %v1443, %v1922
        %v1955 = vadd.f32 %v1444, %v1923
        %v1956 = vadd.f32 %v1445, %v1924
        %v1957 = vadd.f32 %v1446, %v1925
        %v1958 = vadd.f32 %v1447, %v1926
        %v1959 = vadd.f32 %v1448, %v1927
        %v1960 = vadd.f32 %v1449, %v1928
        %v1961 = vadd.f32 %v1450, %v1929
        %v1962 = vadd.f32 %v1451, %v1930
        %v1963 = vadd.f32 %v1452, %v1931
        %v1964 = vadd.f32 %v1453, %v1932
        %v1965 = vadd.f32 %v1454, %v1933
        %v1966 = vadd.f32 %v1455, %v1934
        %v1967 = vadd.f32 %v1456, %v1935
        %v1968 = vadd.f32 %v1457, %v1936
        %v1969 = vadd.f32 %v1458, %v1937
        %v1970 = vadd.f32 %v1459, %v1938
        %v1971 = vadd.f32 %v1460, %v1939
        %v1972 = vld [vmem:[%s925] sm:$0xff]
        %v1973 = vld [vmem:[%s925 + $0x8] sm:$0xff]
        %v1974 = vld [vmem:[%s925 + $0x18] sm:$0xff]
        %v1975 = vld [vmem:[%s925 + $0x20] sm:$0xff]
        %v1976 = vld [vmem:[%s925 + $0x30] sm:$0xff]
        %v1977 = vld [vmem:[%s925 + $0x38] sm:$0xff]
        %v1978 = vld [vmem:[%s925 + $0x48] sm:$0xff]
        %v1979 = vld [vmem:[%s925 + $0x50] sm:$0xff]
        %v1980 = vld [vmem:[%s925 + $0x60] sm:$0xff]
        %v1981 = vld [vmem:[%s925 + $0x68] sm:$0xff]
        %v1982 = vld [vmem:[%s925 + $0x78] sm:$0xff]
        %v1983 = vld [vmem:[%s925 + $0x80] sm:$0xff]
        %v1984 = vld [vmem:[%s925 + $0x90] sm:$0xff]
        %v1985 = vld [vmem:[%s925 + $0x98] sm:$0xff]
        %v1986 = vld [vmem:[%s925 + $0xa8] sm:$0xff]
        %v1987 = vld [vmem:[%s925 + $0xb0] sm:$0xff]
        %v1988 = vld [vmem:[%s925 + $0xc0] sm:$0xff]
        %v1989 = vld [vmem:[%s925 + $0xc8] sm:$0xff]
        %v1990 = vld [vmem:[%s925 + $0xd8] sm:$0xff]
        %v1991 = vld [vmem:[%s925 + $0xe0] sm:$0xff]
        %v1992 = vld [vmem:[%s925 + $0xf0] sm:$0xff]
        %v1993 = vld [vmem:[%s925 + $0xf8] sm:$0xff]
        %v1994 = vld [vmem:[%s925 + $0x108] sm:$0xff]
        %v1995 = vld [vmem:[%s925 + $0x110] sm:$0xff]
        %v1996 = vld [vmem:[%s925 + $0x120] sm:$0xff]
        %v1997 = vld [vmem:[%s925 + $0x128] sm:$0xff]
        %v1998 = vld [vmem:[%s925 + $0x138] sm:$0xff]
        %v1999 = vld [vmem:[%s925 + $0x140] sm:$0xff]
        %v2000 = vld [vmem:[%s925 + $0x150] sm:$0xff]
        %v2001 = vld [vmem:[%s925 + $0x158] sm:$0xff]
        %v2002 = vld [vmem:[%s925 + $0x168] sm:$0xff]
        %v2003 = vld [vmem:[%s925 + $0x170] sm:$0xff]
        %v2005 = vlaneseq
        %v2006 = vshrl.u32 %v2005, 7
        %v2007 = vsub.s32 0, %v2006
        %v2008 = vrot.slane %v968, %v2007
        %v2010 = vmul.f32 %v1972, %v2008
        %v2011 = vmul.f32 %v1973, %v2008
        %v2012 = vmul.f32 %v1974, %v2008
        %v2013 = vmul.f32 %v1975, %v2008
        %v2014 = vmul.f32 %v1976, %v2008
        %v2015 = vmul.f32 %v1977, %v2008
        %v2016 = vmul.f32 %v1978, %v2008
        %v2017 = vmul.f32 %v1979, %v2008
        %v2018 = vmul.f32 %v1980, %v2008
        %v2019 = vmul.f32 %v1981, %v2008
        %v2020 = vmul.f32 %v1982, %v2008
        %v2021 = vmul.f32 %v1983, %v2008
        %v2022 = vmul.f32 %v1984, %v2008
        %v2023 = vmul.f32 %v1985, %v2008
        %v2024 = vmul.f32 %v1986, %v2008
        %v2025 = vmul.f32 %v1987, %v2008
        %v2026 = vmul.f32 %v1988, %v2008
        %v2027 = vmul.f32 %v1989, %v2008
        %v2028 = vmul.f32 %v1990, %v2008
        %v2029 = vmul.f32 %v1991, %v2008
        %v2030 = vmul.f32 %v1992, %v2008
        %v2031 = vmul.f32 %v1993, %v2008
        %v2032 = vmul.f32 %v1994, %v2008
        %v2033 = vmul.f32 %v1995, %v2008
        %v2034 = vmul.f32 %v1996, %v2008
        %v2035 = vmul.f32 %v1997, %v2008
        %v2036 = vmul.f32 %v1998, %v2008
        %v2037 = vmul.f32 %v1999, %v2008
        %v2038 = vmul.f32 %v2000, %v2008
        %v2039 = vmul.f32 %v2001, %v2008
        %v2040 = vmul.f32 %v2002, %v2008
        %v2041 = vmul.f32 %v2003, %v2008
        %v2042 = vld [vmem:[%s925 + $0x1] sm:$0xff]
        %v2043 = vld [vmem:[%s925 + $0x9] sm:$0xff]
        %v2044 = vld [vmem:[%s925 + $0x19] sm:$0xff]
        %v2045 = vld [vmem:[%s925 + $0x21] sm:$0xff]
        %v2046 = vld [vmem:[%s925 + $0x31] sm:$0xff]
        %v2047 = vld [vmem:[%s925 + $0x39] sm:$0xff]
        %v2048 = vld [vmem:[%s925 + $0x49] sm:$0xff]
        %v2049 = vld [vmem:[%s925 + $0x51] sm:$0xff]
        %v2050 = vld [vmem:[%s925 + $0x61] sm:$0xff]
        %v2051 = vld [vmem:[%s925 + $0x69] sm:$0xff]
        %v2052 = vld [vmem:[%s925 + $0x79] sm:$0xff]
        %v2053 = vld [vmem:[%s925 + $0x81] sm:$0xff]
        %v2054 = vld [vmem:[%s925 + $0x91] sm:$0xff]
        %v2055 = vld [vmem:[%s925 + $0x99] sm:$0xff]
        %v2056 = vld [vmem:[%s925 + $0xa9] sm:$0xff]
        %v2057 = vld [vmem:[%s925 + $0xb1] sm:$0xff]
        %v2058 = vld [vmem:[%s925 + $0xc1] sm:$0xff]
        %v2059 = vld [vmem:[%s925 + $0xc9] sm:$0xff]
        %v2060 = vld [vmem:[%s925 + $0xd9] sm:$0xff]
        %v2061 = vld [vmem:[%s925 + $0xe1] sm:$0xff]
        %v2062 = vld [vmem:[%s925 + $0xf1] sm:$0xff]
        %v2063 = vld [vmem:[%s925 + $0xf9] sm:$0xff]
        %v2064 = vld [vmem:[%s925 + $0x109] sm:$0xff]
        %v2065 = vld [vmem:[%s925 + $0x111] sm:$0xff]
        %v2066 = vld [vmem:[%s925 + $0x121] sm:$0xff]
        %v2067 = vld [vmem:[%s925 + $0x129] sm:$0xff]
        %v2068 = vld [vmem:[%s925 + $0x139] sm:$0xff]
        %v2069 = vld [vmem:[%s925 + $0x141] sm:$0xff]
        %v2070 = vld [vmem:[%s925 + $0x151] sm:$0xff]
        %v2071 = vld [vmem:[%s925 + $0x159] sm:$0xff]
        %v2072 = vld [vmem:[%s925 + $0x169] sm:$0xff]
        %v2073 = vld [vmem:[%s925 + $0x171] sm:$0xff]
        %v2075 = vlaneseq
        %v2076 = vshrl.u32 %v2075, 7
        %v2077 = vsub.s32 0, %v2076
        %v2078 = vrot.slane %v969, %v2077
        %v2080 = vmul.f32 %v2042, %v2078
        %v2081 = vmul.f32 %v2043, %v2078
        %v2082 = vmul.f32 %v2044, %v2078
        %v2083 = vmul.f32 %v2045, %v2078
        %v2084 = vmul.f32 %v2046, %v2078
        %v2085 = vmul.f32 %v2047, %v2078
        %v2086 = vmul.f32 %v2048, %v2078
        %v2087 = vmul.f32 %v2049, %v2078
        %v2088 = vmul.f32 %v2050, %v2078
        %v2089 = vmul.f32 %v2051, %v2078
        %v2090 = vmul.f32 %v2052, %v2078
        %v2091 = vmul.f32 %v2053, %v2078
        %v2092 = vmul.f32 %v2054, %v2078
        %v2093 = vmul.f32 %v2055, %v2078
        %v2094 = vmul.f32 %v2056, %v2078
        %v2095 = vmul.f32 %v2057, %v2078
        %v2096 = vmul.f32 %v2058, %v2078
        %v2097 = vmul.f32 %v2059, %v2078
        %v2098 = vmul.f32 %v2060, %v2078
        %v2099 = vmul.f32 %v2061, %v2078
        %v2100 = vmul.f32 %v2062, %v2078
        %v2101 = vmul.f32 %v2063, %v2078
        %v2102 = vmul.f32 %v2064, %v2078
        %v2103 = vmul.f32 %v2065, %v2078
        %v2104 = vmul.f32 %v2066, %v2078
        %v2105 = vmul.f32 %v2067, %v2078
        %v2106 = vmul.f32 %v2068, %v2078
        %v2107 = vmul.f32 %v2069, %v2078
        %v2108 = vmul.f32 %v2070, %v2078
        %v2109 = vmul.f32 %v2071, %v2078
        %v2110 = vmul.f32 %v2072, %v2078
        %v2111 = vmul.f32 %v2073, %v2078
        %v2112 = vadd.f32 %v2010, %v2080
        %v2113 = vadd.f32 %v2011, %v2081
        %v2114 = vadd.f32 %v2012, %v2082
        %v2115 = vadd.f32 %v2013, %v2083
        %v2116 = vadd.f32 %v2014, %v2084
        %v2117 = vadd.f32 %v2015, %v2085
        %v2118 = vadd.f32 %v2016, %v2086
        %v2119 = vadd.f32 %v2017, %v2087
        %v2120 = vadd.f32 %v2018, %v2088
        %v2121 = vadd.f32 %v2019, %v2089
        %v2122 = vadd.f32 %v2020, %v2090
        %v2123 = vadd.f32 %v2021, %v2091
        %v2124 = vadd.f32 %v2022, %v2092
        %v2125 = vadd.f32 %v2023, %v2093
        %v2126 = vadd.f32 %v2024, %v2094
        %v2127 = vadd.f32 %v2025, %v2095
        %v2128 = vadd.f32 %v2026, %v2096
        %v2129 = vadd.f32 %v2027, %v2097
        %v2130 = vadd.f32 %v2028, %v2098
        %v2131 = vadd.f32 %v2029, %v2099
        %v2132 = vadd.f32 %v2030, %v2100
        %v2133 = vadd.f32 %v2031, %v2101
        %v2134 = vadd.f32 %v2032, %v2102
        %v2135 = vadd.f32 %v2033, %v2103
        %v2136 = vadd.f32 %v2034, %v2104
        %v2137 = vadd.f32 %v2035, %v2105
        %v2138 = vadd.f32 %v2036, %v2106
        %v2139 = vadd.f32 %v2037, %v2107
        %v2140 = vadd.f32 %v2038, %v2108
        %v2141 = vadd.f32 %v2039, %v2109
        %v2142 = vadd.f32 %v2040, %v2110
        %v2143 = vadd.f32 %v2041, %v2111
        %v2144 = vld [vmem:[%s925 + $0x2] sm:$0xff]
        %v2145 = vld [vmem:[%s925 + $0xa] sm:$0xff]
        %v2146 = vld [vmem:[%s925 + $0x1a] sm:$0xff]
        %v2147 = vld [vmem:[%s925 + $0x22] sm:$0xff]
        %v2148 = vld [vmem:[%s925 + $0x32] sm:$0xff]
        %v2149 = vld [vmem:[%s925 + $0x3a] sm:$0xff]
        %v2150 = vld [vmem:[%s925 + $0x4a] sm:$0xff]
        %v2151 = vld [vmem:[%s925 + $0x52] sm:$0xff]
        %v2152 = vld [vmem:[%s925 + $0x62] sm:$0xff]
        %v2153 = vld [vmem:[%s925 + $0x6a] sm:$0xff]
        %v2154 = vld [vmem:[%s925 + $0x7a] sm:$0xff]
        %v2155 = vld [vmem:[%s925 + $0x82] sm:$0xff]
        %v2156 = vld [vmem:[%s925 + $0x92] sm:$0xff]
        %v2157 = vld [vmem:[%s925 + $0x9a] sm:$0xff]
        %v2158 = vld [vmem:[%s925 + $0xaa] sm:$0xff]
        %v2159 = vld [vmem:[%s925 + $0xb2] sm:$0xff]
        %v2160 = vld [vmem:[%s925 + $0xc2] sm:$0xff]
        %v2161 = vld [vmem:[%s925 + $0xca] sm:$0xff]
        %v2162 = vld [vmem:[%s925 + $0xda] sm:$0xff]
        %v2163 = vld [vmem:[%s925 + $0xe2] sm:$0xff]
        %v2164 = vld [vmem:[%s925 + $0xf2] sm:$0xff]
        %v2165 = vld [vmem:[%s925 + $0xfa] sm:$0xff]
        %v2166 = vld [vmem:[%s925 + $0x10a] sm:$0xff]
        %v2167 = vld [vmem:[%s925 + $0x112] sm:$0xff]
        %v2168 = vld [vmem:[%s925 + $0x122] sm:$0xff]
        %v2169 = vld [vmem:[%s925 + $0x12a] sm:$0xff]
        %v2170 = vld [vmem:[%s925 + $0x13a] sm:$0xff]
        %v2171 = vld [vmem:[%s925 + $0x142] sm:$0xff]
        %v2172 = vld [vmem:[%s925 + $0x152] sm:$0xff]
        %v2173 = vld [vmem:[%s925 + $0x15a] sm:$0xff]
        %v2174 = vld [vmem:[%s925 + $0x16a] sm:$0xff]
        %v2175 = vld [vmem:[%s925 + $0x172] sm:$0xff]
        %v2177 = vlaneseq
        %v2178 = vshrl.u32 %v2177, 7
        %v2179 = vsub.s32 0, %v2178
        %v2180 = vrot.slane %v970, %v2179
        %v2182 = vmul.f32 %v2144, %v2180
        %v2183 = vmul.f32 %v2145, %v2180
        %v2184 = vmul.f32 %v2146, %v2180
        %v2185 = vmul.f32 %v2147, %v2180
        %v2186 = vmul.f32 %v2148, %v2180
        %v2187 = vmul.f32 %v2149, %v2180
        %v2188 = vmul.f32 %v2150, %v2180
        %v2189 = vmul.f32 %v2151, %v2180
        %v2190 = vmul.f32 %v2152, %v2180
        %v2191 = vmul.f32 %v2153, %v2180
        %v2192 = vmul.f32 %v2154, %v2180
        %v2193 = vmul.f32 %v2155, %v2180
        %v2194 = vmul.f32 %v2156, %v2180
        %v2195 = vmul.f32 %v2157, %v2180
        %v2196 = vmul.f32 %v2158, %v2180
        %v2197 = vmul.f32 %v2159, %v2180
        %v2198 = vmul.f32 %v2160, %v2180
        %v2199 = vmul.f32 %v2161, %v2180
        %v2200 = vmul.f32 %v2162, %v2180
        %v2201 = vmul.f32 %v2163, %v2180
        %v2202 = vmul.f32 %v2164, %v2180
        %v2203 = vmul.f32 %v2165, %v2180
        %v2204 = vmul.f32 %v2166, %v2180
        %v2205 = vmul.f32 %v2167, %v2180
        %v2206 = vmul.f32 %v2168, %v2180
        %v2207 = vmul.f32 %v2169, %v2180
        %v2208 = vmul.f32 %v2170, %v2180
        %v2209 = vmul.f32 %v2171, %v2180
        %v2210 = vmul.f32 %v2172, %v2180
        %v2211 = vmul.f32 %v2173, %v2180
        %v2212 = vmul.f32 %v2174, %v2180
        %v2213 = vmul.f32 %v2175, %v2180
        %v2214 = vadd.f32 %v2112, %v2182
        %v2215 = vadd.f32 %v2113, %v2183
        %v2216 = vadd.f32 %v2114, %v2184
        %v2217 = vadd.f32 %v2115, %v2185
        %v2218 = vadd.f32 %v2116, %v2186
        %v2219 = vadd.f32 %v2117, %v2187
        %v2220 = vadd.f32 %v2118, %v2188
        %v2221 = vadd.f32 %v2119, %v2189
        %v2222 = vadd.f32 %v2120, %v2190
        %v2223 = vadd.f32 %v2121, %v2191
        %v2224 = vadd.f32 %v2122, %v2192
        %v2225 = vadd.f32 %v2123, %v2193
        %v2226 = vadd.f32 %v2124, %v2194
        %v2227 = vadd.f32 %v2125, %v2195
        %v2228 = vadd.f32 %v2126, %v2196
        %v2229 = vadd.f32 %v2127, %v2197
        %v2230 = vadd.f32 %v2128, %v2198
        %v2231 = vadd.f32 %v2129, %v2199
        %v2232 = vadd.f32 %v2130, %v2200
        %v2233 = vadd.f32 %v2131, %v2201
        %v2234 = vadd.f32 %v2132, %v2202
        %v2235 = vadd.f32 %v2133, %v2203
        %v2236 = vadd.f32 %v2134, %v2204
        %v2237 = vadd.f32 %v2135, %v2205
        %v2238 = vadd.f32 %v2136, %v2206
        %v2239 = vadd.f32 %v2137, %v2207
        %v2240 = vadd.f32 %v2138, %v2208
        %v2241 = vadd.f32 %v2139, %v2209
        %v2242 = vadd.f32 %v2140, %v2210
        %v2243 = vadd.f32 %v2141, %v2211
        %v2244 = vadd.f32 %v2142, %v2212
        %v2245 = vadd.f32 %v2143, %v2213
        %v2246 = vld [vmem:[%s925 + $0x3] sm:$0xff]
        %v2247 = vld [vmem:[%s925 + $0xb] sm:$0xff]
        %v2248 = vld [vmem:[%s925 + $0x1b] sm:$0xff]
        %v2249 = vld [vmem:[%s925 + $0x23] sm:$0xff]
        %v2250 = vld [vmem:[%s925 + $0x33] sm:$0xff]
        %v2251 = vld [vmem:[%s925 + $0x3b] sm:$0xff]
        %v2252 = vld [vmem:[%s925 + $0x4b] sm:$0xff]
        %v2253 = vld [vmem:[%s925 + $0x53] sm:$0xff]
        %v2254 = vld [vmem:[%s925 + $0x63] sm:$0xff]
        %v2255 = vld [vmem:[%s925 + $0x6b] sm:$0xff]
        %v2256 = vld [vmem:[%s925 + $0x7b] sm:$0xff]
        %v2257 = vld [vmem:[%s925 + $0x83] sm:$0xff]
        %v2258 = vld [vmem:[%s925 + $0x93] sm:$0xff]
        %v2259 = vld [vmem:[%s925 + $0x9b] sm:$0xff]
        %v2260 = vld [vmem:[%s925 + $0xab] sm:$0xff]
        %v2261 = vld [vmem:[%s925 + $0xb3] sm:$0xff]
        %v2262 = vld [vmem:[%s925 + $0xc3] sm:$0xff]
        %v2263 = vld [vmem:[%s925 + $0xcb] sm:$0xff]
        %v2264 = vld [vmem:[%s925 + $0xdb] sm:$0xff]
        %v2265 = vld [vmem:[%s925 + $0xe3] sm:$0xff]
        %v2266 = vld [vmem:[%s925 + $0xf3] sm:$0xff]
        %v2267 = vld [vmem:[%s925 + $0xfb] sm:$0xff]
        %v2268 = vld [vmem:[%s925 + $0x10b] sm:$0xff]
        %v2269 = vld [vmem:[%s925 + $0x113] sm:$0xff]
        %v2270 = vld [vmem:[%s925 + $0x123] sm:$0xff]
        %v2271 = vld [vmem:[%s925 + $0x12b] sm:$0xff]
        %v2272 = vld [vmem:[%s925 + $0x13b] sm:$0xff]
        %v2273 = vld [vmem:[%s925 + $0x143] sm:$0xff]
        %v2274 = vld [vmem:[%s925 + $0x153] sm:$0xff]
        %v2275 = vld [vmem:[%s925 + $0x15b] sm:$0xff]
        %v2276 = vld [vmem:[%s925 + $0x16b] sm:$0xff]
        %v2277 = vld [vmem:[%s925 + $0x173] sm:$0xff]
        %v2279 = vlaneseq
        %v2280 = vshrl.u32 %v2279, 7
        %v2281 = vsub.s32 0, %v2280
        %v2282 = vrot.slane %v971, %v2281
        %v2284 = vmul.f32 %v2246, %v2282
        %v2285 = vmul.f32 %v2247, %v2282
        %v2286 = vmul.f32 %v2248, %v2282
        %v2287 = vmul.f32 %v2249, %v2282
        %v2288 = vmul.f32 %v2250, %v2282
        %v2289 = vmul.f32 %v2251, %v2282
        %v2290 = vmul.f32 %v2252, %v2282
        %v2291 = vmul.f32 %v2253, %v2282
        %v2292 = vmul.f32 %v2254, %v2282
        %v2293 = vmul.f32 %v2255, %v2282
        %v2294 = vmul.f32 %v2256, %v2282
        %v2295 = vmul.f32 %v2257, %v2282
        %v2296 = vmul.f32 %v2258, %v2282
        %v2297 = vmul.f32 %v2259, %v2282
        %v2298 = vmul.f32 %v2260, %v2282
        %v2299 = vmul.f32 %v2261, %v2282
        %v2300 = vmul.f32 %v2262, %v2282
        %v2301 = vmul.f32 %v2263, %v2282
        %v2302 = vmul.f32 %v2264, %v2282
        %v2303 = vmul.f32 %v2265, %v2282
        %v2304 = vmul.f32 %v2266, %v2282
        %v2305 = vmul.f32 %v2267, %v2282
        %v2306 = vmul.f32 %v2268, %v2282
        %v2307 = vmul.f32 %v2269, %v2282
        %v2308 = vmul.f32 %v2270, %v2282
        %v2309 = vmul.f32 %v2271, %v2282
        %v2310 = vmul.f32 %v2272, %v2282
        %v2311 = vmul.f32 %v2273, %v2282
        %v2312 = vmul.f32 %v2274, %v2282
        %v2313 = vmul.f32 %v2275, %v2282
        %v2314 = vmul.f32 %v2276, %v2282
        %v2315 = vmul.f32 %v2277, %v2282
        %v2316 = vadd.f32 %v2214, %v2284
        %v2317 = vadd.f32 %v2215, %v2285
        %v2318 = vadd.f32 %v2216, %v2286
        %v2319 = vadd.f32 %v2217, %v2287
        %v2320 = vadd.f32 %v2218, %v2288
        %v2321 = vadd.f32 %v2219, %v2289
        %v2322 = vadd.f32 %v2220, %v2290
        %v2323 = vadd.f32 %v2221, %v2291
        %v2324 = vadd.f32 %v2222, %v2292
        %v2325 = vadd.f32 %v2223, %v2293
        %v2326 = vadd.f32 %v2224, %v2294
        %v2327 = vadd.f32 %v2225, %v2295
        %v2328 = vadd.f32 %v2226, %v2296
        %v2329 = vadd.f32 %v2227, %v2297
        %v2330 = vadd.f32 %v2228, %v2298
        %v2331 = vadd.f32 %v2229, %v2299
        %v2332 = vadd.f32 %v2230, %v2300
        %v2333 = vadd.f32 %v2231, %v2301
        %v2334 = vadd.f32 %v2232, %v2302
        %v2335 = vadd.f32 %v2233, %v2303
        %v2336 = vadd.f32 %v2234, %v2304
        %v2337 = vadd.f32 %v2235, %v2305
        %v2338 = vadd.f32 %v2236, %v2306
        %v2339 = vadd.f32 %v2237, %v2307
        %v2340 = vadd.f32 %v2238, %v2308
        %v2341 = vadd.f32 %v2239, %v2309
        %v2342 = vadd.f32 %v2240, %v2310
        %v2343 = vadd.f32 %v2241, %v2311
        %v2344 = vadd.f32 %v2242, %v2312
        %v2345 = vadd.f32 %v2243, %v2313
        %v2346 = vadd.f32 %v2244, %v2314
        %v2347 = vadd.f32 %v2245, %v2315
        %v2348 = vld [vmem:[%s925 + $0x4] sm:$0xff]
        %v2349 = vld [vmem:[%s925 + $0xc] sm:$0xff]
        %v2350 = vld [vmem:[%s925 + $0x1c] sm:$0xff]
        %v2351 = vld [vmem:[%s925 + $0x24] sm:$0xff]
        %v2352 = vld [vmem:[%s925 + $0x34] sm:$0xff]
        %v2353 = vld [vmem:[%s925 + $0x3c] sm:$0xff]
        %v2354 = vld [vmem:[%s925 + $0x4c] sm:$0xff]
        %v2355 = vld [vmem:[%s925 + $0x54] sm:$0xff]
        %v2356 = vld [vmem:[%s925 + $0x64] sm:$0xff]
        %v2357 = vld [vmem:[%s925 + $0x6c] sm:$0xff]
        %v2358 = vld [vmem:[%s925 + $0x7c] sm:$0xff]
        %v2359 = vld [vmem:[%s925 + $0x84] sm:$0xff]
        %v2360 = vld [vmem:[%s925 + $0x94] sm:$0xff]
        %v2361 = vld [vmem:[%s925 + $0x9c] sm:$0xff]
        %v2362 = vld [vmem:[%s925 + $0xac] sm:$0xff]
        %v2363 = vld [vmem:[%s925 + $0xb4] sm:$0xff]
        %v2364 = vld [vmem:[%s925 + $0xc4] sm:$0xff]
        %v2365 = vld [vmem:[%s925 + $0xcc] sm:$0xff]
        %v2366 = vld [vmem:[%s925 + $0xdc] sm:$0xff]
        %v2367 = vld [vmem:[%s925 + $0xe4] sm:$0xff]
        %v2368 = vld [vmem:[%s925 + $0xf4] sm:$0xff]
        %v2369 = vld [vmem:[%s925 + $0xfc] sm:$0xff]
        %v2370 = vld [vmem:[%s925 + $0x10c] sm:$0xff]
        %v2371 = vld [vmem:[%s925 + $0x114] sm:$0xff]
        %v2372 = vld [vmem:[%s925 + $0x124] sm:$0xff]
        %v2373 = vld [vmem:[%s925 + $0x12c] sm:$0xff]
        %v2374 = vld [vmem:[%s925 + $0x13c] sm:$0xff]
        %v2375 = vld [vmem:[%s925 + $0x144] sm:$0xff]
        %v2376 = vld [vmem:[%s925 + $0x154] sm:$0xff]
        %v2377 = vld [vmem:[%s925 + $0x15c] sm:$0xff]
        %v2378 = vld [vmem:[%s925 + $0x16c] sm:$0xff]
        %v2379 = vld [vmem:[%s925 + $0x174] sm:$0xff]
        %v2381 = vlaneseq
        %v2382 = vshrl.u32 %v2381, 7
        %v2383 = vsub.s32 0, %v2382
        %v2384 = vrot.slane %v972, %v2383
        %v2386 = vmul.f32 %v2348, %v2384
        %v2387 = vmul.f32 %v2349, %v2384
        %v2388 = vmul.f32 %v2350, %v2384
        %v2389 = vmul.f32 %v2351, %v2384
        %v2390 = vmul.f32 %v2352, %v2384
        %v2391 = vmul.f32 %v2353, %v2384
        %v2392 = vmul.f32 %v2354, %v2384
        %v2393 = vmul.f32 %v2355, %v2384
        %v2394 = vmul.f32 %v2356, %v2384
        %v2395 = vmul.f32 %v2357, %v2384
        %v2396 = vmul.f32 %v2358, %v2384
        %v2397 = vmul.f32 %v2359, %v2384
        %v2398 = vmul.f32 %v2360, %v2384
        %v2399 = vmul.f32 %v2361, %v2384
        %v2400 = vmul.f32 %v2362, %v2384
        %v2401 = vmul.f32 %v2363, %v2384
        %v2402 = vmul.f32 %v2364, %v2384
        %v2403 = vmul.f32 %v2365, %v2384
        %v2404 = vmul.f32 %v2366, %v2384
        %v2405 = vmul.f32 %v2367, %v2384
        %v2406 = vmul.f32 %v2368, %v2384
        %v2407 = vmul.f32 %v2369, %v2384
        %v2408 = vmul.f32 %v2370, %v2384
        %v2409 = vmul.f32 %v2371, %v2384
        %v2410 = vmul.f32 %v2372, %v2384
        %v2411 = vmul.f32 %v2373, %v2384
        %v2412 = vmul.f32 %v2374, %v2384
        %v2413 = vmul.f32 %v2375, %v2384
        %v2414 = vmul.f32 %v2376, %v2384
        %v2415 = vmul.f32 %v2377, %v2384
        %v2416 = vmul.f32 %v2378, %v2384
        %v2417 = vmul.f32 %v2379, %v2384
        %v2418 = vadd.f32 %v2316, %v2386
        %v2419 = vadd.f32 %v2317, %v2387
        %v2420 = vadd.f32 %v2318, %v2388
        %v2421 = vadd.f32 %v2319, %v2389
        %v2422 = vadd.f32 %v2320, %v2390
        %v2423 = vadd.f32 %v2321, %v2391
        %v2424 = vadd.f32 %v2322, %v2392
        %v2425 = vadd.f32 %v2323, %v2393
        %v2426 = vadd.f32 %v2324, %v2394
        %v2427 = vadd.f32 %v2325, %v2395
        %v2428 = vadd.f32 %v2326, %v2396
        %v2429 = vadd.f32 %v2327, %v2397
        %v2430 = vadd.f32 %v2328, %v2398
        %v2431 = vadd.f32 %v2329, %v2399
        %v2432 = vadd.f32 %v2330, %v2400
        %v2433 = vadd.f32 %v2331, %v2401
        %v2434 = vadd.f32 %v2332, %v2402
        %v2435 = vadd.f32 %v2333, %v2403
        %v2436 = vadd.f32 %v2334, %v2404
        %v2437 = vadd.f32 %v2335, %v2405
        %v2438 = vadd.f32 %v2336, %v2406
        %v2439 = vadd.f32 %v2337, %v2407
        %v2440 = vadd.f32 %v2338, %v2408
        %v2441 = vadd.f32 %v2339, %v2409
        %v2442 = vadd.f32 %v2340, %v2410
        %v2443 = vadd.f32 %v2341, %v2411
        %v2444 = vadd.f32 %v2342, %v2412
        %v2445 = vadd.f32 %v2343, %v2413
        %v2446 = vadd.f32 %v2344, %v2414
        %v2447 = vadd.f32 %v2345, %v2415
        %v2448 = vadd.f32 %v2346, %v2416
        %v2449 = vadd.f32 %v2347, %v2417
        %v2450 = vadd.f32 %v1940, %v2418
        %v2451 = vadd.f32 %v1941, %v2419
        %v2452 = vadd.f32 %v1942, %v2420
        %v2453 = vadd.f32 %v1943, %v2421
        %v2454 = vadd.f32 %v1944, %v2422
        %v2455 = vadd.f32 %v1945, %v2423
        %v2456 = vadd.f32 %v1946, %v2424
        %v2457 = vadd.f32 %v1947, %v2425
        %v2458 = vadd.f32 %v1948, %v2426
        %v2459 = vadd.f32 %v1949, %v2427
        %v2460 = vadd.f32 %v1950, %v2428
        %v2461 = vadd.f32 %v1951, %v2429
        %v2462 = vadd.f32 %v1952, %v2430
        %v2463 = vadd.f32 %v1953, %v2431
        %v2464 = vadd.f32 %v1954, %v2432
        %v2465 = vadd.f32 %v1955, %v2433
        %v2466 = vadd.f32 %v1956, %v2434
        %v2467 = vadd.f32 %v1957, %v2435
        %v2468 = vadd.f32 %v1958, %v2436
        %v2469 = vadd.f32 %v1959, %v2437
        %v2470 = vadd.f32 %v1960, %v2438
        %v2471 = vadd.f32 %v1961, %v2439
        %v2472 = vadd.f32 %v1962, %v2440
        %v2473 = vadd.f32 %v1963, %v2441
        %v2474 = vadd.f32 %v1964, %v2442
        %v2475 = vadd.f32 %v1965, %v2443
        %v2476 = vadd.f32 %v1966, %v2444
        %v2477 = vadd.f32 %v1967, %v2445
        %v2478 = vadd.f32 %v1968, %v2446
        %v2479 = vadd.f32 %v1969, %v2447
        %v2480 = vadd.f32 %v1970, %v2448
        %v2481 = vadd.f32 %v1971, %v2449
        %s2482 = scalar_lea.vmem [#allocation2], 72
        %v2483 = vld [vmem:[%s2482] sm:$0xff]
        %v2484 = vld [vmem:[%s2482 + $0x8] sm:$0xff]
        %v2485 = vld [vmem:[%s2482 + $0x18] sm:$0xff]
        %v2486 = vld [vmem:[%s2482 + $0x20] sm:$0xff]
        %v2487 = vld [vmem:[%s2482 + $0x30] sm:$0xff]
        %v2488 = vld [vmem:[%s2482 + $0x38] sm:$0xff]
        %v2489 = vld [vmem:[%s2482 + $0x48] sm:$0xff]
        %v2490 = vld [vmem:[%s2482 + $0x50] sm:$0xff]
        %v2491 = vld [vmem:[%s2482 + $0x60] sm:$0xff]
        %v2492 = vld [vmem:[%s2482 + $0x68] sm:$0xff]
        %v2493 = vld [vmem:[%s2482 + $0x78] sm:$0xff]
        %v2494 = vld [vmem:[%s2482 + $0x80] sm:$0xff]
        %v2495 = vld [vmem:[%s2482 + $0x90] sm:$0xff]
        %v2496 = vld [vmem:[%s2482 + $0x98] sm:$0xff]
        %v2497 = vld [vmem:[%s2482 + $0xa8] sm:$0xff]
        %v2498 = vld [vmem:[%s2482 + $0xb0] sm:$0xff]
        %v2499 = vld [vmem:[%s2482 + $0xc0] sm:$0xff]
        %v2500 = vld [vmem:[%s2482 + $0xc8] sm:$0xff]
        %v2501 = vld [vmem:[%s2482 + $0xd8] sm:$0xff]
        %v2502 = vld [vmem:[%s2482 + $0xe0] sm:$0xff]
        %v2503 = vld [vmem:[%s2482 + $0xf0] sm:$0xff]
        %v2504 = vld [vmem:[%s2482 + $0xf8] sm:$0xff]
        %v2505 = vld [vmem:[%s2482 + $0x108] sm:$0xff]
        %v2506 = vld [vmem:[%s2482 + $0x110] sm:$0xff]
        %v2507 = vld [vmem:[%s2482 + $0x120] sm:$0xff]
        %v2508 = vld [vmem:[%s2482 + $0x128] sm:$0xff]
        %v2509 = vld [vmem:[%s2482 + $0x138] sm:$0xff]
        %v2510 = vld [vmem:[%s2482 + $0x140] sm:$0xff]
        %v2511 = vld [vmem:[%s2482 + $0x150] sm:$0xff]
        %v2512 = vld [vmem:[%s2482 + $0x158] sm:$0xff]
        %v2513 = vld [vmem:[%s2482 + $0x168] sm:$0xff]
        %v2514 = vld [vmem:[%s2482 + $0x170] sm:$0xff]
        %v2516 = vlaneseq
        %v2517 = vshrl.u32 %v2516, 7
        %v2518 = vsub.s32 0, %v2517
        %v2519 = vrot.slane %v973, %v2518
        %v2521 = vmul.f32 %v2483, %v2519
        %v2522 = vmul.f32 %v2484, %v2519
        %v2523 = vmul.f32 %v2485, %v2519
        %v2524 = vmul.f32 %v2486, %v2519
        %v2525 = vmul.f32 %v2487, %v2519
        %v2526 = vmul.f32 %v2488, %v2519
        %v2527 = vmul.f32 %v2489, %v2519
        %v2528 = vmul.f32 %v2490, %v2519
        %v2529 = vmul.f32 %v2491, %v2519
        %v2530 = vmul.f32 %v2492, %v2519
        %v2531 = vmul.f32 %v2493, %v2519
        %v2532 = vmul.f32 %v2494, %v2519
        %v2533 = vmul.f32 %v2495, %v2519
        %v2534 = vmul.f32 %v2496, %v2519
        %v2535 = vmul.f32 %v2497, %v2519
        %v2536 = vmul.f32 %v2498, %v2519
        %v2537 = vmul.f32 %v2499, %v2519
        %v2538 = vmul.f32 %v2500, %v2519
        %v2539 = vmul.f32 %v2501, %v2519
        %v2540 = vmul.f32 %v2502, %v2519
        %v2541 = vmul.f32 %v2503, %v2519
        %v2542 = vmul.f32 %v2504, %v2519
        %v2543 = vmul.f32 %v2505, %v2519
        %v2544 = vmul.f32 %v2506, %v2519
        %v2545 = vmul.f32 %v2507, %v2519
        %v2546 = vmul.f32 %v2508, %v2519
        %v2547 = vmul.f32 %v2509, %v2519
        %v2548 = vmul.f32 %v2510, %v2519
        %v2549 = vmul.f32 %v2511, %v2519
        %v2550 = vmul.f32 %v2512, %v2519
        %v2551 = vmul.f32 %v2513, %v2519
        %v2552 = vmul.f32 %v2514, %v2519
        %v2553 = vld [vmem:[%s2482 + $0x1] sm:$0xff]
        %v2554 = vld [vmem:[%s2482 + $0x9] sm:$0xff]
        %v2555 = vld [vmem:[%s2482 + $0x19] sm:$0xff]
        %v2556 = vld [vmem:[%s2482 + $0x21] sm:$0xff]
        %v2557 = vld [vmem:[%s2482 + $0x31] sm:$0xff]
        %v2558 = vld [vmem:[%s2482 + $0x39] sm:$0xff]
        %v2559 = vld [vmem:[%s2482 + $0x49] sm:$0xff]
        %v2560 = vld [vmem:[%s2482 + $0x51] sm:$0xff]
        %v2561 = vld [vmem:[%s2482 + $0x61] sm:$0xff]
        %v2562 = vld [vmem:[%s2482 + $0x69] sm:$0xff]
        %v2563 = vld [vmem:[%s2482 + $0x79] sm:$0xff]
        %v2564 = vld [vmem:[%s2482 + $0x81] sm:$0xff]
        %v2565 = vld [vmem:[%s2482 + $0x91] sm:$0xff]
        %v2566 = vld [vmem:[%s2482 + $0x99] sm:$0xff]
        %v2567 = vld [vmem:[%s2482 + $0xa9] sm:$0xff]
        %v2568 = vld [vmem:[%s2482 + $0xb1] sm:$0xff]
        %v2569 = vld [vmem:[%s2482 + $0xc1] sm:$0xff]
        %v2570 = vld [vmem:[%s2482 + $0xc9] sm:$0xff]
        %v2571 = vld [vmem:[%s2482 + $0xd9] sm:$0xff]
        %v2572 = vld [vmem:[%s2482 + $0xe1] sm:$0xff]
        %v2573 = vld [vmem:[%s2482 + $0xf1] sm:$0xff]
        %v2574 = vld [vmem:[%s2482 + $0xf9] sm:$0xff]
        %v2575 = vld [vmem:[%s2482 + $0x109] sm:$0xff]
        %v2576 = vld [vmem:[%s2482 + $0x111] sm:$0xff]
        %v2577 = vld [vmem:[%s2482 + $0x121] sm:$0xff]
        %v2578 = vld [vmem:[%s2482 + $0x129] sm:$0xff]
        %v2579 = vld [vmem:[%s2482 + $0x139] sm:$0xff]
        %v2580 = vld [vmem:[%s2482 + $0x141] sm:$0xff]
        %v2581 = vld [vmem:[%s2482 + $0x151] sm:$0xff]
        %v2582 = vld [vmem:[%s2482 + $0x159] sm:$0xff]
        %v2583 = vld [vmem:[%s2482 + $0x169] sm:$0xff]
        %v2584 = vld [vmem:[%s2482 + $0x171] sm:$0xff]
        %v2586 = vlaneseq
        %v2587 = vshrl.u32 %v2586, 7
        %v2588 = vsub.s32 0, %v2587
        %v2589 = vrot.slane %v974, %v2588
        %v2591 = vmul.f32 %v2553, %v2589
        %v2592 = vmul.f32 %v2554, %v2589
        %v2593 = vmul.f32 %v2555, %v2589
        %v2594 = vmul.f32 %v2556, %v2589
        %v2595 = vmul.f32 %v2557, %v2589
        %v2596 = vmul.f32 %v2558, %v2589
        %v2597 = vmul.f32 %v2559, %v2589
        %v2598 = vmul.f32 %v2560, %v2589
        %v2599 = vmul.f32 %v2561, %v2589
        %v2600 = vmul.f32 %v2562, %v2589
        %v2601 = vmul.f32 %v2563, %v2589
        %v2602 = vmul.f32 %v2564, %v2589
        %v2603 = vmul.f32 %v2565, %v2589
        %v2604 = vmul.f32 %v2566, %v2589
        %v2605 = vmul.f32 %v2567, %v2589
        %v2606 = vmul.f32 %v2568, %v2589
        %v2607 = vmul.f32 %v2569, %v2589
        %v2608 = vmul.f32 %v2570, %v2589
        %v2609 = vmul.f32 %v2571, %v2589
        %v2610 = vmul.f32 %v2572, %v2589
        %v2611 = vmul.f32 %v2573, %v2589
        %v2612 = vmul.f32 %v2574, %v2589
        %v2613 = vmul.f32 %v2575, %v2589
        %v2614 = vmul.f32 %v2576, %v2589
        %v2615 = vmul.f32 %v2577, %v2589
        %v2616 = vmul.f32 %v2578, %v2589
        %v2617 = vmul.f32 %v2579, %v2589
        %v2618 = vmul.f32 %v2580, %v2589
        %v2619 = vmul.f32 %v2581, %v2589
        %v2620 = vmul.f32 %v2582, %v2589
        %v2621 = vmul.f32 %v2583, %v2589
        %v2622 = vmul.f32 %v2584, %v2589
        %v2623 = vadd.f32 %v2521, %v2591
        %v2624 = vadd.f32 %v2522, %v2592
        %v2625 = vadd.f32 %v2523, %v2593
        %v2626 = vadd.f32 %v2524, %v2594
        %v2627 = vadd.f32 %v2525, %v2595
        %v2628 = vadd.f32 %v2526, %v2596
        %v2629 = vadd.f32 %v2527, %v2597
        %v2630 = vadd.f32 %v2528, %v2598
        %v2631 = vadd.f32 %v2529, %v2599
        %v2632 = vadd.f32 %v2530, %v2600
        %v2633 = vadd.f32 %v2531, %v2601
        %v2634 = vadd.f32 %v2532, %v2602
        %v2635 = vadd.f32 %v2533, %v2603
        %v2636 = vadd.f32 %v2534, %v2604
        %v2637 = vadd.f32 %v2535, %v2605
        %v2638 = vadd.f32 %v2536, %v2606
        %v2639 = vadd.f32 %v2537, %v2607
        %v2640 = vadd.f32 %v2538, %v2608
        %v2641 = vadd.f32 %v2539, %v2609
        %v2642 = vadd.f32 %v2540, %v2610
        %v2643 = vadd.f32 %v2541, %v2611
        %v2644 = vadd.f32 %v2542, %v2612
        %v2645 = vadd.f32 %v2543, %v2613
        %v2646 = vadd.f32 %v2544, %v2614
        %v2647 = vadd.f32 %v2545, %v2615
        %v2648 = vadd.f32 %v2546, %v2616
        %v2649 = vadd.f32 %v2547, %v2617
        %v2650 = vadd.f32 %v2548, %v2618
        %v2651 = vadd.f32 %v2549, %v2619
        %v2652 = vadd.f32 %v2550, %v2620
        %v2653 = vadd.f32 %v2551, %v2621
        %v2654 = vadd.f32 %v2552, %v2622
        %v2655 = vld [vmem:[%s2482 + $0x2] sm:$0xff]
        %v2656 = vld [vmem:[%s2482 + $0xa] sm:$0xff]
        %v2657 = vld [vmem:[%s2482 + $0x1a] sm:$0xff]
        %v2658 = vld [vmem:[%s2482 + $0x22] sm:$0xff]
        %v2659 = vld [vmem:[%s2482 + $0x32] sm:$0xff]
        %v2660 = vld [vmem:[%s2482 + $0x3a] sm:$0xff]
        %v2661 = vld [vmem:[%s2482 + $0x4a] sm:$0xff]
        %v2662 = vld [vmem:[%s2482 + $0x52] sm:$0xff]
        %v2663 = vld [vmem:[%s2482 + $0x62] sm:$0xff]
        %v2664 = vld [vmem:[%s2482 + $0x6a] sm:$0xff]
        %v2665 = vld [vmem:[%s2482 + $0x7a] sm:$0xff]
        %v2666 = vld [vmem:[%s2482 + $0x82] sm:$0xff]
        %v2667 = vld [vmem:[%s2482 + $0x92] sm:$0xff]
        %v2668 = vld [vmem:[%s2482 + $0x9a] sm:$0xff]
        %v2669 = vld [vmem:[%s2482 + $0xaa] sm:$0xff]
        %v2670 = vld [vmem:[%s2482 + $0xb2] sm:$0xff]
        %v2671 = vld [vmem:[%s2482 + $0xc2] sm:$0xff]
        %v2672 = vld [vmem:[%s2482 + $0xca] sm:$0xff]
        %v2673 = vld [vmem:[%s2482 + $0xda] sm:$0xff]
        %v2674 = vld [vmem:[%s2482 + $0xe2] sm:$0xff]
        %v2675 = vld [vmem:[%s2482 + $0xf2] sm:$0xff]
        %v2676 = vld [vmem:[%s2482 + $0xfa] sm:$0xff]
        %v2677 = vld [vmem:[%s2482 + $0x10a] sm:$0xff]
        %v2678 = vld [vmem:[%s2482 + $0x112] sm:$0xff]
        %v2679 = vld [vmem:[%s2482 + $0x122] sm:$0xff]
        %v2680 = vld [vmem:[%s2482 + $0x12a] sm:$0xff]
        %v2681 = vld [vmem:[%s2482 + $0x13a] sm:$0xff]
        %v2682 = vld [vmem:[%s2482 + $0x142] sm:$0xff]
        %v2683 = vld [vmem:[%s2482 + $0x152] sm:$0xff]
        %v2684 = vld [vmem:[%s2482 + $0x15a] sm:$0xff]
        %v2685 = vld [vmem:[%s2482 + $0x16a] sm:$0xff]
        %v2686 = vld [vmem:[%s2482 + $0x172] sm:$0xff]
        %v2688 = vlaneseq
        %v2689 = vshrl.u32 %v2688, 7
        %v2690 = vsub.s32 0, %v2689
        %v2691 = vrot.slane %v975, %v2690
        %v2693 = vmul.f32 %v2655, %v2691
        %v2694 = vmul.f32 %v2656, %v2691
        %v2695 = vmul.f32 %v2657, %v2691
        %v2696 = vmul.f32 %v2658, %v2691
        %v2697 = vmul.f32 %v2659, %v2691
        %v2698 = vmul.f32 %v2660, %v2691
        %v2699 = vmul.f32 %v2661, %v2691
        %v2700 = vmul.f32 %v2662, %v2691
        %v2701 = vmul.f32 %v2663, %v2691
        %v2702 = vmul.f32 %v2664, %v2691
        %v2703 = vmul.f32 %v2665, %v2691
        %v2704 = vmul.f32 %v2666, %v2691
        %v2705 = vmul.f32 %v2667, %v2691
        %v2706 = vmul.f32 %v2668, %v2691
        %v2707 = vmul.f32 %v2669, %v2691
        %v2708 = vmul.f32 %v2670, %v2691
        %v2709 = vmul.f32 %v2671, %v2691
        %v2710 = vmul.f32 %v2672, %v2691
        %v2711 = vmul.f32 %v2673, %v2691
        %v2712 = vmul.f32 %v2674, %v2691
        %v2713 = vmul.f32 %v2675, %v2691
        %v2714 = vmul.f32 %v2676, %v2691
        %v2715 = vmul.f32 %v2677, %v2691
        %v2716 = vmul.f32 %v2678, %v2691
        %v2717 = vmul.f32 %v2679, %v2691
        %v2718 = vmul.f32 %v2680, %v2691
        %v2719 = vmul.f32 %v2681, %v2691
        %v2720 = vmul.f32 %v2682, %v2691
        %v2721 = vmul.f32 %v2683, %v2691
        %v2722 = vmul.f32 %v2684, %v2691
        %v2723 = vmul.f32 %v2685, %v2691
        %v2724 = vmul.f32 %v2686, %v2691
        %v2725 = vadd.f32 %v2623, %v2693
        %v2726 = vadd.f32 %v2624, %v2694
        %v2727 = vadd.f32 %v2625, %v2695
        %v2728 = vadd.f32 %v2626, %v2696
        %v2729 = vadd.f32 %v2627, %v2697
        %v2730 = vadd.f32 %v2628, %v2698
        %v2731 = vadd.f32 %v2629, %v2699
        %v2732 = vadd.f32 %v2630, %v2700
        %v2733 = vadd.f32 %v2631, %v2701
        %v2734 = vadd.f32 %v2632, %v2702
        %v2735 = vadd.f32 %v2633, %v2703
        %v2736 = vadd.f32 %v2634, %v2704
        %v2737 = vadd.f32 %v2635, %v2705
        %v2738 = vadd.f32 %v2636, %v2706
        %v2739 = vadd.f32 %v2637, %v2707
        %v2740 = vadd.f32 %v2638, %v2708
        %v2741 = vadd.f32 %v2639, %v2709
        %v2742 = vadd.f32 %v2640, %v2710
        %v2743 = vadd.f32 %v2641, %v2711
        %v2744 = vadd.f32 %v2642, %v2712
        %v2745 = vadd.f32 %v2643, %v2713
        %v2746 = vadd.f32 %v2644, %v2714
        %v2747 = vadd.f32 %v2645, %v2715
        %v2748 = vadd.f32 %v2646, %v2716
        %v2749 = vadd.f32 %v2647, %v2717
        %v2750 = vadd.f32 %v2648, %v2718
        %v2751 = vadd.f32 %v2649, %v2719
        %v2752 = vadd.f32 %v2650, %v2720
        %v2753 = vadd.f32 %v2651, %v2721
        %v2754 = vadd.f32 %v2652, %v2722
        %v2755 = vadd.f32 %v2653, %v2723
        %v2756 = vadd.f32 %v2654, %v2724
        %v2757 = vld [vmem:[%s2482 + $0x3] sm:$0xff]
        %v2758 = vld [vmem:[%s2482 + $0xb] sm:$0xff]
        %v2759 = vld [vmem:[%s2482 + $0x1b] sm:$0xff]
        %v2760 = vld [vmem:[%s2482 + $0x23] sm:$0xff]
        %v2761 = vld [vmem:[%s2482 + $0x33] sm:$0xff]
        %v2762 = vld [vmem:[%s2482 + $0x3b] sm:$0xff]
        %v2763 = vld [vmem:[%s2482 + $0x4b] sm:$0xff]
        %v2764 = vld [vmem:[%s2482 + $0x53] sm:$0xff]
        %v2765 = vld [vmem:[%s2482 + $0x63] sm:$0xff]
        %v2766 = vld [vmem:[%s2482 + $0x6b] sm:$0xff]
        %v2767 = vld [vmem:[%s2482 + $0x7b] sm:$0xff]
        %v2768 = vld [vmem:[%s2482 + $0x83] sm:$0xff]
        %v2769 = vld [vmem:[%s2482 + $0x93] sm:$0xff]
        %v2770 = vld [vmem:[%s2482 + $0x9b] sm:$0xff]
        %v2771 = vld [vmem:[%s2482 + $0xab] sm:$0xff]
        %v2772 = vld [vmem:[%s2482 + $0xb3] sm:$0xff]
        %v2773 = vld [vmem:[%s2482 + $0xc3] sm:$0xff]
        %v2774 = vld [vmem:[%s2482 + $0xcb] sm:$0xff]
        %v2775 = vld [vmem:[%s2482 + $0xdb] sm:$0xff]
        %v2776 = vld [vmem:[%s2482 + $0xe3] sm:$0xff]
        %v2777 = vld [vmem:[%s2482 + $0xf3] sm:$0xff]
        %v2778 = vld [vmem:[%s2482 + $0xfb] sm:$0xff]
        %v2779 = vld [vmem:[%s2482 + $0x10b] sm:$0xff]
        %v2780 = vld [vmem:[%s2482 + $0x113] sm:$0xff]
        %v2781 = vld [vmem:[%s2482 + $0x123] sm:$0xff]
        %v2782 = vld [vmem:[%s2482 + $0x12b] sm:$0xff]
        %v2783 = vld [vmem:[%s2482 + $0x13b] sm:$0xff]
        %v2784 = vld [vmem:[%s2482 + $0x143] sm:$0xff]
        %v2785 = vld [vmem:[%s2482 + $0x153] sm:$0xff]
        %v2786 = vld [vmem:[%s2482 + $0x15b] sm:$0xff]
        %v2787 = vld [vmem:[%s2482 + $0x16b] sm:$0xff]
        %v2788 = vld [vmem:[%s2482 + $0x173] sm:$0xff]
        %v2790 = vlaneseq
        %v2791 = vshrl.u32 %v2790, 7
        %v2792 = vsub.s32 0, %v2791
        %v2793 = vrot.slane %v976, %v2792
        %v2795 = vmul.f32 %v2757, %v2793
        %v2796 = vmul.f32 %v2758, %v2793
        %v2797 = vmul.f32 %v2759, %v2793
        %v2798 = vmul.f32 %v2760, %v2793
        %v2799 = vmul.f32 %v2761, %v2793
        %v2800 = vmul.f32 %v2762, %v2793
        %v2801 = vmul.f32 %v2763, %v2793
        %v2802 = vmul.f32 %v2764, %v2793
        %v2803 = vmul.f32 %v2765, %v2793
        %v2804 = vmul.f32 %v2766, %v2793
        %v2805 = vmul.f32 %v2767, %v2793
        %v2806 = vmul.f32 %v2768, %v2793
        %v2807 = vmul.f32 %v2769, %v2793
        %v2808 = vmul.f32 %v2770, %v2793
        %v2809 = vmul.f32 %v2771, %v2793
        %v2810 = vmul.f32 %v2772, %v2793
        %v2811 = vmul.f32 %v2773, %v2793
        %v2812 = vmul.f32 %v2774, %v2793
        %v2813 = vmul.f32 %v2775, %v2793
        %v2814 = vmul.f32 %v2776, %v2793
        %v2815 = vmul.f32 %v2777, %v2793
        %v2816 = vmul.f32 %v2778, %v2793
        %v2817 = vmul.f32 %v2779, %v2793
        %v2818 = vmul.f32 %v2780, %v2793
        %v2819 = vmul.f32 %v2781, %v2793
        %v2820 = vmul.f32 %v2782, %v2793
        %v2821 = vmul.f32 %v2783, %v2793
        %v2822 = vmul.f32 %v2784, %v2793
        %v2823 = vmul.f32 %v2785, %v2793
        %v2824 = vmul.f32 %v2786, %v2793
        %v2825 = vmul.f32 %v2787, %v2793
        %v2826 = vmul.f32 %v2788, %v2793
        %v2827 = vadd.f32 %v2725, %v2795
        %v2828 = vadd.f32 %v2726, %v2796
        %v2829 = vadd.f32 %v2727, %v2797
        %v2830 = vadd.f32 %v2728, %v2798
        %v2831 = vadd.f32 %v2729, %v2799
        %v2832 = vadd.f32 %v2730, %v2800
        %v2833 = vadd.f32 %v2731, %v2801
        %v2834 = vadd.f32 %v2732, %v2802
        %v2835 = vadd.f32 %v2733, %v2803
        %v2836 = vadd.f32 %v2734, %v2804
        %v2837 = vadd.f32 %v2735, %v2805
        %v2838 = vadd.f32 %v2736, %v2806
        %v2839 = vadd.f32 %v2737, %v2807
        %v2840 = vadd.f32 %v2738, %v2808
        %v2841 = vadd.f32 %v2739, %v2809
        %v2842 = vadd.f32 %v2740, %v2810
        %v2843 = vadd.f32 %v2741, %v2811
        %v2844 = vadd.f32 %v2742, %v2812
        %v2845 = vadd.f32 %v2743, %v2813
        %v2846 = vadd.f32 %v2744, %v2814
        %v2847 = vadd.f32 %v2745, %v2815
        %v2848 = vadd.f32 %v2746, %v2816
        %v2849 = vadd.f32 %v2747, %v2817
        %v2850 = vadd.f32 %v2748, %v2818
        %v2851 = vadd.f32 %v2749, %v2819
        %v2852 = vadd.f32 %v2750, %v2820
        %v2853 = vadd.f32 %v2751, %v2821
        %v2854 = vadd.f32 %v2752, %v2822
        %v2855 = vadd.f32 %v2753, %v2823
        %v2856 = vadd.f32 %v2754, %v2824
        %v2857 = vadd.f32 %v2755, %v2825
        %v2858 = vadd.f32 %v2756, %v2826
        %v2859 = vld [vmem:[%s2482 + $0x4] sm:$0xff]
        %v2860 = vld [vmem:[%s2482 + $0xc] sm:$0xff]
        %v2861 = vld [vmem:[%s2482 + $0x1c] sm:$0xff]
        %v2862 = vld [vmem:[%s2482 + $0x24] sm:$0xff]
        %v2863 = vld [vmem:[%s2482 + $0x34] sm:$0xff]
        %v2864 = vld [vmem:[%s2482 + $0x3c] sm:$0xff]
        %v2865 = vld [vmem:[%s2482 + $0x4c] sm:$0xff]
        %v2866 = vld [vmem:[%s2482 + $0x54] sm:$0xff]
        %v2867 = vld [vmem:[%s2482 + $0x64] sm:$0xff]
        %v2868 = vld [vmem:[%s2482 + $0x6c] sm:$0xff]
        %v2869 = vld [vmem:[%s2482 + $0x7c] sm:$0xff]
        %v2870 = vld [vmem:[%s2482 + $0x84] sm:$0xff]
        %v2871 = vld [vmem:[%s2482 + $0x94] sm:$0xff]
        %v2872 = vld [vmem:[%s2482 + $0x9c] sm:$0xff]
        %v2873 = vld [vmem:[%s2482 + $0xac] sm:$0xff]
        %v2874 = vld [vmem:[%s2482 + $0xb4] sm:$0xff]
        %v2875 = vld [vmem:[%s2482 + $0xc4] sm:$0xff]
        %v2876 = vld [vmem:[%s2482 + $0xcc] sm:$0xff]
        %v2877 = vld [vmem:[%s2482 + $0xdc] sm:$0xff]
        %v2878 = vld [vmem:[%s2482 + $0xe4] sm:$0xff]
        %v2879 = vld [vmem:[%s2482 + $0xf4] sm:$0xff]
        %v2880 = vld [vmem:[%s2482 + $0xfc] sm:$0xff]
        %v2881 = vld [vmem:[%s2482 + $0x10c] sm:$0xff]
        %v2882 = vld [vmem:[%s2482 + $0x114] sm:$0xff]
        %v2883 = vld [vmem:[%s2482 + $0x124] sm:$0xff]
        %v2884 = vld [vmem:[%s2482 + $0x12c] sm:$0xff]
        %v2885 = vld [vmem:[%s2482 + $0x13c] sm:$0xff]
        %v2886 = vld [vmem:[%s2482 + $0x144] sm:$0xff]
        %v2887 = vld [vmem:[%s2482 + $0x154] sm:$0xff]
        %v2888 = vld [vmem:[%s2482 + $0x15c] sm:$0xff]
        %v2889 = vld [vmem:[%s2482 + $0x16c] sm:$0xff]
        %v2890 = vld [vmem:[%s2482 + $0x174] sm:$0xff]
        %v2892 = vlaneseq
        %v2893 = vshrl.u32 %v2892, 7
        %v2894 = vsub.s32 0, %v2893
        %v2895 = vrot.slane %v977, %v2894
        %v2897 = vmul.f32 %v2859, %v2895
        %v2898 = vmul.f32 %v2860, %v2895
        %v2899 = vmul.f32 %v2861, %v2895
        %v2900 = vmul.f32 %v2862, %v2895
        %v2901 = vmul.f32 %v2863, %v2895
        %v2902 = vmul.f32 %v2864, %v2895
        %v2903 = vmul.f32 %v2865, %v2895
        %v2904 = vmul.f32 %v2866, %v2895
        %v2905 = vmul.f32 %v2867, %v2895
        %v2906 = vmul.f32 %v2868, %v2895
        %v2907 = vmul.f32 %v2869, %v2895
        %v2908 = vmul.f32 %v2870, %v2895
        %v2909 = vmul.f32 %v2871, %v2895
        %v2910 = vmul.f32 %v2872, %v2895
        %v2911 = vmul.f32 %v2873, %v2895
        %v2912 = vmul.f32 %v2874, %v2895
        %v2913 = vmul.f32 %v2875, %v2895
        %v2914 = vmul.f32 %v2876, %v2895
        %v2915 = vmul.f32 %v2877, %v2895
        %v2916 = vmul.f32 %v2878, %v2895
        %v2917 = vmul.f32 %v2879, %v2895
        %v2918 = vmul.f32 %v2880, %v2895
        %v2919 = vmul.f32 %v2881, %v2895
        %v2920 = vmul.f32 %v2882, %v2895
        %v2921 = vmul.f32 %v2883, %v2895
        %v2922 = vmul.f32 %v2884, %v2895
        %v2923 = vmul.f32 %v2885, %v2895
        %v2924 = vmul.f32 %v2886, %v2895
        %v2925 = vmul.f32 %v2887, %v2895
        %v2926 = vmul.f32 %v2888, %v2895
        %v2927 = vmul.f32 %v2889, %v2895
        %v2928 = vmul.f32 %v2890, %v2895
        %v2929 = vadd.f32 %v2827, %v2897
        %v2930 = vadd.f32 %v2828, %v2898
        %v2931 = vadd.f32 %v2829, %v2899
        %v2932 = vadd.f32 %v2830, %v2900
        %v2933 = vadd.f32 %v2831, %v2901
        %v2934 = vadd.f32 %v2832, %v2902
        %v2935 = vadd.f32 %v2833, %v2903
        %v2936 = vadd.f32 %v2834, %v2904
        %v2937 = vadd.f32 %v2835, %v2905
        %v2938 = vadd.f32 %v2836, %v2906
        %v2939 = vadd.f32 %v2837, %v2907
        %v2940 = vadd.f32 %v2838, %v2908
        %v2941 = vadd.f32 %v2839, %v2909
        %v2942 = vadd.f32 %v2840, %v2910
        %v2943 = vadd.f32 %v2841, %v2911
        %v2944 = vadd.f32 %v2842, %v2912
        %v2945 = vadd.f32 %v2843, %v2913
        %v2946 = vadd.f32 %v2844, %v2914
        %v2947 = vadd.f32 %v2845, %v2915
        %v2948 = vadd.f32 %v2846, %v2916
        %v2949 = vadd.f32 %v2847, %v2917
        %v2950 = vadd.f32 %v2848, %v2918
        %v2951 = vadd.f32 %v2849, %v2919
        %v2952 = vadd.f32 %v2850, %v2920
        %v2953 = vadd.f32 %v2851, %v2921
        %v2954 = vadd.f32 %v2852, %v2922
        %v2955 = vadd.f32 %v2853, %v2923
        %v2956 = vadd.f32 %v2854, %v2924
        %v2957 = vadd.f32 %v2855, %v2925
        %v2958 = vadd.f32 %v2856, %v2926
        %v2959 = vadd.f32 %v2857, %v2927
        %v2960 = vadd.f32 %v2858, %v2928
        %v2961 = vadd.f32 %v2450, %v2929
        %v2962 = vadd.f32 %v2451, %v2930
        %v2963 = vadd.f32 %v2452, %v2931
        %v2964 = vadd.f32 %v2453, %v2932
        %v2965 = vadd.f32 %v2454, %v2933
        %v2966 = vadd.f32 %v2455, %v2934
        %v2967 = vadd.f32 %v2456, %v2935
        %v2968 = vadd.f32 %v2457, %v2936
        %v2969 = vadd.f32 %v2458, %v2937
        %v2970 = vadd.f32 %v2459, %v2938
        %v2971 = vadd.f32 %v2460, %v2939
        %v2972 = vadd.f32 %v2461, %v2940
        %v2973 = vadd.f32 %v2462, %v2941
        %v2974 = vadd.f32 %v2463, %v2942
        %v2975 = vadd.f32 %v2464, %v2943
        %v2976 = vadd.f32 %v2465, %v2944
        %v2977 = vadd.f32 %v2466, %v2945
        %v2978 = vadd.f32 %v2467, %v2946
        %v2979 = vadd.f32 %v2468, %v2947
        %v2980 = vadd.f32 %v2469, %v2948
        %v2981 = vadd.f32 %v2470, %v2949
        %v2982 = vadd.f32 %v2471, %v2950
        %v2983 = vadd.f32 %v2472, %v2951
        %v2984 = vadd.f32 %v2473, %v2952
        %v2985 = vadd.f32 %v2474, %v2953
        %v2986 = vadd.f32 %v2475, %v2954
        %v2987 = vadd.f32 %v2476, %v2955
        %v2988 = vadd.f32 %v2477, %v2956
        %v2989 = vadd.f32 %v2478, %v2957
        %v2990 = vadd.f32 %v2479, %v2958
        %v2991 = vadd.f32 %v2480, %v2959
        %v2992 = vadd.f32 %v2481, %v2960
        %s2993 = scalar_lea.vmem [#allocation2], 96
        %v2994 = vld [vmem:[%s2993] sm:$0xff]
        %v2995 = vld [vmem:[%s2993 + $0x8] sm:$0xff]
        %v2996 = vld [vmem:[%s2993 + $0x18] sm:$0xff]
        %v2997 = vld [vmem:[%s2993 + $0x20] sm:$0xff]
        %v2998 = vld [vmem:[%s2993 + $0x30] sm:$0xff]
        %v2999 = vld [vmem:[%s2993 + $0x38] sm:$0xff]
        %v3000 = vld [vmem:[%s2993 + $0x48] sm:$0xff]
        %v3001 = vld [vmem:[%s2993 + $0x50] sm:$0xff]
        %v3002 = vld [vmem:[%s2993 + $0x60] sm:$0xff]
        %v3003 = vld [vmem:[%s2993 + $0x68] sm:$0xff]
        %v3004 = vld [vmem:[%s2993 + $0x78] sm:$0xff]
        %v3005 = vld [vmem:[%s2993 + $0x80] sm:$0xff]
        %v3006 = vld [vmem:[%s2993 + $0x90] sm:$0xff]
        %v3007 = vld [vmem:[%s2993 + $0x98] sm:$0xff]
        %v3008 = vld [vmem:[%s2993 + $0xa8] sm:$0xff]
        %v3009 = vld [vmem:[%s2993 + $0xb0] sm:$0xff]
        %v3010 = vld [vmem:[%s2993 + $0xc0] sm:$0xff]
        %v3011 = vld [vmem:[%s2993 + $0xc8] sm:$0xff]
        %v3012 = vld [vmem:[%s2993 + $0xd8] sm:$0xff]
        %v3013 = vld [vmem:[%s2993 + $0xe0] sm:$0xff]
        %v3014 = vld [vmem:[%s2993 + $0xf0] sm:$0xff]
        %v3015 = vld [vmem:[%s2993 + $0xf8] sm:$0xff]
        %v3016 = vld [vmem:[%s2993 + $0x108] sm:$0xff]
        %v3017 = vld [vmem:[%s2993 + $0x110] sm:$0xff]
        %v3018 = vld [vmem:[%s2993 + $0x120] sm:$0xff]
        %v3019 = vld [vmem:[%s2993 + $0x128] sm:$0xff]
        %v3020 = vld [vmem:[%s2993 + $0x138] sm:$0xff]
        %v3021 = vld [vmem:[%s2993 + $0x140] sm:$0xff]
        %v3022 = vld [vmem:[%s2993 + $0x150] sm:$0xff]
        %v3023 = vld [vmem:[%s2993 + $0x158] sm:$0xff]
        %v3024 = vld [vmem:[%s2993 + $0x168] sm:$0xff]
        %v3025 = vld [vmem:[%s2993 + $0x170] sm:$0xff]
        %v3027 = vlaneseq
        %v3028 = vshrl.u32 %v3027, 7
        %v3029 = vsub.s32 0, %v3028
        %v3030 = vrot.slane %v978, %v3029
        %v3032 = vmul.f32 %v2994, %v3030
        %v3033 = vmul.f32 %v2995, %v3030
        %v3034 = vmul.f32 %v2996, %v3030
        %v3035 = vmul.f32 %v2997, %v3030
        %v3036 = vmul.f32 %v2998, %v3030
        %v3037 = vmul.f32 %v2999, %v3030
        %v3038 = vmul.f32 %v3000, %v3030
        %v3039 = vmul.f32 %v3001, %v3030
        %v3040 = vmul.f32 %v3002, %v3030
        %v3041 = vmul.f32 %v3003, %v3030
        %v3042 = vmul.f32 %v3004, %v3030
        %v3043 = vmul.f32 %v3005, %v3030
        %v3044 = vmul.f32 %v3006, %v3030
        %v3045 = vmul.f32 %v3007, %v3030
        %v3046 = vmul.f32 %v3008, %v3030
        %v3047 = vmul.f32 %v3009, %v3030
        %v3048 = vmul.f32 %v3010, %v3030
        %v3049 = vmul.f32 %v3011, %v3030
        %v3050 = vmul.f32 %v3012, %v3030
        %v3051 = vmul.f32 %v3013, %v3030
        %v3052 = vmul.f32 %v3014, %v3030
        %v3053 = vmul.f32 %v3015, %v3030
        %v3054 = vmul.f32 %v3016, %v3030
        %v3055 = vmul.f32 %v3017, %v3030
        %v3056 = vmul.f32 %v3018, %v3030
        %v3057 = vmul.f32 %v3019, %v3030
        %v3058 = vmul.f32 %v3020, %v3030
        %v3059 = vmul.f32 %v3021, %v3030
        %v3060 = vmul.f32 %v3022, %v3030
        %v3061 = vmul.f32 %v3023, %v3030
        %v3062 = vmul.f32 %v3024, %v3030
        %v3063 = vmul.f32 %v3025, %v3030
        %v3064 = vld [vmem:[%s2993 + $0x1] sm:$0xff]
        %v3065 = vld [vmem:[%s2993 + $0x9] sm:$0xff]
        %v3066 = vld [vmem:[%s2993 + $0x19] sm:$0xff]
        %v3067 = vld [vmem:[%s2993 + $0x21] sm:$0xff]
        %v3068 = vld [vmem:[%s2993 + $0x31] sm:$0xff]
        %v3069 = vld [vmem:[%s2993 + $0x39] sm:$0xff]
        %v3070 = vld [vmem:[%s2993 + $0x49] sm:$0xff]
        %v3071 = vld [vmem:[%s2993 + $0x51] sm:$0xff]
        %v3072 = vld [vmem:[%s2993 + $0x61] sm:$0xff]
        %v3073 = vld [vmem:[%s2993 + $0x69] sm:$0xff]
        %v3074 = vld [vmem:[%s2993 + $0x79] sm:$0xff]
        %v3075 = vld [vmem:[%s2993 + $0x81] sm:$0xff]
        %v3076 = vld [vmem:[%s2993 + $0x91] sm:$0xff]
        %v3077 = vld [vmem:[%s2993 + $0x99] sm:$0xff]
        %v3078 = vld [vmem:[%s2993 + $0xa9] sm:$0xff]
        %v3079 = vld [vmem:[%s2993 + $0xb1] sm:$0xff]
        %v3080 = vld [vmem:[%s2993 + $0xc1] sm:$0xff]
        %v3081 = vld [vmem:[%s2993 + $0xc9] sm:$0xff]
        %v3082 = vld [vmem:[%s2993 + $0xd9] sm:$0xff]
        %v3083 = vld [vmem:[%s2993 + $0xe1] sm:$0xff]
        %v3084 = vld [vmem:[%s2993 + $0xf1] sm:$0xff]
        %v3085 = vld [vmem:[%s2993 + $0xf9] sm:$0xff]
        %v3086 = vld [vmem:[%s2993 + $0x109] sm:$0xff]
        %v3087 = vld [vmem:[%s2993 + $0x111] sm:$0xff]
        %v3088 = vld [vmem:[%s2993 + $0x121] sm:$0xff]
        %v3089 = vld [vmem:[%s2993 + $0x129] sm:$0xff]
        %v3090 = vld [vmem:[%s2993 + $0x139] sm:$0xff]
        %v3091 = vld [vmem:[%s2993 + $0x141] sm:$0xff]
        %v3092 = vld [vmem:[%s2993 + $0x151] sm:$0xff]
        %v3093 = vld [vmem:[%s2993 + $0x159] sm:$0xff]
        %v3094 = vld [vmem:[%s2993 + $0x169] sm:$0xff]
        %v3095 = vld [vmem:[%s2993 + $0x171] sm:$0xff]
        %v3097 = vlaneseq
        %v3098 = vshrl.u32 %v3097, 7
        %v3099 = vsub.s32 0, %v3098
        %v3100 = vrot.slane %v979, %v3099
        %v3102 = vmul.f32 %v3064, %v3100
        %v3103 = vmul.f32 %v3065, %v3100
        %v3104 = vmul.f32 %v3066, %v3100
        %v3105 = vmul.f32 %v3067, %v3100
        %v3106 = vmul.f32 %v3068, %v3100
        %v3107 = vmul.f32 %v3069, %v3100
        %v3108 = vmul.f32 %v3070, %v3100
        %v3109 = vmul.f32 %v3071, %v3100
        %v3110 = vmul.f32 %v3072, %v3100
        %v3111 = vmul.f32 %v3073, %v3100
        %v3112 = vmul.f32 %v3074, %v3100
        %v3113 = vmul.f32 %v3075, %v3100
        %v3114 = vmul.f32 %v3076, %v3100
        %v3115 = vmul.f32 %v3077, %v3100
        %v3116 = vmul.f32 %v3078, %v3100
        %v3117 = vmul.f32 %v3079, %v3100
        %v3118 = vmul.f32 %v3080, %v3100
        %v3119 = vmul.f32 %v3081, %v3100
        %v3120 = vmul.f32 %v3082, %v3100
        %v3121 = vmul.f32 %v3083, %v3100
        %v3122 = vmul.f32 %v3084, %v3100
        %v3123 = vmul.f32 %v3085, %v3100
        %v3124 = vmul.f32 %v3086, %v3100
        %v3125 = vmul.f32 %v3087, %v3100
        %v3126 = vmul.f32 %v3088, %v3100
        %v3127 = vmul.f32 %v3089, %v3100
        %v3128 = vmul.f32 %v3090, %v3100
        %v3129 = vmul.f32 %v3091, %v3100
        %v3130 = vmul.f32 %v3092, %v3100
        %v3131 = vmul.f32 %v3093, %v3100
        %v3132 = vmul.f32 %v3094, %v3100
        %v3133 = vmul.f32 %v3095, %v3100
        %v3134 = vadd.f32 %v3032, %v3102
        %v3135 = vadd.f32 %v3033, %v3103
        %v3136 = vadd.f32 %v3034, %v3104
        %v3137 = vadd.f32 %v3035, %v3105
        %v3138 = vadd.f32 %v3036, %v3106
        %v3139 = vadd.f32 %v3037, %v3107
        %v3140 = vadd.f32 %v3038, %v3108
        %v3141 = vadd.f32 %v3039, %v3109
        %v3142 = vadd.f32 %v3040, %v3110
        %v3143 = vadd.f32 %v3041, %v3111
        %v3144 = vadd.f32 %v3042, %v3112
        %v3145 = vadd.f32 %v3043, %v3113
        %v3146 = vadd.f32 %v3044, %v3114
        %v3147 = vadd.f32 %v3045, %v3115
        %v3148 = vadd.f32 %v3046, %v3116
        %v3149 = vadd.f32 %v3047, %v3117
        %v3150 = vadd.f32 %v3048, %v3118
        %v3151 = vadd.f32 %v3049, %v3119
        %v3152 = vadd.f32 %v3050, %v3120
        %v3153 = vadd.f32 %v3051, %v3121
        %v3154 = vadd.f32 %v3052, %v3122
        %v3155 = vadd.f32 %v3053, %v3123
        %v3156 = vadd.f32 %v3054, %v3124
        %v3157 = vadd.f32 %v3055, %v3125
        %v3158 = vadd.f32 %v3056, %v3126
        %v3159 = vadd.f32 %v3057, %v3127
        %v3160 = vadd.f32 %v3058, %v3128
        %v3161 = vadd.f32 %v3059, %v3129
        %v3162 = vadd.f32 %v3060, %v3130
        %v3163 = vadd.f32 %v3061, %v3131
        %v3164 = vadd.f32 %v3062, %v3132
        %v3165 = vadd.f32 %v3063, %v3133
        %v3166 = vld [vmem:[%s2993 + $0x2] sm:$0xff]
        %v3167 = vld [vmem:[%s2993 + $0xa] sm:$0xff]
        %v3168 = vld [vmem:[%s2993 + $0x1a] sm:$0xff]
        %v3169 = vld [vmem:[%s2993 + $0x22] sm:$0xff]
        %v3170 = vld [vmem:[%s2993 + $0x32] sm:$0xff]
        %v3171 = vld [vmem:[%s2993 + $0x3a] sm:$0xff]
        %v3172 = vld [vmem:[%s2993 + $0x4a] sm:$0xff]
        %v3173 = vld [vmem:[%s2993 + $0x52] sm:$0xff]
        %v3174 = vld [vmem:[%s2993 + $0x62] sm:$0xff]
        %v3175 = vld [vmem:[%s2993 + $0x6a] sm:$0xff]
        %v3176 = vld [vmem:[%s2993 + $0x7a] sm:$0xff]
        %v3177 = vld [vmem:[%s2993 + $0x82] sm:$0xff]
        %v3178 = vld [vmem:[%s2993 + $0x92] sm:$0xff]
        %v3179 = vld [vmem:[%s2993 + $0x9a] sm:$0xff]
        %v3180 = vld [vmem:[%s2993 + $0xaa] sm:$0xff]
        %v3181 = vld [vmem:[%s2993 + $0xb2] sm:$0xff]
        %v3182 = vld [vmem:[%s2993 + $0xc2] sm:$0xff]
        %v3183 = vld [vmem:[%s2993 + $0xca] sm:$0xff]
        %v3184 = vld [vmem:[%s2993 + $0xda] sm:$0xff]
        %v3185 = vld [vmem:[%s2993 + $0xe2] sm:$0xff]
        %v3186 = vld [vmem:[%s2993 + $0xf2] sm:$0xff]
        %v3187 = vld [vmem:[%s2993 + $0xfa] sm:$0xff]
        %v3188 = vld [vmem:[%s2993 + $0x10a] sm:$0xff]
        %v3189 = vld [vmem:[%s2993 + $0x112] sm:$0xff]
        %v3190 = vld [vmem:[%s2993 + $0x122] sm:$0xff]
        %v3191 = vld [vmem:[%s2993 + $0x12a] sm:$0xff]
        %v3192 = vld [vmem:[%s2993 + $0x13a] sm:$0xff]
        %v3193 = vld [vmem:[%s2993 + $0x142] sm:$0xff]
        %v3194 = vld [vmem:[%s2993 + $0x152] sm:$0xff]
        %v3195 = vld [vmem:[%s2993 + $0x15a] sm:$0xff]
        %v3196 = vld [vmem:[%s2993 + $0x16a] sm:$0xff]
        %v3197 = vld [vmem:[%s2993 + $0x172] sm:$0xff]
        %v3199 = vlaneseq
        %v3200 = vshrl.u32 %v3199, 7
        %v3201 = vsub.s32 0, %v3200
        %v3202 = vrot.slane %v980, %v3201
        %v3204 = vmul.f32 %v3166, %v3202
        %v3205 = vmul.f32 %v3167, %v3202
        %v3206 = vmul.f32 %v3168, %v3202
        %v3207 = vmul.f32 %v3169, %v3202
        %v3208 = vmul.f32 %v3170, %v3202
        %v3209 = vmul.f32 %v3171, %v3202
        %v3210 = vmul.f32 %v3172, %v3202
        %v3211 = vmul.f32 %v3173, %v3202
        %v3212 = vmul.f32 %v3174, %v3202
        %v3213 = vmul.f32 %v3175, %v3202
        %v3214 = vmul.f32 %v3176, %v3202
        %v3215 = vmul.f32 %v3177, %v3202
        %v3216 = vmul.f32 %v3178, %v3202
        %v3217 = vmul.f32 %v3179, %v3202
        %v3218 = vmul.f32 %v3180, %v3202
        %v3219 = vmul.f32 %v3181, %v3202
        %v3220 = vmul.f32 %v3182, %v3202
        %v3221 = vmul.f32 %v3183, %v3202
        %v3222 = vmul.f32 %v3184, %v3202
        %v3223 = vmul.f32 %v3185, %v3202
        %v3224 = vmul.f32 %v3186, %v3202
        %v3225 = vmul.f32 %v3187, %v3202
        %v3226 = vmul.f32 %v3188, %v3202
        %v3227 = vmul.f32 %v3189, %v3202
        %v3228 = vmul.f32 %v3190, %v3202
        %v3229 = vmul.f32 %v3191, %v3202
        %v3230 = vmul.f32 %v3192, %v3202
        %v3231 = vmul.f32 %v3193, %v3202
        %v3232 = vmul.f32 %v3194, %v3202
        %v3233 = vmul.f32 %v3195, %v3202
        %v3234 = vmul.f32 %v3196, %v3202
        %v3235 = vmul.f32 %v3197, %v3202
        %v3236 = vadd.f32 %v3134, %v3204
        %v3237 = vadd.f32 %v3135, %v3205
        %v3238 = vadd.f32 %v3136, %v3206
        %v3239 = vadd.f32 %v3137, %v3207
        %v3240 = vadd.f32 %v3138, %v3208
        %v3241 = vadd.f32 %v3139, %v3209
        %v3242 = vadd.f32 %v3140, %v3210
        %v3243 = vadd.f32 %v3141, %v3211
        %v3244 = vadd.f32 %v3142, %v3212
        %v3245 = vadd.f32 %v3143, %v3213
        %v3246 = vadd.f32 %v3144, %v3214
        %v3247 = vadd.f32 %v3145, %v3215
        %v3248 = vadd.f32 %v3146, %v3216
        %v3249 = vadd.f32 %v3147, %v3217
        %v3250 = vadd.f32 %v3148, %v3218
        %v3251 = vadd.f32 %v3149, %v3219
        %v3252 = vadd.f32 %v3150, %v3220
        %v3253 = vadd.f32 %v3151, %v3221
        %v3254 = vadd.f32 %v3152, %v3222
        %v3255 = vadd.f32 %v3153, %v3223
        %v3256 = vadd.f32 %v3154, %v3224
        %v3257 = vadd.f32 %v3155, %v3225
        %v3258 = vadd.f32 %v3156, %v3226
        %v3259 = vadd.f32 %v3157, %v3227
        %v3260 = vadd.f32 %v3158, %v3228
        %v3261 = vadd.f32 %v3159, %v3229
        %v3262 = vadd.f32 %v3160, %v3230
        %v3263 = vadd.f32 %v3161, %v3231
        %v3264 = vadd.f32 %v3162, %v3232
        %v3265 = vadd.f32 %v3163, %v3233
        %v3266 = vadd.f32 %v3164, %v3234
        %v3267 = vadd.f32 %v3165, %v3235
        %v3268 = vld [vmem:[%s2993 + $0x3] sm:$0xff]
        %v3269 = vld [vmem:[%s2993 + $0xb] sm:$0xff]
        %v3270 = vld [vmem:[%s2993 + $0x1b] sm:$0xff]
        %v3271 = vld [vmem:[%s2993 + $0x23] sm:$0xff]
        %v3272 = vld [vmem:[%s2993 + $0x33] sm:$0xff]
        %v3273 = vld [vmem:[%s2993 + $0x3b] sm:$0xff]
        %v3274 = vld [vmem:[%s2993 + $0x4b] sm:$0xff]
        %v3275 = vld [vmem:[%s2993 + $0x53] sm:$0xff]
        %v3276 = vld [vmem:[%s2993 + $0x63] sm:$0xff]
        %v3277 = vld [vmem:[%s2993 + $0x6b] sm:$0xff]
        %v3278 = vld [vmem:[%s2993 + $0x7b] sm:$0xff]
        %v3279 = vld [vmem:[%s2993 + $0x83] sm:$0xff]
        %v3280 = vld [vmem:[%s2993 + $0x93] sm:$0xff]
        %v3281 = vld [vmem:[%s2993 + $0x9b] sm:$0xff]
        %v3282 = vld [vmem:[%s2993 + $0xab] sm:$0xff]
        %v3283 = vld [vmem:[%s2993 + $0xb3] sm:$0xff]
        %v3284 = vld [vmem:[%s2993 + $0xc3] sm:$0xff]
        %v3285 = vld [vmem:[%s2993 + $0xcb] sm:$0xff]
        %v3286 = vld [vmem:[%s2993 + $0xdb] sm:$0xff]
        %v3287 = vld [vmem:[%s2993 + $0xe3] sm:$0xff]
        %v3288 = vld [vmem:[%s2993 + $0xf3] sm:$0xff]
        %v3289 = vld [vmem:[%s2993 + $0xfb] sm:$0xff]
        %v3290 = vld [vmem:[%s2993 + $0x10b] sm:$0xff]
        %v3291 = vld [vmem:[%s2993 + $0x113] sm:$0xff]
        %v3292 = vld [vmem:[%s2993 + $0x123] sm:$0xff]
        %v3293 = vld [vmem:[%s2993 + $0x12b] sm:$0xff]
        %v3294 = vld [vmem:[%s2993 + $0x13b] sm:$0xff]
        %v3295 = vld [vmem:[%s2993 + $0x143] sm:$0xff]
        %v3296 = vld [vmem:[%s2993 + $0x153] sm:$0xff]
        %v3297 = vld [vmem:[%s2993 + $0x15b] sm:$0xff]
        %v3298 = vld [vmem:[%s2993 + $0x16b] sm:$0xff]
        %v3299 = vld [vmem:[%s2993 + $0x173] sm:$0xff]
        %v3301 = vlaneseq
        %v3302 = vshrl.u32 %v3301, 7
        %v3303 = vsub.s32 0, %v3302
        %v3304 = vrot.slane %v981, %v3303
        %v3306 = vmul.f32 %v3268, %v3304
        %v3307 = vmul.f32 %v3269, %v3304
        %v3308 = vmul.f32 %v3270, %v3304
        %v3309 = vmul.f32 %v3271, %v3304
        %v3310 = vmul.f32 %v3272, %v3304
        %v3311 = vmul.f32 %v3273, %v3304
        %v3312 = vmul.f32 %v3274, %v3304
        %v3313 = vmul.f32 %v3275, %v3304
        %v3314 = vmul.f32 %v3276, %v3304
        %v3315 = vmul.f32 %v3277, %v3304
        %v3316 = vmul.f32 %v3278, %v3304
        %v3317 = vmul.f32 %v3279, %v3304
        %v3318 = vmul.f32 %v3280, %v3304
        %v3319 = vmul.f32 %v3281, %v3304
        %v3320 = vmul.f32 %v3282, %v3304
        %v3321 = vmul.f32 %v3283, %v3304
        %v3322 = vmul.f32 %v3284, %v3304
        %v3323 = vmul.f32 %v3285, %v3304
        %v3324 = vmul.f32 %v3286, %v3304
        %v3325 = vmul.f32 %v3287, %v3304
        %v3326 = vmul.f32 %v3288, %v3304
        %v3327 = vmul.f32 %v3289, %v3304
        %v3328 = vmul.f32 %v3290, %v3304
        %v3329 = vmul.f32 %v3291, %v3304
        %v3330 = vmul.f32 %v3292, %v3304
        %v3331 = vmul.f32 %v3293, %v3304
        %v3332 = vmul.f32 %v3294, %v3304
        %v3333 = vmul.f32 %v3295, %v3304
        %v3334 = vmul.f32 %v3296, %v3304
        %v3335 = vmul.f32 %v3297, %v3304
        %v3336 = vmul.f32 %v3298, %v3304
        %v3337 = vmul.f32 %v3299, %v3304
        %v3338 = vadd.f32 %v3236, %v3306
        %v3339 = vadd.f32 %v3237, %v3307
        %v3340 = vadd.f32 %v3238, %v3308
        %v3341 = vadd.f32 %v3239, %v3309
        %v3342 = vadd.f32 %v3240, %v3310
        %v3343 = vadd.f32 %v3241, %v3311
        %v3344 = vadd.f32 %v3242, %v3312
        %v3345 = vadd.f32 %v3243, %v3313
        %v3346 = vadd.f32 %v3244, %v3314
        %v3347 = vadd.f32 %v3245, %v3315
        %v3348 = vadd.f32 %v3246, %v3316
        %v3349 = vadd.f32 %v3247, %v3317
        %v3350 = vadd.f32 %v3248, %v3318
        %v3351 = vadd.f32 %v3249, %v3319
        %v3352 = vadd.f32 %v3250, %v3320
        %v3353 = vadd.f32 %v3251, %v3321
        %v3354 = vadd.f32 %v3252, %v3322
        %v3355 = vadd.f32 %v3253, %v3323
        %v3356 = vadd.f32 %v3254, %v3324
        %v3357 = vadd.f32 %v3255, %v3325
        %v3358 = vadd.f32 %v3256, %v3326
        %v3359 = vadd.f32 %v3257, %v3327
        %v3360 = vadd.f32 %v3258, %v3328
        %v3361 = vadd.f32 %v3259, %v3329
        %v3362 = vadd.f32 %v3260, %v3330
        %v3363 = vadd.f32 %v3261, %v3331
        %v3364 = vadd.f32 %v3262, %v3332
        %v3365 = vadd.f32 %v3263, %v3333
        %v3366 = vadd.f32 %v3264, %v3334
        %v3367 = vadd.f32 %v3265, %v3335
        %v3368 = vadd.f32 %v3266, %v3336
        %v3369 = vadd.f32 %v3267, %v3337
        %v3370 = vld [vmem:[%s2993 + $0x4] sm:$0xff]
        %v3371 = vld [vmem:[%s2993 + $0xc] sm:$0xff]
        %v3372 = vld [vmem:[%s2993 + $0x1c] sm:$0xff]
        %v3373 = vld [vmem:[%s2993 + $0x24] sm:$0xff]
        %v3374 = vld [vmem:[%s2993 + $0x34] sm:$0xff]
        %v3375 = vld [vmem:[%s2993 + $0x3c] sm:$0xff]
        %v3376 = vld [vmem:[%s2993 + $0x4c] sm:$0xff]
        %v3377 = vld [vmem:[%s2993 + $0x54] sm:$0xff]
        %v3378 = vld [vmem:[%s2993 + $0x64] sm:$0xff]
        %v3379 = vld [vmem:[%s2993 + $0x6c] sm:$0xff]
        %v3380 = vld [vmem:[%s2993 + $0x7c] sm:$0xff]
        %v3381 = vld [vmem:[%s2993 + $0x84] sm:$0xff]
        %v3382 = vld [vmem:[%s2993 + $0x94] sm:$0xff]
        %v3383 = vld [vmem:[%s2993 + $0x9c] sm:$0xff]
        %v3384 = vld [vmem:[%s2993 + $0xac] sm:$0xff]
        %v3385 = vld [vmem:[%s2993 + $0xb4] sm:$0xff]
        %v3386 = vld [vmem:[%s2993 + $0xc4] sm:$0xff]
        %v3387 = vld [vmem:[%s2993 + $0xcc] sm:$0xff]
        %v3388 = vld [vmem:[%s2993 + $0xdc] sm:$0xff]
        %v3389 = vld [vmem:[%s2993 + $0xe4] sm:$0xff]
        %v3390 = vld [vmem:[%s2993 + $0xf4] sm:$0xff]
        %v3391 = vld [vmem:[%s2993 + $0xfc] sm:$0xff]
        %v3392 = vld [vmem:[%s2993 + $0x10c] sm:$0xff]
        %v3393 = vld [vmem:[%s2993 + $0x114] sm:$0xff]
        %v3394 = vld [vmem:[%s2993 + $0x124] sm:$0xff]
        %v3395 = vld [vmem:[%s2993 + $0x12c] sm:$0xff]
        %v3396 = vld [vmem:[%s2993 + $0x13c] sm:$0xff]
        %v3397 = vld [vmem:[%s2993 + $0x144] sm:$0xff]
        %v3398 = vld [vmem:[%s2993 + $0x154] sm:$0xff]
        %v3399 = vld [vmem:[%s2993 + $0x15c] sm:$0xff]
        %v3400 = vld [vmem:[%s2993 + $0x16c] sm:$0xff]
        %v3401 = vld [vmem:[%s2993 + $0x174] sm:$0xff]
        %v3403 = vlaneseq
        %v3404 = vshrl.u32 %v3403, 7
        %v3405 = vsub.s32 0, %v3404
        %v3406 = vrot.slane %v982, %v3405
        %v3408 = vmul.f32 %v3370, %v3406
        %v3409 = vmul.f32 %v3371, %v3406
        %v3410 = vmul.f32 %v3372, %v3406
        %v3411 = vmul.f32 %v3373, %v3406
        %v3412 = vmul.f32 %v3374, %v3406
        %v3413 = vmul.f32 %v3375, %v3406
        %v3414 = vmul.f32 %v3376, %v3406
        %v3415 = vmul.f32 %v3377, %v3406
        %v3416 = vmul.f32 %v3378, %v3406
        %v3417 = vmul.f32 %v3379, %v3406
        %v3418 = vmul.f32 %v3380, %v3406
        %v3419 = vmul.f32 %v3381, %v3406
        %v3420 = vmul.f32 %v3382, %v3406
        %v3421 = vmul.f32 %v3383, %v3406
        %v3422 = vmul.f32 %v3384, %v3406
        %v3423 = vmul.f32 %v3385, %v3406
        %v3424 = vmul.f32 %v3386, %v3406
        %v3425 = vmul.f32 %v3387, %v3406
        %v3426 = vmul.f32 %v3388, %v3406
        %v3427 = vmul.f32 %v3389, %v3406
        %v3428 = vmul.f32 %v3390, %v3406
        %v3429 = vmul.f32 %v3391, %v3406
        %v3430 = vmul.f32 %v3392, %v3406
        %v3431 = vmul.f32 %v3393, %v3406
        %v3432 = vmul.f32 %v3394, %v3406
        %v3433 = vmul.f32 %v3395, %v3406
        %v3434 = vmul.f32 %v3396, %v3406
        %v3435 = vmul.f32 %v3397, %v3406
        %v3436 = vmul.f32 %v3398, %v3406
        %v3437 = vmul.f32 %v3399, %v3406
        %v3438 = vmul.f32 %v3400, %v3406
        %v3439 = vmul.f32 %v3401, %v3406
        %v3440 = vadd.f32 %v3338, %v3408
        %v3441 = vadd.f32 %v3339, %v3409
        %v3442 = vadd.f32 %v3340, %v3410
        %v3443 = vadd.f32 %v3341, %v3411
        %v3444 = vadd.f32 %v3342, %v3412
        %v3445 = vadd.f32 %v3343, %v3413
        %v3446 = vadd.f32 %v3344, %v3414
        %v3447 = vadd.f32 %v3345, %v3415
        %v3448 = vadd.f32 %v3346, %v3416
        %v3449 = vadd.f32 %v3347, %v3417
        %v3450 = vadd.f32 %v3348, %v3418
        %v3451 = vadd.f32 %v3349, %v3419
        %v3452 = vadd.f32 %v3350, %v3420
        %v3453 = vadd.f32 %v3351, %v3421
        %v3454 = vadd.f32 %v3352, %v3422
        %v3455 = vadd.f32 %v3353, %v3423
        %v3456 = vadd.f32 %v3354, %v3424
        %v3457 = vadd.f32 %v3355, %v3425
        %v3458 = vadd.f32 %v3356, %v3426
        %v3459 = vadd.f32 %v3357, %v3427
        %v3460 = vadd.f32 %v3358, %v3428
        %v3461 = vadd.f32 %v3359, %v3429
        %v3462 = vadd.f32 %v3360, %v3430
        %v3463 = vadd.f32 %v3361, %v3431
        %v3464 = vadd.f32 %v3362, %v3432
        %v3465 = vadd.f32 %v3363, %v3433
        %v3466 = vadd.f32 %v3364, %v3434
        %v3467 = vadd.f32 %v3365, %v3435
        %v3468 = vadd.f32 %v3366, %v3436
        %v3469 = vadd.f32 %v3367, %v3437
        %v3470 = vadd.f32 %v3368, %v3438
        %v3471 = vadd.f32 %v3369, %v3439
        %v3472 = vadd.f32 %v2961, %v3440
        %v3473 = vadd.f32 %v2962, %v3441
        %v3474 = vadd.f32 %v2963, %v3442
        %v3475 = vadd.f32 %v2964, %v3443
        %v3476 = vadd.f32 %v2965, %v3444
        %v3477 = vadd.f32 %v2966, %v3445
        %v3478 = vadd.f32 %v2967, %v3446
        %v3479 = vadd.f32 %v2968, %v3447
        %v3480 = vadd.f32 %v2969, %v3448
        %v3481 = vadd.f32 %v2970, %v3449
        %v3482 = vadd.f32 %v2971, %v3450
        %v3483 = vadd.f32 %v2972, %v3451
        %v3484 = vadd.f32 %v2973, %v3452
        %v3485 = vadd.f32 %v2974, %v3453
        %v3486 = vadd.f32 %v2975, %v3454
        %v3487 = vadd.f32 %v2976, %v3455
        %v3488 = vadd.f32 %v2977, %v3456
        %v3489 = vadd.f32 %v2978, %v3457
        %v3490 = vadd.f32 %v2979, %v3458
        %v3491 = vadd.f32 %v2980, %v3459
        %v3492 = vadd.f32 %v2981, %v3460
        %v3493 = vadd.f32 %v2982, %v3461
        %v3494 = vadd.f32 %v2983, %v3462
        %v3495 = vadd.f32 %v2984, %v3463
        %v3496 = vadd.f32 %v2985, %v3464
        %v3497 = vadd.f32 %v2986, %v3465
        %v3498 = vadd.f32 %v2987, %v3466
        %v3499 = vadd.f32 %v2988, %v3467
        %v3500 = vadd.f32 %v2989, %v3468
        %v3501 = vadd.f32 %v2990, %v3469
        %v3502 = vadd.f32 %v2991, %v3470
        %v3503 = vadd.f32 %v2992, %v3471
        %v3504 = vld [vmem:[%s4] sm:$0x1]
        %v3506 = vlaneseq
        %v3507 = vshrl.u32 %v3506, 7
        %v3508 = vsub.s32 0, %v3507
        %v3509 = vrot.slane %v3504, %v3508
        %v3511 = vadd.f32 %v3472, %v3509
        %v3512 = vadd.f32 %v3473, %v3509
        %v3513 = vadd.f32 %v3474, %v3509
        %v3514 = vadd.f32 %v3475, %v3509
        %v3515 = vadd.f32 %v3476, %v3509
        %v3516 = vadd.f32 %v3477, %v3509
        %v3517 = vadd.f32 %v3478, %v3509
        %v3518 = vadd.f32 %v3479, %v3509
        %v3519 = vadd.f32 %v3480, %v3509
        %v3520 = vadd.f32 %v3481, %v3509
        %v3521 = vadd.f32 %v3482, %v3509
        %v3522 = vadd.f32 %v3483, %v3509
        %v3523 = vadd.f32 %v3484, %v3509
        %v3524 = vadd.f32 %v3485, %v3509
        %v3525 = vadd.f32 %v3486, %v3509
        %v3526 = vadd.f32 %v3487, %v3509
        %v3527 = vadd.f32 %v3488, %v3509
        %v3528 = vadd.f32 %v3489, %v3509
        %v3529 = vadd.f32 %v3490, %v3509
        %v3530 = vadd.f32 %v3491, %v3509
        %v3531 = vadd.f32 %v3492, %v3509
        %v3532 = vadd.f32 %v3493, %v3509
        %v3533 = vadd.f32 %v3494, %v3509
        %v3534 = vadd.f32 %v3495, %v3509
        %v3535 = vadd.f32 %v3496, %v3509
        %v3536 = vadd.f32 %v3497, %v3509
        %v3537 = vadd.f32 %v3498, %v3509
        %v3538 = vadd.f32 %v3499, %v3509
        %v3539 = vadd.f32 %v3500, %v3509
        %v3540 = vadd.f32 %v3501, %v3509
        %v3541 = vadd.f32 %v3502, %v3509
        %v3542 = vadd.f32 %v3503, %v3509
        %v3543 = vxor.u32 %v3511, 2147483648
        %v3544 = vxor.u32 %v3512, 2147483648
        %v3545 = vxor.u32 %v3513, 2147483648
        %v3546 = vxor.u32 %v3514, 2147483648
        %v3547 = vxor.u32 %v3515, 2147483648
        %v3548 = vxor.u32 %v3516, 2147483648
        %v3549 = vxor.u32 %v3517, 2147483648
        %v3550 = vxor.u32 %v3518, 2147483648
        %v3551 = vxor.u32 %v3519, 2147483648
        %v3552 = vxor.u32 %v3520, 2147483648
        %v3553 = vxor.u32 %v3521, 2147483648
        %v3554 = vxor.u32 %v3522, 2147483648
        %v3555 = vxor.u32 %v3523, 2147483648
        %v3556 = vxor.u32 %v3524, 2147483648
        %v3557 = vxor.u32 %v3525, 2147483648
        %v3558 = vxor.u32 %v3526, 2147483648
        %v3559 = vxor.u32 %v3527, 2147483648
        %v3560 = vxor.u32 %v3528, 2147483648
        %v3561 = vxor.u32 %v3529, 2147483648
        %v3562 = vxor.u32 %v3530, 2147483648
        %v3563 = vxor.u32 %v3531, 2147483648
        %v3564 = vxor.u32 %v3532, 2147483648
        %v3565 = vxor.u32 %v3533, 2147483648
        %v3566 = vxor.u32 %v3534, 2147483648
        %v3567 = vxor.u32 %v3535, 2147483648
        %v3568 = vxor.u32 %v3536, 2147483648
        %v3569 = vxor.u32 %v3537, 2147483648
        %v3570 = vxor.u32 %v3538, 2147483648
        %v3571 = vxor.u32 %v3539, 2147483648
        %v3572 = vxor.u32 %v3540, 2147483648
        %v3573 = vxor.u32 %v3541, 2147483648
        %v3574 = vxor.u32 %v3542, 2147483648
        %v3575 = vmul.f32 %v3543, 1.442695
        %v3576 = vpow.pop %v3575
        %v3577 = vmul.f32 %v3544, 1.442695
        %v3578 = vpow.pop %v3577
        %v3579 = vmul.f32 %v3545, 1.442695
        %v3580 = vpow.pop %v3579
        %v3581 = vmul.f32 %v3546, 1.442695
        %v3582 = vpow.pop %v3581
        %v3583 = vmul.f32 %v3547, 1.442695
        %v3584 = vpow.pop %v3583
        %v3585 = vmul.f32 %v3548, 1.442695
        %v3586 = vpow.pop %v3585
        %v3587 = vmul.f32 %v3549, 1.442695
        %v3588 = vpow.pop %v3587
        %v3589 = vmul.f32 %v3550, 1.442695
        %v3590 = vpow.pop %v3589
        %v3591 = vmul.f32 %v3551, 1.442695
        %v3592 = vpow.pop %v3591
        %v3593 = vmul.f32 %v3552, 1.442695
        %v3594 = vpow.pop %v3593
        %v3595 = vmul.f32 %v3553, 1.442695
        %v3596 = vpow.pop %v3595
        %v3597 = vmul.f32 %v3554, 1.442695
        %v3598 = vpow.pop %v3597
        %v3599 = vmul.f32 %v3555, 1.442695
        %v3600 = vpow.pop %v3599
        %v3601 = vmul.f32 %v3556, 1.442695
        %v3602 = vpow.pop %v3601
        %v3603 = vmul.f32 %v3557, 1.442695
        %v3604 = vpow.pop %v3603
        %v3605 = vmul.f32 %v3558, 1.442695
        %v3606 = vpow.pop %v3605
        %v3607 = vmul.f32 %v3559, 1.442695
        %v3608 = vpow.pop %v3607
        %v3609 = vmul.f32 %v3560, 1.442695
        %v3610 = vpow.pop %v3609
        %v3611 = vmul.f32 %v3561, 1.442695
        %v3612 = vpow.pop %v3611
        %v3613 = vmul.f32 %v3562, 1.442695
        %v3614 = vpow.pop %v3613
        %v3615 = vmul.f32 %v3563, 1.442695
        %v3616 = vpow.pop %v3615
        %v3617 = vmul.f32 %v3564, 1.442695
        %v3618 = vpow.pop %v3617
        %v3619 = vmul.f32 %v3565, 1.442695
        %v3620 = vpow.pop %v3619
        %v3621 = vmul.f32 %v3566, 1.442695
        %v3622 = vpow.pop %v3621
        %v3623 = vmul.f32 %v3567, 1.442695
        %v3624 = vpow.pop %v3623
        %v3625 = vmul.f32 %v3568, 1.442695
        %v3626 = vpow.pop %v3625
        %v3627 = vmul.f32 %v3569, 1.442695
        %v3628 = vpow.pop %v3627
        %v3629 = vmul.f32 %v3570, 1.442695
        %v3630 = vpow.pop %v3629
        %v3631 = vmul.f32 %v3571, 1.442695
        %v3632 = vpow.pop %v3631
        %v3633 = vmul.f32 %v3572, 1.442695
        %v3634 = vpow.pop %v3633
        %v3635 = vmul.f32 %v3573, 1.442695
        %v3636 = vpow.pop %v3635
        %v3637 = vmul.f32 %v3574, 1.442695
        %v3638 = vpow.pop %v3637
        %v3639 = vadd.f32 %v3576, 1.0
        %v3640 = vadd.f32 %v3578, 1.0
        %v3641 = vadd.f32 %v3580, 1.0
        %v3642 = vadd.f32 %v3582, 1.0
        %v3643 = vadd.f32 %v3584, 1.0
        %v3644 = vadd.f32 %v3586, 1.0
        %v3645 = vadd.f32 %v3588, 1.0
        %v3646 = vadd.f32 %v3590, 1.0
        %v3647 = vadd.f32 %v3592, 1.0
        %v3648 = vadd.f32 %v3594, 1.0
        %v3649 = vadd.f32 %v3596, 1.0
        %v3650 = vadd.f32 %v3598, 1.0
        %v3651 = vadd.f32 %v3600, 1.0
        %v3652 = vadd.f32 %v3602, 1.0
        %v3653 = vadd.f32 %v3604, 1.0
        %v3654 = vadd.f32 %v3606, 1.0
        %v3655 = vadd.f32 %v3608, 1.0
        %v3656 = vadd.f32 %v3610, 1.0
        %v3657 = vadd.f32 %v3612, 1.0
        %v3658 = vadd.f32 %v3614, 1.0
        %v3659 = vadd.f32 %v3616, 1.0
        %v3660 = vadd.f32 %v3618, 1.0
        %v3661 = vadd.f32 %v3620, 1.0
        %v3662 = vadd.f32 %v3622, 1.0
        %v3663 = vadd.f32 %v3624, 1.0
        %v3664 = vadd.f32 %v3626, 1.0
        %v3665 = vadd.f32 %v3628, 1.0
        %v3666 = vadd.f32 %v3630, 1.0
        %v3667 = vadd.f32 %v3632, 1.0
        %v3668 = vadd.f32 %v3634, 1.0
        %v3669 = vadd.f32 %v3636, 1.0
        %v3670 = vadd.f32 %v3638, 1.0
        %v3671 = vrcp.pop %v3639
        %v3672 = vmul.f32 1.0, %v3671
        %v3673 = vrcp.pop %v3640
        %v3674 = vmul.f32 1.0, %v3673
        %v3675 = vrcp.pop %v3641
        %v3676 = vmul.f32 1.0, %v3675
        %v3677 = vrcp.pop %v3642
        %v3678 = vmul.f32 1.0, %v3677
        %v3679 = vrcp.pop %v3643
        %v3680 = vmul.f32 1.0, %v3679
        %v3681 = vrcp.pop %v3644
        %v3682 = vmul.f32 1.0, %v3681
        %v3683 = vrcp.pop %v3645
        %v3684 = vmul.f32 1.0, %v3683
        %v3685 = vrcp.pop %v3646
        %v3686 = vmul.f32 1.0, %v3685
        %v3687 = vrcp.pop %v3647
        %v3688 = vmul.f32 1.0, %v3687
        %v3689 = vrcp.pop %v3648
        %v3690 = vmul.f32 1.0, %v3689
        %v3691 = vrcp.pop %v3649
        %v3692 = vmul.f32 1.0, %v3691
        %v3693 = vrcp.pop %v3650
        %v3694 = vmul.f32 1.0, %v3693
        %v3695 = vrcp.pop %v3651
        %v3696 = vmul.f32 1.0, %v3695
        %v3697 = vrcp.pop %v3652
        %v3698 = vmul.f32 1.0, %v3697
        %v3699 = vrcp.pop %v3653
        %v3700 = vmul.f32 1.0, %v3699
        %v3701 = vrcp.pop %v3654
        %v3702 = vmul.f32 1.0, %v3701
        %v3703 = vrcp.pop %v3655
        %v3704 = vmul.f32 1.0, %v3703
        %v3705 = vrcp.pop %v3656
        %v3706 = vmul.f32 1.0, %v3705
        %v3707 = vrcp.pop %v3657
        %v3708 = vmul.f32 1.0, %v3707
        %v3709 = vrcp.pop %v3658
        %v3710 = vmul.f32 1.0, %v3709
        %v3711 = vrcp.pop %v3659
        %v3712 = vmul.f32 1.0, %v3711
        %v3713 = vrcp.pop %v3660
        %v3714 = vmul.f32 1.0, %v3713
        %v3715 = vrcp.pop %v3661
        %v3716 = vmul.f32 1.0, %v3715
        %v3717 = vrcp.pop %v3662
        %v3718 = vmul.f32 1.0, %v3717
        %v3719 = vrcp.pop %v3663
        %v3720 = vmul.f32 1.0, %v3719
        %v3721 = vrcp.pop %v3664
        %v3722 = vmul.f32 1.0, %v3721
        %v3723 = vrcp.pop %v3665
        %v3724 = vmul.f32 1.0, %v3723
        %v3725 = vrcp.pop %v3666
        %v3726 = vmul.f32 1.0, %v3725
        %v3727 = vrcp.pop %v3667
        %v3728 = vmul.f32 1.0, %v3727
        %v3729 = vrcp.pop %v3668
        %v3730 = vmul.f32 1.0, %v3729
        %v3731 = vrcp.pop %v3669
        %v3732 = vmul.f32 1.0, %v3731
        %v3733 = vrcp.pop %v3670
        %v3734 = vmul.f32 1.0, %v3733
        %v3735 = vmul.f32 %v3511, %v3672
        %v3736 = vmul.f32 %v3512, %v3674
        %v3737 = vmul.f32 %v3513, %v3676
        %v3738 = vmul.f32 %v3514, %v3678
        %v3739 = vmul.f32 %v3515, %v3680
        %v3740 = vmul.f32 %v3516, %v3682
        %v3741 = vmul.f32 %v3517, %v3684
        %v3742 = vmul.f32 %v3518, %v3686
        %v3743 = vmul.f32 %v3519, %v3688
        %v3744 = vmul.f32 %v3520, %v3690
        %v3745 = vmul.f32 %v3521, %v3692
        %v3746 = vmul.f32 %v3522, %v3694
        %v3747 = vmul.f32 %v3523, %v3696
        %v3748 = vmul.f32 %v3524, %v3698
        %v3749 = vmul.f32 %v3525, %v3700
        %v3750 = vmul.f32 %v3526, %v3702
        %v3751 = vmul.f32 %v3527, %v3704
        %v3752 = vmul.f32 %v3528, %v3706
        %v3753 = vmul.f32 %v3529, %v3708
        %v3754 = vmul.f32 %v3530, %v3710
        %v3755 = vmul.f32 %v3531, %v3712
        %v3756 = vmul.f32 %v3532, %v3714
        %v3757 = vmul.f32 %v3533, %v3716
        %v3758 = vmul.f32 %v3534, %v3718
        %v3759 = vmul.f32 %v3535, %v3720
        %v3760 = vmul.f32 %v3536, %v3722
        %v3761 = vmul.f32 %v3537, %v3724
        %v3762 = vmul.f32 %v3538, %v3726
        %v3763 = vmul.f32 %v3539, %v3728
        %v3764 = vmul.f32 %v3540, %v3730
        %v3765 = vmul.f32 %v3541, %v3732
        %v3766 = vmul.f32 %v3542, %v3734
        %v3767 = vpack.c.bf16 %v3736, %v3735
        %v3768 = vpack.c.bf16 %v3738, %v3737
        %v3769 = vpack.c.bf16 %v3740, %v3739
        %v3770 = vpack.c.bf16 %v3742, %v3741
        %v3771 = vpack.c.bf16 %v3744, %v3743
        %v3772 = vpack.c.bf16 %v3746, %v3745
        %v3773 = vpack.c.bf16 %v3748, %v3747
        %v3774 = vpack.c.bf16 %v3750, %v3749
        %v3775 = vpack.c.bf16 %v3752, %v3751
        %v3776 = vpack.c.bf16 %v3754, %v3753
        %v3777 = vpack.c.bf16 %v3756, %v3755
        %v3778 = vpack.c.bf16 %v3758, %v3757
        %v3779 = vpack.c.bf16 %v3760, %v3759
        %v3780 = vpack.c.bf16 %v3762, %v3761
        %v3781 = vpack.c.bf16 %v3764, %v3763
        %v3782 = vpack.c.bf16 %v3766, %v3765
        %v3783 = vld [vmem:[#allocation9] sm:$0xf]
        %v3784 = vld [vmem:[#allocation9 + $0x4] sm:$0xf]
        %v3785 = vld [vmem:[#allocation9 + $0x8] sm:$0xf]
        %v3786 = vld [vmem:[#allocation9 + $0xc] sm:$0xf]
        %v3787 = vld [vmem:[%s6] sm:$0x1]
        %v3789 = vlaneseq
        %v3790 = vshrl.u32 %v3789, 7
        %v3791 = vsub.s32 0, %v3790
        %v3792 = vrot.slane %v3787, %v3791
        %v3798 = vunpack.c.l.b16 %v3783
        %v3799 = vunpack.c.l.b16 %v3784
        %v3800 = vunpack.c.l.b16 %v3785
        %v3801 = vunpack.c.l.b16 %v3786
        %v3802 = vpack.c.b16 %v3799, %v3798
        %v3803 = vpack.c.b16 %v3801, %v3800
        %v3807 = vsel %vm342, %v3767, 0
        %v3810 = vsel %vm342, %v3768, 0
        %v3813 = vsel %vm342, %v3769, 0
        %v3816 = vsel %vm342, %v3770, 0
        %v3819 = vsel %vm342, %v3771, 0
        %v3822 = vsel %vm342, %v3772, 0
        %v3825 = vsel %vm342, %v3773, 0
        %v3828 = vsel %vm342, %v3774, 0
        %v3831 = vsel %vm342, %v3775, 0
        %v3834 = vsel %vm342, %v3776, 0
        %v3837 = vsel %vm342, %v3777, 0
        %v3840 = vsel %vm342, %v3778, 0
        %v3843 = vsel %vm342, %v3779, 0
        %v3846 = vsel %vm342, %v3780, 0
        %v3849 = vsel %vm342, %v3781, 0
        %v3852 = vsel %vm342, %v3782, 0
        %3854 = vmatprep.subr.bf16.mxu0 0
        %3855 = vmatpush1.bf16.msra.mxu0 0
        %3856 = vmatprep.subr.bf16.mxu0 0
        %3857 = vmatpush1.bf16.msra.mxu0 0
        %3858 = vmatprep.subr.bf16.mxu0 0
        %3859 = vmatpush1.bf16.msra.mxu0 0
        %3860 = vmatprep.subr.bf16.mxu0 0
        %3861 = vmatpush1.bf16.msra.mxu0 0
        %3862 = vmatprep.subr.bf16.mxu0 0
        %3863 = vmatpush1.bf16.msra.mxu0 0
        %3864 = vmatprep.subr.bf16.mxu0 0
        %3865 = vmatpush1.bf16.msra.mxu0 0
        %3866 = vmatprep.subr.bf16.mxu0 0
        %3867 = vmatpush1.bf16.msra.mxu0 %v3803
        %3868 = vmatprep.subr.bf16.mxu0 0
        %3869 = vmatpush1.bf16.msra.mxu0 %v3802
        %3870 = vmatprep.subr.bf16.mxu0 0
        %3871 = vmatpush2.bf16.msra.mxu0 0
        %3872 = vmatprep.subr.bf16.mxu0 0
        %3873 = vmatpush2.bf16.msra.mxu0 0
        %3874 = vmatprep.subr.bf16.mxu0 0
        %3875 = vmatpush2.bf16.msra.mxu0 0
        %3876 = vmatprep.subr.bf16.mxu0 0
        %3877 = vmatpush2.bf16.msra.mxu0 0
        %3878 = vmatprep.subr.bf16.mxu0 0
        %3879 = vmatpush2.bf16.msra.mxu0 0
        %3880 = vmatprep.subr.bf16.mxu0 0
        %3881 = vmatpush2.bf16.msra.mxu0 0
        %3882 = vmatprep.subr.bf16.mxu0 0
        %3883 = vmatpush2.bf16.msra.mxu0 0
        %3884 = vmatprep.subr.bf16.mxu0 0
        %3885 = vmatpush2.bf16.msra.mxu0 0
        %3886 = vmatprep.mubr.bf16.mxu0 0
        %3887 = vmatmul.mubr.bf16.gmra.mxu0 %v3807
        %v3888 = vpop.f32.mrf.mxu0
        %v3889 = vadd.f32 %v3792, %v3888
        %v3890 = vpop.f32.mrf.mxu0
        %v3891 = vpop.f32.mrf.mxu0
        %v3892 = vadd.f32 %v3792, %v3891
        %v3893 = vpop.f32.mrf.mxu0
        %3894 = vmatprep.mubr.bf16.mxu0 0
        %3895 = vmatmul.mubr.bf16.gmra.mxu0 %v3810
        %v3896 = vpop.f32.mrf.mxu0
        %v3897 = vadd.f32 %v3792, %v3896
        %v3898 = vpop.f32.mrf.mxu0
        %v3899 = vpop.f32.mrf.mxu0
        %v3900 = vadd.f32 %v3792, %v3899
        %v3901 = vpop.f32.mrf.mxu0
        %3902 = vmatprep.mubr.bf16.mxu0 0
        %3903 = vmatmul.mubr.bf16.gmra.mxu0 %v3813
        %v3904 = vpop.f32.mrf.mxu0
        %v3905 = vadd.f32 %v3792, %v3904
        %v3906 = vpop.f32.mrf.mxu0
        %v3907 = vpop.f32.mrf.mxu0
        %v3908 = vadd.f32 %v3792, %v3907
        %v3909 = vpop.f32.mrf.mxu0
        %3910 = vmatprep.mubr.bf16.mxu0 0
        %3911 = vmatmul.mubr.bf16.gmra.mxu0 %v3816
        %v3912 = vpop.f32.mrf.mxu0
        %v3913 = vadd.f32 %v3792, %v3912
        %v3914 = vpop.f32.mrf.mxu0
        %v3915 = vpop.f32.mrf.mxu0
        %v3916 = vadd.f32 %v3792, %v3915
        %v3917 = vpop.f32.mrf.mxu0
        %3918 = vmatprep.mubr.bf16.mxu0 0
        %3919 = vmatmul.mubr.bf16.gmra.mxu0 %v3819
        %v3920 = vpop.f32.mrf.mxu0
        %v3921 = vadd.f32 %v3792, %v3920
        %v3922 = vpop.f32.mrf.mxu0
        %v3923 = vpop.f32.mrf.mxu0
        %v3924 = vadd.f32 %v3792, %v3923
        %v3925 = vpop.f32.mrf.mxu0
        %3926 = vmatprep.mubr.bf16.mxu0 0
        %3927 = vmatmul.mubr.bf16.gmra.mxu0 %v3822
        %v3928 = vpop.f32.mrf.mxu0
        %v3929 = vadd.f32 %v3792, %v3928
        %v3930 = vpop.f32.mrf.mxu0
        %v3931 = vpop.f32.mrf.mxu0
        %v3932 = vadd.f32 %v3792, %v3931
        %v3933 = vpop.f32.mrf.mxu0
        %3934 = vmatprep.mubr.bf16.mxu0 0
        %3935 = vmatmul.mubr.bf16.gmra.mxu0 %v3825
        %v3936 = vpop.f32.mrf.mxu0
        %v3937 = vadd.f32 %v3792, %v3936
        %v3938 = vpop.f32.mrf.mxu0
        %v3939 = vpop.f32.mrf.mxu0
        %v3940 = vadd.f32 %v3792, %v3939
        %v3941 = vpop.f32.mrf.mxu0
        %3942 = vmatprep.mubr.bf16.mxu0 0
        %3943 = vmatmul.mubr.bf16.gmra.mxu0 %v3828
        %v3944 = vpop.f32.mrf.mxu0
        %v3945 = vadd.f32 %v3792, %v3944
        %v3946 = vpop.f32.mrf.mxu0
        %v3947 = vpop.f32.mrf.mxu0
        %v3948 = vadd.f32 %v3792, %v3947
        %v3949 = vpop.f32.mrf.mxu0
        %3950 = vmatprep.mubr.bf16.mxu0 0
        %3951 = vmatmul.mubr.bf16.gmra.mxu0 %v3831
        %v3952 = vpop.f32.mrf.mxu0
        %v3953 = vadd.f32 %v3792, %v3952
        %v3954 = vpop.f32.mrf.mxu0
        %v3955 = vpop.f32.mrf.mxu0
        %v3956 = vadd.f32 %v3792, %v3955
        %v3957 = vpop.f32.mrf.mxu0
        %3958 = vmatprep.mubr.bf16.mxu0 0
        %3959 = vmatmul.mubr.bf16.gmra.mxu0 %v3834
        %v3960 = vpop.f32.mrf.mxu0
        %v3961 = vadd.f32 %v3792, %v3960
        %v3962 = vpop.f32.mrf.mxu0
        %v3963 = vpop.f32.mrf.mxu0
        %v3964 = vadd.f32 %v3792, %v3963
        %v3965 = vpop.f32.mrf.mxu0
        %3966 = vmatprep.mubr.bf16.mxu0 0
        %3967 = vmatmul.mubr.bf16.gmra.mxu0 %v3837
        %v3968 = vpop.f32.mrf.mxu0
        %v3969 = vadd.f32 %v3792, %v3968
        %v3970 = vpop.f32.mrf.mxu0
        %v3971 = vpop.f32.mrf.mxu0
        %v3972 = vadd.f32 %v3792, %v3971
        %v3973 = vpop.f32.mrf.mxu0
        %3974 = vmatprep.mubr.bf16.mxu0 0
        %3975 = vmatmul.mubr.bf16.gmra.mxu0 %v3840
        %v3976 = vpop.f32.mrf.mxu0
        %v3977 = vadd.f32 %v3792, %v3976
        %v3978 = vpop.f32.mrf.mxu0
        %v3979 = vpop.f32.mrf.mxu0
        %v3980 = vadd.f32 %v3792, %v3979
        %v3981 = vpop.f32.mrf.mxu0
        %3982 = vmatprep.mubr.bf16.mxu0 0
        %3983 = vmatmul.mubr.bf16.gmra.mxu0 %v3843
        %v3984 = vpop.f32.mrf.mxu0
        %v3985 = vadd.f32 %v3792, %v3984
        %v3986 = vpop.f32.mrf.mxu0
        %v3987 = vpop.f32.mrf.mxu0
        %v3988 = vadd.f32 %v3792, %v3987
        %v3989 = vpop.f32.mrf.mxu0
        %3990 = vmatprep.mubr.bf16.mxu0 0
        %3991 = vmatmul.mubr.bf16.gmra.mxu0 %v3846
        %v3992 = vpop.f32.mrf.mxu0
        %v3993 = vadd.f32 %v3792, %v3992
        %v3994 = vpop.f32.mrf.mxu0
        %v3995 = vpop.f32.mrf.mxu0
        %v3996 = vadd.f32 %v3792, %v3995
        %v3997 = vpop.f32.mrf.mxu0
        %3998 = vmatprep.mubr.bf16.mxu0 0
        %3999 = vmatmul.mubr.bf16.gmra.mxu0 %v3849
        %v4000 = vpop.f32.mrf.mxu0
        %v4001 = vadd.f32 %v3792, %v4000
        %v4002 = vpop.f32.mrf.mxu0
        %v4003 = vpop.f32.mrf.mxu0
        %v4004 = vadd.f32 %v3792, %v4003
        %v4005 = vpop.f32.mrf.mxu0
        %4006 = vmatprep.mubr.bf16.mxu0 0
        %4007 = vmatmul.mubr.bf16.gmra.mxu0 %v3852
        %v4008 = vpop.f32.mrf.mxu0
        %v4009 = vadd.f32 %v3792, %v4008
        %v4010 = vpop.f32.mrf.mxu0
        %v4011 = vpop.f32.mrf.mxu0
        %v4012 = vadd.f32 %v3792, %v4011
        %v4013 = vpop.f32.mrf.mxu0
        %4014 = vdwg.mxu0
        %v4015 = vxor.u32 %v3889, 2147483648
        %v4016 = vxor.u32 %v3892, 2147483648
        %v4017 = vxor.u32 %v3897, 2147483648
        %v4018 = vxor.u32 %v3900, 2147483648
        %v4019 = vxor.u32 %v3905, 2147483648
        %v4020 = vxor.u32 %v3908, 2147483648
        %v4021 = vxor.u32 %v3913, 2147483648
        %v4022 = vxor.u32 %v3916, 2147483648
        %v4023 = vxor.u32 %v3921, 2147483648
        %v4024 = vxor.u32 %v3924, 2147483648
        %v4025 = vxor.u32 %v3929, 2147483648
        %v4026 = vxor.u32 %v3932, 2147483648
        %v4027 = vxor.u32 %v3937, 2147483648
        %v4028 = vxor.u32 %v3940, 2147483648
        %v4029 = vxor.u32 %v3945, 2147483648
        %v4030 = vxor.u32 %v3948, 2147483648
        %v4031 = vxor.u32 %v3953, 2147483648
        %v4032 = vxor.u32 %v3956, 2147483648
        %v4033 = vxor.u32 %v3961, 2147483648
        %v4034 = vxor.u32 %v3964, 2147483648
        %v4035 = vxor.u32 %v3969, 2147483648
        %v4036 = vxor.u32 %v3972, 2147483648
        %v4037 = vxor.u32 %v3977, 2147483648
        %v4038 = vxor.u32 %v3980, 2147483648
        %v4039 = vxor.u32 %v3985, 2147483648
        %v4040 = vxor.u32 %v3988, 2147483648
        %v4041 = vxor.u32 %v3993, 2147483648
        %v4042 = vxor.u32 %v3996, 2147483648
        %v4043 = vxor.u32 %v4001, 2147483648
        %v4044 = vxor.u32 %v4004, 2147483648
        %v4045 = vxor.u32 %v4009, 2147483648
        %v4046 = vxor.u32 %v4012, 2147483648
        %v4047 = vmul.f32 %v4015, 1.442695
        %v4048 = vpow.pop %v4047
        %v4049 = vmul.f32 %v4016, 1.442695
        %v4050 = vpow.pop %v4049
        %v4051 = vmul.f32 %v4017, 1.442695
        %v4052 = vpow.pop %v4051
        %v4053 = vmul.f32 %v4018, 1.442695
        %v4054 = vpow.pop %v4053
        %v4055 = vmul.f32 %v4019, 1.442695
        %v4056 = vpow.pop %v4055
        %v4057 = vmul.f32 %v4020, 1.442695
        %v4058 = vpow.pop %v4057
        %v4059 = vmul.f32 %v4021, 1.442695
        %v4060 = vpow.pop %v4059
        %v4061 = vmul.f32 %v4022, 1.442695
        %v4062 = vpow.pop %v4061
        %v4063 = vmul.f32 %v4023, 1.442695
        %v4064 = vpow.pop %v4063
        %v4065 = vmul.f32 %v4024, 1.442695
        %v4066 = vpow.pop %v4065
        %v4067 = vmul.f32 %v4025, 1.442695
        %v4068 = vpow.pop %v4067
        %v4069 = vmul.f32 %v4026, 1.442695
        %v4070 = vpow.pop %v4069
        %v4071 = vmul.f32 %v4027, 1.442695
        %v4072 = vpow.pop %v4071
        %v4073 = vmul.f32 %v4028, 1.442695
        %v4074 = vpow.pop %v4073
        %v4075 = vmul.f32 %v4029, 1.442695
        %v4076 = vpow.pop %v4075
        %v4077 = vmul.f32 %v4030, 1.442695
        %v4078 = vpow.pop %v4077
        %v4079 = vmul.f32 %v4031, 1.442695
        %v4080 = vpow.pop %v4079
        %v4081 = vmul.f32 %v4032, 1.442695
        %v4082 = vpow.pop %v4081
        %v4083 = vmul.f32 %v4033, 1.442695
        %v4084 = vpow.pop %v4083
        %v4085 = vmul.f32 %v4034, 1.442695
        %v4086 = vpow.pop %v4085
        %v4087 = vmul.f32 %v4035, 1.442695
        %v4088 = vpow.pop %v4087
        %v4089 = vmul.f32 %v4036, 1.442695
        %v4090 = vpow.pop %v4089
        %v4091 = vmul.f32 %v4037, 1.442695
        %v4092 = vpow.pop %v4091
        %v4093 = vmul.f32 %v4038, 1.442695
        %v4094 = vpow.pop %v4093
        %v4095 = vmul.f32 %v4039, 1.442695
        %v4096 = vpow.pop %v4095
        %v4097 = vmul.f32 %v4040, 1.442695
        %v4098 = vpow.pop %v4097
        %v4099 = vmul.f32 %v4041, 1.442695
        %v4100 = vpow.pop %v4099
        %v4101 = vmul.f32 %v4042, 1.442695
        %v4102 = vpow.pop %v4101
        %v4103 = vmul.f32 %v4043, 1.442695
        %v4104 = vpow.pop %v4103
        %v4105 = vmul.f32 %v4044, 1.442695
        %v4106 = vpow.pop %v4105
        %v4107 = vmul.f32 %v4045, 1.442695
        %v4108 = vpow.pop %v4107
        %v4109 = vmul.f32 %v4046, 1.442695
        %v4110 = vpow.pop %v4109
        %v4111 = vadd.f32 %v4048, 1.0
        %v4112 = vadd.f32 %v4050, 1.0
        %v4113 = vadd.f32 %v4052, 1.0
        %v4114 = vadd.f32 %v4054, 1.0
        %v4115 = vadd.f32 %v4056, 1.0
        %v4116 = vadd.f32 %v4058, 1.0
        %v4117 = vadd.f32 %v4060, 1.0
        %v4118 = vadd.f32 %v4062, 1.0
        %v4119 = vadd.f32 %v4064, 1.0
        %v4120 = vadd.f32 %v4066, 1.0
        %v4121 = vadd.f32 %v4068, 1.0
        %v4122 = vadd.f32 %v4070, 1.0
        %v4123 = vadd.f32 %v4072, 1.0
        %v4124 = vadd.f32 %v4074, 1.0
        %v4125 = vadd.f32 %v4076, 1.0
        %v4126 = vadd.f32 %v4078, 1.0
        %v4127 = vadd.f32 %v4080, 1.0
        %v4128 = vadd.f32 %v4082, 1.0
        %v4129 = vadd.f32 %v4084, 1.0
        %v4130 = vadd.f32 %v4086, 1.0
        %v4131 = vadd.f32 %v4088, 1.0
        %v4132 = vadd.f32 %v4090, 1.0
        %v4133 = vadd.f32 %v4092, 1.0
        %v4134 = vadd.f32 %v4094, 1.0
        %v4135 = vadd.f32 %v4096, 1.0
        %v4136 = vadd.f32 %v4098, 1.0
        %v4137 = vadd.f32 %v4100, 1.0
        %v4138 = vadd.f32 %v4102, 1.0
        %v4139 = vadd.f32 %v4104, 1.0
        %v4140 = vadd.f32 %v4106, 1.0
        %v4141 = vadd.f32 %v4108, 1.0
        %v4142 = vadd.f32 %v4110, 1.0
        %v4143 = vrcp.pop %v4111
        %v4144 = vmul.f32 1.0, %v4143
        %v4145 = vrcp.pop %v4112
        %v4146 = vmul.f32 1.0, %v4145
        %v4147 = vrcp.pop %v4113
        %v4148 = vmul.f32 1.0, %v4147
        %v4149 = vrcp.pop %v4114
        %v4150 = vmul.f32 1.0, %v4149
        %v4151 = vrcp.pop %v4115
        %v4152 = vmul.f32 1.0, %v4151
        %v4153 = vrcp.pop %v4116
        %v4154 = vmul.f32 1.0, %v4153
        %v4155 = vrcp.pop %v4117
        %v4156 = vmul.f32 1.0, %v4155
        %v4157 = vrcp.pop %v4118
        %v4158 = vmul.f32 1.0, %v4157
        %v4159 = vrcp.pop %v4119
        %v4160 = vmul.f32 1.0, %v4159
        %v4161 = vrcp.pop %v4120
        %v4162 = vmul.f32 1.0, %v4161
        %v4163 = vrcp.pop %v4121
        %v4164 = vmul.f32 1.0, %v4163
        %v4165 = vrcp.pop %v4122
        %v4166 = vmul.f32 1.0, %v4165
        %v4167 = vrcp.pop %v4123
        %v4168 = vmul.f32 1.0, %v4167
        %v4169 = vrcp.pop %v4124
        %v4170 = vmul.f32 1.0, %v4169
        %v4171 = vrcp.pop %v4125
        %v4172 = vmul.f32 1.0, %v4171
        %v4173 = vrcp.pop %v4126
        %v4174 = vmul.f32 1.0, %v4173
        %v4175 = vrcp.pop %v4127
        %v4176 = vmul.f32 1.0, %v4175
        %v4177 = vrcp.pop %v4128
        %v4178 = vmul.f32 1.0, %v4177
        %v4179 = vrcp.pop %v4129
        %v4180 = vmul.f32 1.0, %v4179
        %v4181 = vrcp.pop %v4130
        %v4182 = vmul.f32 1.0, %v4181
        %v4183 = vrcp.pop %v4131
        %v4184 = vmul.f32 1.0, %v4183
        %v4185 = vrcp.pop %v4132
        %v4186 = vmul.f32 1.0, %v4185
        %v4187 = vrcp.pop %v4133
        %v4188 = vmul.f32 1.0, %v4187
        %v4189 = vrcp.pop %v4134
        %v4190 = vmul.f32 1.0, %v4189
        %v4191 = vrcp.pop %v4135
        %v4192 = vmul.f32 1.0, %v4191
        %v4193 = vrcp.pop %v4136
        %v4194 = vmul.f32 1.0, %v4193
        %v4195 = vrcp.pop %v4137
        %v4196 = vmul.f32 1.0, %v4195
        %v4197 = vrcp.pop %v4138
        %v4198 = vmul.f32 1.0, %v4197
        %v4199 = vrcp.pop %v4139
        %v4200 = vmul.f32 1.0, %v4199
        %v4201 = vrcp.pop %v4140
        %v4202 = vmul.f32 1.0, %v4201
        %v4203 = vrcp.pop %v4141
        %v4204 = vmul.f32 1.0, %v4203
        %v4205 = vrcp.pop %v4142
        %v4206 = vmul.f32 1.0, %v4205
        %v4207 = vmul.f32 %v3889, %v4144
        %v4208 = vmul.f32 %v3892, %v4146
        %v4209 = vmul.f32 %v3897, %v4148
        %v4210 = vmul.f32 %v3900, %v4150
        %v4211 = vmul.f32 %v3905, %v4152
        %v4212 = vmul.f32 %v3908, %v4154
        %v4213 = vmul.f32 %v3913, %v4156
        %v4214 = vmul.f32 %v3916, %v4158
        %v4215 = vmul.f32 %v3921, %v4160
        %v4216 = vmul.f32 %v3924, %v4162
        %v4217 = vmul.f32 %v3929, %v4164
        %v4218 = vmul.f32 %v3932, %v4166
        %v4219 = vmul.f32 %v3937, %v4168
        %v4220 = vmul.f32 %v3940, %v4170
        %v4221 = vmul.f32 %v3945, %v4172
        %v4222 = vmul.f32 %v3948, %v4174
        %v4223 = vmul.f32 %v3953, %v4176
        %v4224 = vmul.f32 %v3956, %v4178
        %v4225 = vmul.f32 %v3961, %v4180
        %v4226 = vmul.f32 %v3964, %v4182
        %v4227 = vmul.f32 %v3969, %v4184
        %v4228 = vmul.f32 %v3972, %v4186
        %v4229 = vmul.f32 %v3977, %v4188
        %v4230 = vmul.f32 %v3980, %v4190
        %v4231 = vmul.f32 %v3985, %v4192
        %v4232 = vmul.f32 %v3988, %v4194
        %v4233 = vmul.f32 %v3993, %v4196
        %v4234 = vmul.f32 %v3996, %v4198
        %v4235 = vmul.f32 %v4001, %v4200
        %v4236 = vmul.f32 %v4004, %v4202
        %v4237 = vmul.f32 %v4009, %v4204
        %v4238 = vmul.f32 %v4012, %v4206
        %v4239 = vadd.f32 %v404, %v4207
        %v4240 = vadd.f32 %v405, %v4208
        %v4241 = vadd.f32 %v406, %v4209
        %v4242 = vadd.f32 %v407, %v4210
        %v4243 = vadd.f32 %v408, %v4211
        %v4244 = vadd.f32 %v409, %v4212
        %v4245 = vadd.f32 %v410, %v4213
        %v4246 = vadd.f32 %v411, %v4214
        %v4247 = vadd.f32 %v412, %v4215
        %v4248 = vadd.f32 %v413, %v4216
        %v4249 = vadd.f32 %v414, %v4217
        %v4250 = vadd.f32 %v415, %v4218
        %v4251 = vadd.f32 %v416, %v4219
        %v4252 = vadd.f32 %v417, %v4220
        %v4253 = vadd.f32 %v418, %v4221
        %v4254 = vadd.f32 %v419, %v4222
        %v4255 = vadd.f32 %v420, %v4223
        %v4256 = vadd.f32 %v421, %v4224
        %v4257 = vadd.f32 %v422, %v4225
        %v4258 = vadd.f32 %v423, %v4226
        %v4259 = vadd.f32 %v424, %v4227
        %v4260 = vadd.f32 %v425, %v4228
        %v4261 = vadd.f32 %v426, %v4229
        %v4262 = vadd.f32 %v427, %v4230
        %v4263 = vadd.f32 %v428, %v4231
        %v4264 = vadd.f32 %v429, %v4232
        %v4265 = vadd.f32 %v430, %v4233
        %v4266 = vadd.f32 %v431, %v4234
        %v4267 = vadd.f32 %v432, %v4235
        %v4268 = vadd.f32 %v433, %v4236
        %v4269 = vadd.f32 %v434, %v4237
        %v4270 = vadd.f32 %v435, %v4238
        %4271 = vst.msk [vmem:[%s340] sm:$0xff] %vm491, %v4239
        %4272 = vst.msk [vmem:[%s340 + $0x8] sm:$0xff] %vm491, %v4240
        %4273 = vst.msk [vmem:[%s340 + $0x10] sm:$0xff] %vm491, %v4241
        %4274 = vst.msk [vmem:[%s340 + $0x18] sm:$0xff] %vm491, %v4242
        %4275 = vst.msk [vmem:[%s340 + $0x20] sm:$0xff] %vm491, %v4243
        %4276 = vst.msk [vmem:[%s340 + $0x28] sm:$0xff] %vm491, %v4244
        %4277 = vst.msk [vmem:[%s340 + $0x30] sm:$0xff] %vm491, %v4245
        %4278 = vst.msk [vmem:[%s340 + $0x38] sm:$0xff] %vm491, %v4246
        %4279 = vst.msk [vmem:[%s340 + $0x40] sm:$0xff] %vm491, %v4247
        %4280 = vst.msk [vmem:[%s340 + $0x48] sm:$0xff] %vm491, %v4248
        %4281 = vst.msk [vmem:[%s340 + $0x50] sm:$0xff] %vm491, %v4249
        %4282 = vst.msk [vmem:[%s340 + $0x58] sm:$0xff] %vm491, %v4250
        %4283 = vst.msk [vmem:[%s340 + $0x60] sm:$0xff] %vm491, %v4251
        %4284 = vst.msk [vmem:[%s340 + $0x68] sm:$0xff] %vm491, %v4252
        %4285 = vst.msk [vmem:[%s340 + $0x70] sm:$0xff] %vm491, %v4253
        %4286 = vst.msk [vmem:[%s340 + $0x78] sm:$0xff] %vm491, %v4254
        %4287 = vst.msk [vmem:[%s340 + $0x80] sm:$0xff] %vm491, %v4255
        %4288 = vst.msk [vmem:[%s340 + $0x88] sm:$0xff] %vm491, %v4256
        %4289 = vst.msk [vmem:[%s340 + $0x90] sm:$0xff] %vm491, %v4257
        %4290 = vst.msk [vmem:[%s340 + $0x98] sm:$0xff] %vm491, %v4258
        %4291 = vst.msk [vmem:[%s340 + $0xa0] sm:$0xff] %vm491, %v4259
        %4292 = vst.msk [vmem:[%s340 + $0xa8] sm:$0xff] %vm491, %v4260
        %4293 = vst.msk [vmem:[%s340 + $0xb0] sm:$0xff] %vm491, %v4261
        %4294 = vst.msk [vmem:[%s340 + $0xb8] sm:$0xff] %vm491, %v4262
        %4295 = vst.msk [vmem:[%s340 + $0xc0] sm:$0xff] %vm491, %v4263
        %4296 = vst.msk [vmem:[%s340 + $0xc8] sm:$0xff] %vm491, %v4264
        %4297 = vst.msk [vmem:[%s340 + $0xd0] sm:$0xff] %vm491, %v4265
        %4298 = vst.msk [vmem:[%s340 + $0xd8] sm:$0xff] %vm491, %v4266
        %4299 = vst.msk [vmem:[%s340 + $0xe0] sm:$0xff] %vm491, %v4267
        %4300 = vst.msk [vmem:[%s340 + $0xe8] sm:$0xff] %vm491, %v4268
        %4301 = vst.msk [vmem:[%s340 + $0xf0] sm:$0xff] %vm491, %v4269
        %4302 = vst.msk [vmem:[%s340 + $0xf8] sm:$0xff] %vm491, %v4270
        %s4303 = sand.u32 %s186, 1
        %s4304 = scalar_lea.sflag [#allocation5], %s4303
        %s4305 = sand.u32 %s186, 1
        %s4306 = smul.addr %s4305, 256
        %s4307 = scalar_lea.vmem [#allocation11], %s4306
        // Predicated region
        $region65: #{reslayer_forward.1} parent=47 // pred_check
          %p4308 = pneg %p196
        $region66: #{reslayer_forward.1} parent=47 // pred_check_branch
          %4310 = sbr.rel (%p4308) target = $region68
        $region67: #{reslayer_forward.1} parent=47 // pred_region
          %s4312 = ssub.s32 4096, 4096
          %4313 = vsyncadd %s4304, %s4312
          %s4314 = smul.addr %s26, 32
          %s4315 = smul.addr %s4314, 128
          %s4316 = scalar_lea.hbm %s7, %s4315
          %s4317 = sshll.u32 %s4307, 4
          %s4318 = int_to_ptr.vmem [resolvable:$true] %s4317
          %4323 = dma.vmem_to_hbm [thread:$0]  %s4318, 4096, %s4316, %s4304, 128, 128, 8
        $region68: #{reslayer_forward.1} parent=47 // pred_fallthru
          _
      $region48: #{reslayer_forward.1} parent=5 // pred_fallthru
        _
      %p4324 = scmp.le.s32.totalorder 2, %s21
      // Predicated region
      $region69: #{reslayer_forward.1} parent=5 // pred_check
        %p4325 = pneg %p4324
      $region70: #{reslayer_forward.1} parent=5 // pred_check_branch
        %4327 = sbr.rel (%p4325) target = $region72
      $region71: #{reslayer_forward.1} parent=5 // pred_region
        %s4328 = ssub.s32 %s21, 2
        // Predicated region
        $region73: #{reslayer_forward.1} parent=71 // pred_check
          %p4329 = pneg %p202
        $region74: #{reslayer_forward.1} parent=71 // pred_check_branch
          %4331 = sbr.rel (%p4329) target = $region76
        $region75: #{reslayer_forward.1} parent=71 // pred_region
          %s4332 = sand.u32 %s187, 1
          %s4333 = scalar_lea.sflag [#allocation5], %s4332
          %s4334 = sand.u32 %s187, 1
          %s4335 = smul.addr %s4334, 256
          %s4336 = scalar_lea.vmem [#allocation11], %s4335
          %4337 = dma.done %s4333, 4096
        $region76: #{reslayer_forward.1} parent=71 // pred_fallthru
          _
      $region72: #{reslayer_forward.1} parent=5 // pred_fallthru
        _
    $region6: #{reslayer_forward.1} parent=1 // loop_footer
      %s25 = sadd.s32 1, %s21
    $region7: #{reslayer_forward.1} parent=1 // loop_footer_branch
      %20 = sbr.rel target = $region3
    $region8: #{reslayer_forward.1} parent=1 // loop_exit
      _
    %4338 = vsyncpa [#allocation4], 1
    %s4339 = scalar_lea.sflag [#allocation4], 1
    %4340 = vsyncpa %s4339, 1
    %4341 = vsyncpa [#allocation7], 1
    %4342 = vsyncpa [#allocation10], 1
    %4343 = vsyncpa [#allocation5], 1
    %s4344 = scalar_lea.sflag [#allocation5], 1
    %4345 = vsyncpa %s4344, 1

</llo_original>
